<compile_context>
chip_gen: v7x
topology: tpu7x:2x2x1
jax: 0.10.0
libtpu: 0.0.40
codegen_flags: <defaults>
</compile_context>

<pallas_src>
import numpy as np
import jax
import jax.numpy as jnp
from jax.experimental import pallas as pl
from jax.experimental.pallas import tpu as pltpu

EPS = 1e-5          # nn.BatchNorm default eps
NEG_SLOPE = 0.01    # F.leaky_relu default negative_slope
TB = 8              # batch tile (sublane dim of in-kernel activations)


# ----------------------------------------------------------------------------
# small helpers (host side)
# ----------------------------------------------------------------------------
def bn_affine(gamma, beta, rm, rv):
    scale = gamma / jnp.sqrt(rv + EPS)
    shift = beta - rm * scale
    return scale, shift


def conv_weight_to_mat(w_oihw):
    """(O, C, kh, kw) -> (kh*kw*C, O), row order (kh, kw, c)."""
    o, c, kh, kw = w_oihw.shape
    return jnp.transpose(w_oihw, (2, 3, 1, 0)).reshape(kh * kw * c, o)


# ----------------------------------------------------------------------------
# in-kernel im2col helper (pure jnp on values; leading-dim reshapes only)
# ----------------------------------------------------------------------------
def _s2d(h, ho, wo, tb, c):
    """2x2 / stride-2 space-to-depth.

    h: (2*ho, 2*wo, tb, c)  ->  (ho*wo*tb, 4*c), feature order (kh, kw, c)
    (matches conv_weight_to_mat row order)."""
    h = h.reshape(ho, 2, wo, 2, tb, c)
    slabs = [h[:, 0, :, 0], h[:, 0, :, 1], h[:, 1, :, 0], h[:, 1, :, 1]]
    return jnp.concatenate([s.reshape(ho * wo * tb, c) for s in slabs], axis=-1)


# ----------------------------------------------------------------------------
# the fused whole-network kernel (one batch tile of TB samples per grid step)
# ----------------------------------------------------------------------------
def _regressor_kernel(x_ref, w1, b1, w2, b2, w3, b3, w4, b4,
                      fw1, fb1, fw2, fb2, fw3, fb3, fwh, fbh, o_ref):
    f32 = jnp.float32
    tb = x_ref.shape[2]

    def mm(x, w_ref, b_ref):
        return jnp.dot(x, w_ref[...], preferred_element_type=f32) + b_ref[...]

    # conv1 + relu  (bn0 folded into w1/b1; input already space-to-depth'd)
    # NOTE: K=4 matmul is degenerate MXU work but costs ~nothing at this size.
    h = jnp.maximum(mm(x_ref[...].reshape(15 * 15 * tb, 4), w1, b1), 0.0)
    h = h.reshape(15, 15, tb, 16)

    # conv2 + relu  (bn1 folded): 15 -> 7 (last row/col dropped by stride-2)
    h = jnp.maximum(mm(_s2d(h[:14, :14], 7, 7, tb, 16), w2, b2), 0.0)
    h = h.reshape(7, 7, tb, 32)

    # conv3 + relu  (bn2 folded): 7 -> 3
    h = jnp.maximum(mm(_s2d(h[:6, :6], 3, 3, tb, 32), w3, b3), 0.0)
    h = h.reshape(3, 3, tb, 64)

    # conv4 (k=2, s=1) + relu  (bn3 folded): 3 -> 2
    slabs = [h[0:2, 0:2], h[0:2, 1:3], h[1:3, 0:2], h[1:3, 1:3]]
    p = jnp.concatenate([s.reshape(2 * 2 * tb, 64) for s in slabs], axis=-1)
    h = jnp.maximum(mm(p, w4, b4), 0.0).reshape(2, 2, tb, 64)

    # flatten in (h, w, c) order; torch's NCHW flatten is folded into fw1 rows
    flat = jnp.concatenate([h[0, 0], h[0, 1], h[1, 0], h[1, 1]], axis=-1)  # (tb,256)

    f = jnp.maximum(mm(flat, fw1, fb1), 0.0)         # fc1 + relu (bn4 folded into fc2)
    f = mm(f, fw2, fb2)
    f = jnp.where(f >= 0.0, f, NEG_SLOPE * f)        # leaky_relu
    f = jnp.tanh(mm(f, fw3, fb3))                    # fc3 + tanh
    o_ref[...] = mm(f, fwh, fbh)                     # fc4 | fc5 merged, padded to 128


# ----------------------------------------------------------------------------
# wrapper
# ----------------------------------------------------------------------------
_WEIGHT_NAMES = ["w1", "b1", "w2", "b2", "w3", "b3", "w4", "b4",
                 "fw1", "fb1", "fw2", "fb2", "fw3", "fb3", "fwh", "fbh"]


def regressor_forward(p, x_nchw):
    """x_nchw: (N, 1, 30, 30) f32  ->  ((N, 5), (N, 1)) like the torch module."""
    n = x_nchw.shape[0]
    n_pad = -(-n // TB) * TB
    x = x_nchw.astype(jnp.float32).reshape(n, 30, 30)
    if n_pad != n:
        x = jnp.pad(x, ((0, n_pad - n), (0, 0), (0, 0)))

    # one-time space-to-depth of the raw input for conv1:
    # (n_pad, 30, 30) -> (15, 15, n_pad, 4), feature order (kh, kw)
    xk = x.reshape(n_pad, 15, 2, 15, 2)
    xk = jnp.transpose(xk, (1, 3, 0, 2, 4)).reshape(15, 15, n_pad, 4)

    weights = [p[k] for k in _WEIGHT_NAMES]
    w_specs = [pl.BlockSpec(w.shape, lambda b: (0, 0)) for w in weights]

    out = pl.pallas_call(
        _regressor_kernel,
        out_shape=jax.ShapeDtypeStruct((n_pad, 128), jnp.float32),
        grid_spec=pltpu.PrefetchScalarGridSpec(
            num_scalar_prefetch=0,
            grid=(n_pad // TB,),
            in_specs=[pl.BlockSpec((15, 15, TB, 4), lambda b: (0, 0, b, 0))] + w_specs,
            out_specs=pl.BlockSpec((TB, 128), lambda b: (b, 0)),
        ),
        compiler_params=pltpu.CompilerParams(
            dimension_semantics=("parallel",)),
    )(xk, *weights)

    return out[:n, :5], out[:n, 5:6]


# ----------------------------------------------------------------------------
# deterministic synthetic parameters (raw, torch layouts) + offline folding
# ----------------------------------------------------------------------------
def init_raw_params(seed=0):
    keys = iter(jax.random.split(jax.random.PRNGKey(seed), 64))

    def nrm(shape, scale):
        return scale * jax.random.normal(next(keys), shape, jnp.float32)

    def conv(cin, cout, k):
        return nrm((cout, cin, k, k), (cin * k * k) ** -0.5), nrm((cout,), 0.05)

    def fc(cin, cout):
        return nrm((cin, cout), cin ** -0.5), nrm((cout,), 0.05)   # weight.T layout

    def bn(c):
        gamma = 1.0 + 0.1 * jax.random.normal(next(keys), (c,), jnp.float32)
        beta = 0.05 * jax.random.normal(next(keys), (c,), jnp.float32)
        rm = 0.1 * jax.random.normal(next(keys), (c,), jnp.float32)
        rv = 1.0 + 0.1 * jnp.abs(jax.random.normal(next(keys), (c,), jnp.float32))
        return (gamma, beta, rm, rv)

    r = {}
    r["bn0"] = bn(1)
    r["w1"], r["b1"] = conv(1, 16, 2)
    r["bn1"] = bn(16)
    r["w2"], r["b2"] = conv(16, 32, 2)
    r["bn2"] = bn(32)
    r["w3"], r["b3"] = conv(32, 64, 2)
    r["bn3"] = bn(64)
    r["w4"], r["b4"] = conv(64, 64, 2)
    r["fw1"], r["fb1"] = fc(256, 256)
    r["bn4"] = bn(256)
    r["fw2"], r["fb2"] = fc(256, 128)
    r["fw3"], r["fb3"] = fc(128, 64)
    r["fw4"], r["fb4"] = fc(64, 5)      # 2 + 3
    r["fw5"], r["fb5"] = fc(64, 1)
    return r


def fold_params(r):
    """Fold all eval-mode BN affines / flatten permutation / head merge offline."""
    p = {}
    # bn0 -> conv1
    s0, t0 = bn_affine(*r["bn0"])
    w1m = conv_weight_to_mat(r["w1"])                       # (4, 16)
    p["w1"] = s0[0] * w1m
    p["b1"] = (r["b1"] + t0[0] * jnp.sum(w1m, axis=0)).reshape(1, -1)

    def fold_into_conv(w_oihw, b, bn_prev):
        s, t = bn_affine(*bn_prev)
        wm = conv_weight_to_mat(w_oihw)                     # (4*cin, cout)
        se = jnp.tile(s, 4)[:, None]                        # row order (kh, kw, c)
        te = jnp.tile(t, 4)
        return wm * se, (b + te @ wm).reshape(1, -1)

    p["w2"], p["b2"] = fold_into_conv(r["w2"], r["b2"], r["bn1"])
    p["w3"], p["b3"] = fold_into_conv(r["w3"], r["b3"], r["bn2"])
    p["w4"], p["b4"] = fold_into_conv(r["w4"], r["b4"], r["bn3"])

    # fc1: permute rows so our (h, w, c) flatten equals torch's NCHW flatten
    perm = np.array([c * 4 + h * 2 + w
                     for h in range(2) for w in range(2) for c in range(64)],
                    dtype=np.int32)
    p["fw1"] = r["fw1"][perm, :]
    p["fb1"] = r["fb1"].reshape(1, -1)

    # bn4 -> fc2
    s4, t4 = bn_affine(*r["bn4"])
    p["fw2"] = r["fw2"] * s4[:, None]
    p["fb2"] = (r["fb2"] + t4 @ r["fw2"]).reshape(1, -1)

    p["fw3"] = r["fw3"]
    p["fb3"] = r["fb3"].reshape(1, -1)

    # merge fc4/fc5 heads, zero-pad to 128 output lanes (lane-dense store)
    fwh = jnp.zeros((64, 128), jnp.float32).at[:, :5].set(r["fw4"]).at[:, 5:6].set(r["fw5"])
    fbh = jnp.zeros((128,), jnp.float32).at[:5].set(r["fb4"]).at[5:6].set(r["fb5"])
    p["fwh"] = fwh
    p["fbh"] = fbh.reshape(1, -1)
    return p


# ----------------------------------------------------------------------------
# pure-JAX reference (unfolded math, eval-mode semantics) for validation
# ----------------------------------------------------------------------------
def reference_forward(r, x_nchw):
    hi = jax.lax.Precision.HIGHEST

    def conv(x, w, b, stride):
        y = jax.lax.conv_general_dilated(
            x, w, (stride, stride), "VALID",
            dimension_numbers=("NCHW", "OIHW", "NCHW"), precision=hi)
        return y + b.reshape(1, -1, 1, 1)

    def bn2d(x, prm):
        s, t = bn_affine(*prm)
        return x * s.reshape(1, -1, 1, 1) + t.reshape(1, -1, 1, 1)

    def dense(x, w, b):
        return jnp.dot(x, w, precision=hi) + b

    x = x_nchw.astype(jnp.float32)
    h = bn2d(x, r["bn0"])                                       # dropout == identity
    h = bn2d(jax.nn.relu(conv(h, r["w1"], r["b1"], 2)), r["bn1"])
    h = bn2d(jax.nn.relu(conv(h, r["w2"], r["b2"], 2)), r["bn2"])
    h = bn2d(jax.nn.relu(conv(h, r["w3"], r["b3"], 2)), r["bn3"])
    h = jax.nn.relu(conv(h, r["w4"], r["b4"], 1))
    flat = h.reshape(h.shape[0], -1)                            # NCHW flatten
    f = jax.nn.relu(dense(flat, r["fw1"], r["fb1"]))
    s4, t4 = bn_affine(*r["bn4"])
    f = f * s4 + t4
    f = dense(f, r["fw2"], r["fb2"])
    f = jnp.where(f >= 0.0, f, NEG_SLOPE * f)
    f = jnp.tanh(dense(f, r["fw3"], r["fb3"]))
    return dense(f, r["fw4"], r["fb4"]), dense(f, r["fw5"], r["fb5"])


if __name__ == "__main__":
    x = jax.random.normal(jax.random.PRNGKey(0), (2, 1, 30, 30), jnp.float32)
    raw = init_raw_params(seed=0)
    kp = fold_params(raw)

    fwd = jax.jit(regressor_forward)
    out_a, out_b = jax.block_until_ready(fwd(kp, x))

    ref_a, ref_b = reference_forward(raw, x)
    assert out_a.shape == (2, 5) and out_b.shape == (2, 1)
    assert jnp.allclose(out_a, ref_a, atol=2e-2, rtol=2e-2), (out_a, ref_a)
    assert jnp.allclose(out_b, ref_b, atol=2e-2, rtol=2e-2), (out_b, ref_b)

    print("KERNEL_OK")
</pallas_src>

<mosaic_0001>
module attributes {stable_mosaic.version = 11 : i64} {
  func.func @_regressor_kernel(%arg0: i32, %arg1: memref<15x15x8x4xf32, #tpu.memory_space<vmem>>, %arg2: memref<4x16xf32, #tpu.memory_space<vmem>>, %arg3: memref<1x16xf32, #tpu.memory_space<vmem>>, %arg4: memref<64x32xf32, #tpu.memory_space<vmem>>, %arg5: memref<1x32xf32, #tpu.memory_space<vmem>>, %arg6: memref<128x64xf32, #tpu.memory_space<vmem>>, %arg7: memref<1x64xf32, #tpu.memory_space<vmem>>, %arg8: memref<256x64xf32, #tpu.memory_space<vmem>>, %arg9: memref<1x64xf32, #tpu.memory_space<vmem>>, %arg10: memref<256x256xf32, #tpu.memory_space<vmem>>, %arg11: memref<1x256xf32, #tpu.memory_space<vmem>>, %arg12: memref<256x128xf32, #tpu.memory_space<vmem>>, %arg13: memref<1x128xf32, #tpu.memory_space<vmem>>, %arg14: memref<128x64xf32, #tpu.memory_space<vmem>>, %arg15: memref<1x64xf32, #tpu.memory_space<vmem>>, %arg16: memref<64x128xf32, #tpu.memory_space<vmem>>, %arg17: memref<1x128xf32, #tpu.memory_space<vmem>>, %arg18: memref<8x128xf32, #tpu.memory_space<vmem>>) attributes {dimension_semantics = [#tpu.dimension_semantics<parallel>], iteration_bounds = array<i64: 1>, scalar_prefetch = 0 : i64, scratch_operands = 0 : i64, tpu.core_type = #tpu.core_type<tc>, window_params = [{transform_indices = @transform_0, window_bounds = array<i64: 15, 15, 8, 4>}, {pipeline_mode = #tpu.pipeline_mode<synchronous>, transform_indices = @transform_1, window_bounds = array<i64: 4, 16>}, {pipeline_mode = #tpu.pipeline_mode<synchronous>, transform_indices = @transform_2, window_bounds = array<i64: 1, 16>}, {pipeline_mode = #tpu.pipeline_mode<synchronous>, transform_indices = @transform_3, window_bounds = array<i64: 64, 32>}, {pipeline_mode = #tpu.pipeline_mode<synchronous>, transform_indices = @transform_4, window_bounds = array<i64: 1, 32>}, {pipeline_mode = #tpu.pipeline_mode<synchronous>, transform_indices = @transform_5, window_bounds = array<i64: 128, 64>}, {pipeline_mode = #tpu.pipeline_mode<synchronous>, transform_indices = @transform_6, window_bounds = array<i64: 1, 64>}, {pipeline_mode = #tpu.pipeline_mode<synchronous>, transform_indices = @transform_7, window_bounds = array<i64: 256, 64>}, {pipeline_mode = #tpu.pipeline_mode<synchronous>, transform_indices = @transform_8, window_bounds = array<i64: 1, 64>}, {pipeline_mode = #tpu.pipeline_mode<synchronous>, transform_indices = @transform_9, window_bounds = array<i64: 256, 256>}, {pipeline_mode = #tpu.pipeline_mode<synchronous>, transform_indices = @transform_10, window_bounds = array<i64: 1, 256>}, {pipeline_mode = #tpu.pipeline_mode<synchronous>, transform_indices = @transform_11, window_bounds = array<i64: 256, 128>}, {pipeline_mode = #tpu.pipeline_mode<synchronous>, transform_indices = @transform_12, window_bounds = array<i64: 1, 128>}, {pipeline_mode = #tpu.pipeline_mode<synchronous>, transform_indices = @transform_13, window_bounds = array<i64: 128, 64>}, {pipeline_mode = #tpu.pipeline_mode<synchronous>, transform_indices = @transform_14, window_bounds = array<i64: 1, 64>}, {pipeline_mode = #tpu.pipeline_mode<synchronous>, transform_indices = @transform_15, window_bounds = array<i64: 64, 128>}, {pipeline_mode = #tpu.pipeline_mode<synchronous>, transform_indices = @transform_16, window_bounds = array<i64: 1, 128>}, {transform_indices = @transform_17, window_bounds = array<i64: 8, 128>}]} {
    %c0 = arith.constant 0 : index
    %c0_0 = arith.constant 0 : index
    %c0_1 = arith.constant 0 : index
    %c0_2 = arith.constant 0 : index
    %0 = vector.load %arg1[%c0, %c0_0, %c0_1, %c0_2] : memref<15x15x8x4xf32, #tpu.memory_space<vmem>>, vector<15x15x8x4xf32>
    %1 = vector.shape_cast %0 : vector<15x15x8x4xf32> to vector<1800x4xf32>
    %c0_3 = arith.constant 0 : index
    %c0_4 = arith.constant 0 : index
    %2 = vector.load %arg2[%c0_3, %c0_4] : memref<4x16xf32, #tpu.memory_space<vmem>>, vector<4x16xf32>
    %cst = arith.constant dense<0.000000e+00> : vector<1800x16xf32>
    %3 = tpu.matmul %1, %2, %cst {dimension_numbers = #tpu.dot_dimension_numbers<[1], [0], [0], [1], [0, 0, 1, 1], [], []>} : vector<1800x4xf32>, vector<4x16xf32>, vector<1800x16xf32> -> vector<1800x16xf32>
    %c0_5 = arith.constant 0 : index
    %c0_6 = arith.constant 0 : index
    %4 = vector.load %arg3[%c0_5, %c0_6] : memref<1x16xf32, #tpu.memory_space<vmem>>, vector<1x16xf32>
    %5 = vector.broadcast %4 : vector<1x16xf32> to vector<1800x16xf32>
    %6 = arith.addf %3, %5 : vector<1800x16xf32>
    %cst_7 = arith.constant 0.000000e+00 : f32
    %7 = vector.broadcast %cst_7 : f32 to vector<1800x16xf32>
    %8 = arith.maximumf %6, %7 : vector<1800x16xf32>
    %9 = vector.shape_cast %8 : vector<1800x16xf32> to vector<15x15x8x16xf32>
    %10 = vector.extract_strided_slice %9 {offsets = [0, 0, 0, 0], sizes = [14, 14, 8, 16], strides = [1, 1, 1, 1]} : vector<15x15x8x16xf32> to vector<14x14x8x16xf32>
    %11 = vector.shape_cast %10 : vector<14x14x8x16xf32> to vector<7x2x7x2x8x16xf32>
    %12 = vector.extract_strided_slice %11 {offsets = [0, 0, 0, 0, 0, 0], sizes = [7, 1, 7, 1, 8, 16], strides = [1, 1, 1, 1, 1, 1]} : vector<7x2x7x2x8x16xf32> to vector<7x1x7x1x8x16xf32>
    %13 = vector.shape_cast %12 : vector<7x1x7x1x8x16xf32> to vector<7x7x8x16xf32>
    %14 = vector.extract_strided_slice %11 {offsets = [0, 0, 0, 1, 0, 0], sizes = [7, 1, 7, 1, 8, 16], strides = [1, 1, 1, 1, 1, 1]} : vector<7x2x7x2x8x16xf32> to vector<7x1x7x1x8x16xf32>
    %15 = vector.shape_cast %14 : vector<7x1x7x1x8x16xf32> to vector<7x7x8x16xf32>
    %16 = vector.extract_strided_slice %11 {offsets = [0, 1, 0, 0, 0, 0], sizes = [7, 1, 7, 1, 8, 16], strides = [1, 1, 1, 1, 1, 1]} : vector<7x2x7x2x8x16xf32> to vector<7x1x7x1x8x16xf32>
    %17 = vector.shape_cast %16 : vector<7x1x7x1x8x16xf32> to vector<7x7x8x16xf32>
    %18 = vector.extract_strided_slice %11 {offsets = [0, 1, 0, 1, 0, 0], sizes = [7, 1, 7, 1, 8, 16], strides = [1, 1, 1, 1, 1, 1]} : vector<7x2x7x2x8x16xf32> to vector<7x1x7x1x8x16xf32>
    %19 = vector.shape_cast %18 : vector<7x1x7x1x8x16xf32> to vector<7x7x8x16xf32>
    %20 = vector.shape_cast %13 : vector<7x7x8x16xf32> to vector<392x16xf32>
    %21 = vector.shape_cast %15 : vector<7x7x8x16xf32> to vector<392x16xf32>
    %22 = vector.shape_cast %17 : vector<7x7x8x16xf32> to vector<392x16xf32>
    %23 = vector.shape_cast %19 : vector<7x7x8x16xf32> to vector<392x16xf32>
    %24 = tpu.concatenate %20, %21, %22, %23 in 1 : vector<392x16xf32>, vector<392x16xf32>, vector<392x16xf32>, vector<392x16xf32> -> vector<392x64xf32>
    %c0_8 = arith.constant 0 : index
    %c0_9 = arith.constant 0 : index
    %25 = vector.load %arg4[%c0_8, %c0_9] : memref<64x32xf32, #tpu.memory_space<vmem>>, vector<64x32xf32>
    %cst_10 = arith.constant dense<0.000000e+00> : vector<392x32xf32>
    %26 = tpu.matmul %24, %25, %cst_10 {dimension_numbers = #tpu.dot_dimension_numbers<[1], [0], [0], [1], [0, 0, 1, 1], [], []>} : vector<392x64xf32>, vector<64x32xf32>, vector<392x32xf32> -> vector<392x32xf32>
    %c0_11 = arith.constant 0 : index
    %c0_12 = arith.constant 0 : index
    %27 = vector.load %arg5[%c0_11, %c0_12] : memref<1x32xf32, #tpu.memory_space<vmem>>, vector<1x32xf32>
    %28 = vector.broadcast %27 : vector<1x32xf32> to vector<392x32xf32>
    %29 = arith.addf %26, %28 : vector<392x32xf32>
    %cst_13 = arith.constant 0.000000e+00 : f32
    %30 = vector.broadcast %cst_13 : f32 to vector<392x32xf32>
    %31 = arith.maximumf %29, %30 : vector<392x32xf32>
    %32 = vector.shape_cast %31 : vector<392x32xf32> to vector<7x7x8x32xf32>
    %33 = vector.extract_strided_slice %32 {offsets = [0, 0, 0, 0], sizes = [6, 6, 8, 32], strides = [1, 1, 1, 1]} : vector<7x7x8x32xf32> to vector<6x6x8x32xf32>
    %34 = vector.shape_cast %33 : vector<6x6x8x32xf32> to vector<3x2x3x2x8x32xf32>
    %35 = vector.extract_strided_slice %34 {offsets = [0, 0, 0, 0, 0, 0], sizes = [3, 1, 3, 1, 8, 32], strides = [1, 1, 1, 1, 1, 1]} : vector<3x2x3x2x8x32xf32> to vector<3x1x3x1x8x32xf32>
    %36 = vector.shape_cast %35 : vector<3x1x3x1x8x32xf32> to vector<3x3x8x32xf32>
    %37 = vector.extract_strided_slice %34 {offsets = [0, 0, 0, 1, 0, 0], sizes = [3, 1, 3, 1, 8, 32], strides = [1, 1, 1, 1, 1, 1]} : vector<3x2x3x2x8x32xf32> to vector<3x1x3x1x8x32xf32>
    %38 = vector.shape_cast %37 : vector<3x1x3x1x8x32xf32> to vector<3x3x8x32xf32>
    %39 = vector.extract_strided_slice %34 {offsets = [0, 1, 0, 0, 0, 0], sizes = [3, 1, 3, 1, 8, 32], strides = [1, 1, 1, 1, 1, 1]} : vector<3x2x3x2x8x32xf32> to vector<3x1x3x1x8x32xf32>
    %40 = vector.shape_cast %39 : vector<3x1x3x1x8x32xf32> to vector<3x3x8x32xf32>
    %41 = vector.extract_strided_slice %34 {offsets = [0, 1, 0, 1, 0, 0], sizes = [3, 1, 3, 1, 8, 32], strides = [1, 1, 1, 1, 1, 1]} : vector<3x2x3x2x8x32xf32> to vector<3x1x3x1x8x32xf32>
    %42 = vector.shape_cast %41 : vector<3x1x3x1x8x32xf32> to vector<3x3x8x32xf32>
    %43 = vector.shape_cast %36 : vector<3x3x8x32xf32> to vector<72x32xf32>
    %44 = vector.shape_cast %38 : vector<3x3x8x32xf32> to vector<72x32xf32>
    %45 = vector.shape_cast %40 : vector<3x3x8x32xf32> to vector<72x32xf32>
    %46 = vector.shape_cast %42 : vector<3x3x8x32xf32> to vector<72x32xf32>
    %47 = tpu.concatenate %43, %44, %45, %46 in 1 : vector<72x32xf32>, vector<72x32xf32>, vector<72x32xf32>, vector<72x32xf32> -> vector<72x128xf32>
    %c0_14 = arith.constant 0 : index
    %c0_15 = arith.constant 0 : index
    %48 = vector.load %arg6[%c0_14, %c0_15] : memref<128x64xf32, #tpu.memory_space<vmem>>, vector<128x64xf32>
    %cst_16 = arith.constant dense<0.000000e+00> : vector<72x64xf32>
    %49 = tpu.matmul %47, %48, %cst_16 {dimension_numbers = #tpu.dot_dimension_numbers<[1], [0], [0], [1], [0, 0, 1, 1], [], []>} : vector<72x128xf32>, vector<128x64xf32>, vector<72x64xf32> -> vector<72x64xf32>
    %c0_17 = arith.constant 0 : index
    %c0_18 = arith.constant 0 : index
    %50 = vector.load %arg7[%c0_17, %c0_18] : memref<1x64xf32, #tpu.memory_space<vmem>>, vector<1x64xf32>
    %51 = vector.broadcast %50 : vector<1x64xf32> to vector<72x64xf32>
    %52 = arith.addf %49, %51 : vector<72x64xf32>
    %cst_19 = arith.constant 0.000000e+00 : f32
    %53 = vector.broadcast %cst_19 : f32 to vector<72x64xf32>
    %54 = arith.maximumf %52, %53 : vector<72x64xf32>
    %55 = vector.shape_cast %54 : vector<72x64xf32> to vector<3x3x8x64xf32>
    %56 = vector.extract_strided_slice %55 {offsets = [0, 0, 0, 0], sizes = [2, 2, 8, 64], strides = [1, 1, 1, 1]} : vector<3x3x8x64xf32> to vector<2x2x8x64xf32>
    %57 = vector.extract_strided_slice %55 {offsets = [0, 1, 0, 0], sizes = [2, 2, 8, 64], strides = [1, 1, 1, 1]} : vector<3x3x8x64xf32> to vector<2x2x8x64xf32>
    %58 = vector.extract_strided_slice %55 {offsets = [1, 0, 0, 0], sizes = [2, 2, 8, 64], strides = [1, 1, 1, 1]} : vector<3x3x8x64xf32> to vector<2x2x8x64xf32>
    %59 = vector.extract_strided_slice %55 {offsets = [1, 1, 0, 0], sizes = [2, 2, 8, 64], strides = [1, 1, 1, 1]} : vector<3x3x8x64xf32> to vector<2x2x8x64xf32>
    %60 = vector.shape_cast %56 : vector<2x2x8x64xf32> to vector<32x64xf32>
    %61 = vector.shape_cast %57 : vector<2x2x8x64xf32> to vector<32x64xf32>
    %62 = vector.shape_cast %58 : vector<2x2x8x64xf32> to vector<32x64xf32>
    %63 = vector.shape_cast %59 : vector<2x2x8x64xf32> to vector<32x64xf32>
    %64 = tpu.concatenate %60, %61, %62, %63 in 1 : vector<32x64xf32>, vector<32x64xf32>, vector<32x64xf32>, vector<32x64xf32> -> vector<32x256xf32>
    %c0_20 = arith.constant 0 : index
    %c0_21 = arith.constant 0 : index
    %65 = vector.load %arg8[%c0_20, %c0_21] : memref<256x64xf32, #tpu.memory_space<vmem>>, vector<256x64xf32>
    %cst_22 = arith.constant dense<0.000000e+00> : vector<32x64xf32>
    %66 = tpu.matmul %64, %65, %cst_22 {dimension_numbers = #tpu.dot_dimension_numbers<[1], [0], [0], [1], [0, 0, 1, 1], [], []>} : vector<32x256xf32>, vector<256x64xf32>, vector<32x64xf32> -> vector<32x64xf32>
    %c0_23 = arith.constant 0 : index
    %c0_24 = arith.constant 0 : index
    %67 = vector.load %arg9[%c0_23, %c0_24] : memref<1x64xf32, #tpu.memory_space<vmem>>, vector<1x64xf32>
    %68 = vector.broadcast %67 : vector<1x64xf32> to vector<32x64xf32>
    %69 = arith.addf %66, %68 : vector<32x64xf32>
    %cst_25 = arith.constant 0.000000e+00 : f32
    %70 = vector.broadcast %cst_25 : f32 to vector<32x64xf32>
    %71 = arith.maximumf %69, %70 : vector<32x64xf32>
    %72 = vector.shape_cast %71 : vector<32x64xf32> to vector<2x2x8x64xf32>
    %73 = vector.extract_strided_slice %72 {offsets = [0, 0, 0, 0], sizes = [1, 1, 8, 64], strides = [1, 1, 1, 1]} : vector<2x2x8x64xf32> to vector<1x1x8x64xf32>
    %74 = vector.shape_cast %73 : vector<1x1x8x64xf32> to vector<8x64xf32>
    %75 = vector.extract_strided_slice %72 {offsets = [0, 1, 0, 0], sizes = [1, 1, 8, 64], strides = [1, 1, 1, 1]} : vector<2x2x8x64xf32> to vector<1x1x8x64xf32>
    %76 = vector.shape_cast %75 : vector<1x1x8x64xf32> to vector<8x64xf32>
    %77 = vector.extract_strided_slice %72 {offsets = [1, 0, 0, 0], sizes = [1, 1, 8, 64], strides = [1, 1, 1, 1]} : vector<2x2x8x64xf32> to vector<1x1x8x64xf32>
    %78 = vector.shape_cast %77 : vector<1x1x8x64xf32> to vector<8x64xf32>
    %79 = vector.extract_strided_slice %72 {offsets = [1, 1, 0, 0], sizes = [1, 1, 8, 64], strides = [1, 1, 1, 1]} : vector<2x2x8x64xf32> to vector<1x1x8x64xf32>
    %80 = vector.shape_cast %79 : vector<1x1x8x64xf32> to vector<8x64xf32>
    %81 = tpu.concatenate %74, %76, %78, %80 in 1 : vector<8x64xf32>, vector<8x64xf32>, vector<8x64xf32>, vector<8x64xf32> -> vector<8x256xf32>
    %c0_26 = arith.constant 0 : index
    %c0_27 = arith.constant 0 : index
    %82 = vector.load %arg10[%c0_26, %c0_27] : memref<256x256xf32, #tpu.memory_space<vmem>>, vector<256x256xf32>
    %cst_28 = arith.constant dense<0.000000e+00> : vector<8x256xf32>
    %83 = tpu.matmul %81, %82, %cst_28 {dimension_numbers = #tpu.dot_dimension_numbers<[1], [0], [0], [1], [0, 0, 1, 1], [], []>} : vector<8x256xf32>, vector<256x256xf32>, vector<8x256xf32> -> vector<8x256xf32>
    %c0_29 = arith.constant 0 : index
    %c0_30 = arith.constant 0 : index
    %84 = vector.load %arg11[%c0_29, %c0_30] : memref<1x256xf32, #tpu.memory_space<vmem>>, vector<1x256xf32>
    %85 = vector.broadcast %84 : vector<1x256xf32> to vector<8x256xf32>
    %86 = arith.addf %83, %85 : vector<8x256xf32>
    %cst_31 = arith.constant 0.000000e+00 : f32
    %87 = vector.broadcast %cst_31 : f32 to vector<8x256xf32>
    %88 = arith.maximumf %86, %87 : vector<8x256xf32>
    %c0_32 = arith.constant 0 : index
    %c0_33 = arith.constant 0 : index
    %89 = vector.load %arg12[%c0_32, %c0_33] : memref<256x128xf32, #tpu.memory_space<vmem>>, vector<256x128xf32>
    %cst_34 = arith.constant dense<0.000000e+00> : vector<8x128xf32>
    %90 = tpu.matmul %88, %89, %cst_34 {dimension_numbers = #tpu.dot_dimension_numbers<[1], [0], [0], [1], [0, 0, 1, 1], [], []>} : vector<8x256xf32>, vector<256x128xf32>, vector<8x128xf32> -> vector<8x128xf32>
    %c0_35 = arith.constant 0 : index
    %c0_36 = arith.constant 0 : index
    %91 = vector.load %arg13[%c0_35, %c0_36] : memref<1x128xf32, #tpu.memory_space<vmem>>, vector<1x128xf32>
    %92 = vector.broadcast %91 : vector<1x128xf32> to vector<8x128xf32>
    %93 = arith.addf %90, %92 : vector<8x128xf32>
    %cst_37 = arith.constant 0.000000e+00 : f32
    %94 = vector.broadcast %cst_37 : f32 to vector<8x128xf32>
    %95 = arith.cmpf oge, %93, %94 : vector<8x128xf32>
    %cst_38 = arith.constant 0.00999999977 : f32
    %96 = vector.broadcast %cst_38 : f32 to vector<8x128xf32>
    %97 = arith.mulf %96, %93 : vector<8x128xf32>
    %98 = arith.select %95, %93, %97 : vector<8x128xi1>, vector<8x128xf32>
    %c0_39 = arith.constant 0 : index
    %c0_40 = arith.constant 0 : index
    %99 = vector.load %arg14[%c0_39, %c0_40] : memref<128x64xf32, #tpu.memory_space<vmem>>, vector<128x64xf32>
    %cst_41 = arith.constant dense<0.000000e+00> : vector<8x64xf32>
    %100 = tpu.matmul %98, %99, %cst_41 {dimension_numbers = #tpu.dot_dimension_numbers<[1], [0], [0], [1], [0, 0, 1, 1], [], []>} : vector<8x128xf32>, vector<128x64xf32>, vector<8x64xf32> -> vector<8x64xf32>
    %c0_42 = arith.constant 0 : index
    %c0_43 = arith.constant 0 : index
    %101 = vector.load %arg15[%c0_42, %c0_43] : memref<1x64xf32, #tpu.memory_space<vmem>>, vector<1x64xf32>
    %102 = vector.broadcast %101 : vector<1x64xf32> to vector<8x64xf32>
    %103 = arith.addf %100, %102 : vector<8x64xf32>
    %104 = math.tanh %103 : vector<8x64xf32>
    %c0_44 = arith.constant 0 : index
    %c0_45 = arith.constant 0 : index
    %105 = vector.load %arg16[%c0_44, %c0_45] : memref<64x128xf32, #tpu.memory_space<vmem>>, vector<64x128xf32>
    %cst_46 = arith.constant dense<0.000000e+00> : vector<8x128xf32>
    %106 = tpu.matmul %104, %105, %cst_46 {dimension_numbers = #tpu.dot_dimension_numbers<[1], [0], [0], [1], [0, 0, 1, 1], [], []>} : vector<8x64xf32>, vector<64x128xf32>, vector<8x128xf32> -> vector<8x128xf32>
    %c0_47 = arith.constant 0 : index
    %c0_48 = arith.constant 0 : index
    %107 = vector.load %arg17[%c0_47, %c0_48] : memref<1x128xf32, #tpu.memory_space<vmem>>, vector<1x128xf32>
    %108 = vector.broadcast %107 : vector<1x128xf32> to vector<8x128xf32>
    %109 = arith.addf %106, %108 : vector<8x128xf32>
    %c0_49 = arith.constant 0 : index
    %c0_50 = arith.constant 0 : index
    %110 = vector.load %arg18[%c0_49, %c0_50] : memref<8x128xf32, #tpu.memory_space<vmem>>, vector<8x128xf32>
    tpu.vector_store %arg18[%c0_49, %c0_50], %109 {strides = array<i32>} : memref<8x128xf32, #tpu.memory_space<vmem>>, vector<8x128xf32>,
    return
  }
  func.func @transform_0(%arg0: i32) -> (i32, i32, i32, i32) {
    %c0_i32 = arith.constant 0 : i32
    %c0_i32_0 = arith.constant 0 : i32
    %c0_i32_1 = arith.constant 0 : i32
    %c0_i32_2 = arith.constant 0 : i32
    return %c0_i32, %c0_i32_0, %arg0, %c0_i32_1 : i32, i32, i32, i32
  }
  func.func @transform_1(%arg0: i32) -> (i32, i32) {
    %c0_i32 = arith.constant 0 : i32
    %c0_i32_0 = arith.constant 0 : i32
    %c0_i32_1 = arith.constant 0 : i32
    return %c0_i32, %c0_i32_0 : i32, i32
  }
  func.func @transform_2(%arg0: i32) -> (i32, i32) {
    %c0_i32 = arith.constant 0 : i32
    %c0_i32_0 = arith.constant 0 : i32
    %c0_i32_1 = arith.constant 0 : i32
    return %c0_i32, %c0_i32_0 : i32, i32
  }
  func.func @transform_3(%arg0: i32) -> (i32, i32) {
    %c0_i32 = arith.constant 0 : i32
    %c0_i32_0 = arith.constant 0 : i32
    %c0_i32_1 = arith.constant 0 : i32
    return %c0_i32, %c0_i32_0 : i32, i32
  }
  func.func @transform_4(%arg0: i32) -> (i32, i32) {
    %c0_i32 = arith.constant 0 : i32
    %c0_i32_0 = arith.constant 0 : i32
    %c0_i32_1 = arith.constant 0 : i32
    return %c0_i32, %c0_i32_0 : i32, i32
  }
  func.func @transform_5(%arg0: i32) -> (i32, i32) {
    %c0_i32 = arith.constant 0 : i32
    %c0_i32_0 = arith.constant 0 : i32
    %c0_i32_1 = arith.constant 0 : i32
    return %c0_i32, %c0_i32_0 : i32, i32
  }
  func.func @transform_6(%arg0: i32) -> (i32, i32) {
    %c0_i32 = arith.constant 0 : i32
    %c0_i32_0 = arith.constant 0 : i32
    %c0_i32_1 = arith.constant 0 : i32
    return %c0_i32, %c0_i32_0 : i32, i32
  }
  func.func @transform_7(%arg0: i32) -> (i32, i32) {
    %c0_i32 = arith.constant 0 : i32
    %c0_i32_0 = arith.constant 0 : i32
    %c0_i32_1 = arith.constant 0 : i32
    return %c0_i32, %c0_i32_0 : i32, i32
  }
  func.func @transform_8(%arg0: i32) -> (i32, i32) {
    %c0_i32 = arith.constant 0 : i32
    %c0_i32_0 = arith.constant 0 : i32
    %c0_i32_1 = arith.constant 0 : i32
    return %c0_i32, %c0_i32_0 : i32, i32
  }
  func.func @transform_9(%arg0: i32) -> (i32, i32) {
    %c0_i32 = arith.constant 0 : i32
    %c0_i32_0 = arith.constant 0 : i32
    %c0_i32_1 = arith.constant 0 : i32
    return %c0_i32, %c0_i32_0 : i32, i32
  }
  func.func @transform_10(%arg0: i32) -> (i32, i32) {
    %c0_i32 = arith.constant 0 : i32
    %c0_i32_0 = arith.constant 0 : i32
    %c0_i32_1 = arith.constant 0 : i32
    return %c0_i32, %c0_i32_0 : i32, i32
  }
  func.func @transform_11(%arg0: i32) -> (i32, i32) {
    %c0_i32 = arith.constant 0 : i32
    %c0_i32_0 = arith.constant 0 : i32
    %c0_i32_1 = arith.constant 0 : i32
    return %c0_i32, %c0_i32_0 : i32, i32
  }
  func.func @transform_12(%arg0: i32) -> (i32, i32) {
    %c0_i32 = arith.constant 0 : i32
    %c0_i32_0 = arith.constant 0 : i32
    %c0_i32_1 = arith.constant 0 : i32
    return %c0_i32, %c0_i32_0 : i32, i32
  }
  func.func @transform_13(%arg0: i32) -> (i32, i32) {
    %c0_i32 = arith.constant 0 : i32
    %c0_i32_0 = arith.constant 0 : i32
    %c0_i32_1 = arith.constant 0 : i32
    return %c0_i32, %c0_i32_0 : i32, i32
  }
  func.func @transform_14(%arg0: i32) -> (i32, i32) {
    %c0_i32 = arith.constant 0 : i32
    %c0_i32_0 = arith.constant 0 : i32
    %c0_i32_1 = arith.constant 0 : i32
    return %c0_i32, %c0_i32_0 : i32, i32
  }
  func.func @transform_15(%arg0: i32) -> (i32, i32) {
    %c0_i32 = arith.constant 0 : i32
    %c0_i32_0 = arith.constant 0 : i32
    %c0_i32_1 = arith.constant 0 : i32
    return %c0_i32, %c0_i32_0 : i32, i32
  }
  func.func @transform_16(%arg0: i32) -> (i32, i32) {
    %c0_i32 = arith.constant 0 : i32
    %c0_i32_0 = arith.constant 0 : i32
    %c0_i32_1 = arith.constant 0 : i32
    return %c0_i32, %c0_i32_0 : i32, i32
  }
  func.func @transform_17(%arg0: i32) -> (i32, i32) {
    %c0_i32 = arith.constant 0 : i32
    %c0_i32_0 = arith.constant 0 : i32
    return %arg0, %c0_i32 : i32, i32
  }
}

</mosaic_0001>

<llo_original>
// kernel: regressor_forward.1
$region0: #{regressor_forward.1}
  #allocation0 [shape = 'u32[]', space=smem, size = 0x4, offset = 0x4, fixed_abs, tag = 'smem constant byte address 0x4 - core index']
  #allocation1 [shape = 'u32[144,128]{1,0:T(1,128)}', space=vmem, size = 0x12000, scoped, tag = 'internal scratch']
  %s0 = inlined_call_operand.vmem [shape: f32[15,15,8,4], index: 0, kind: input, shape index: {}]
  %s1 = inlined_call_operand.vmem [shape: f32[4,16], index: 1, kind: input, shape index: {}]
  %s2 = inlined_call_operand.vmem [shape: f32[1,16], index: 2, kind: input, shape index: {}]
  %s3 = inlined_call_operand.vmem [shape: f32[64,32], index: 3, kind: input, shape index: {}]
  %s4 = inlined_call_operand.vmem [shape: f32[1,32], index: 4, kind: input, shape index: {}]
  %s5 = inlined_call_operand.vmem [shape: f32[128,64], index: 5, kind: input, shape index: {}]
  %s6 = inlined_call_operand.vmem [shape: f32[1,64], index: 6, kind: input, shape index: {}]
  %s7 = inlined_call_operand.vmem [shape: f32[256,64], index: 7, kind: input, shape index: {}]
  %s8 = inlined_call_operand.vmem [shape: f32[1,64], index: 8, kind: input, shape index: {}]
  %s9 = inlined_call_operand.vmem [shape: f32[256,256], index: 9, kind: input, shape index: {}]
  %s10 = inlined_call_operand.vmem [shape: f32[1,256], index: 10, kind: input, shape index: {}]
  %s11 = inlined_call_operand.vmem [shape: f32[256,128], index: 11, kind: input, shape index: {}]
  %s12 = inlined_call_operand.vmem [shape: f32[1,128], index: 12, kind: input, shape index: {}]
  %s13 = inlined_call_operand.vmem [shape: f32[128,64], index: 13, kind: input, shape index: {}]
  %s14 = inlined_call_operand.vmem [shape: f32[1,64], index: 14, kind: input, shape index: {}]
  %s15 = inlined_call_operand.vmem [shape: f32[64,128], index: 15, kind: input, shape index: {}]
  %s16 = inlined_call_operand.vmem [shape: f32[1,128], index: 16, kind: input, shape index: {}]
  %s17 = inlined_call_operand.vmem [shape: f32[8,128], index: 17, kind: output, shape index: {}]
  %s18 = sld [smem:[#allocation0]]
  $region78: #{regressor_forward.1} parent=0
    _
  %s20 = ssub.s32 1, %s18
  %s21 = scalar_select 0, %s20, %s18
  // Predicated region
  $region2: #{regressor_forward.1} parent=0 // pred_check
    _
  $region3: #{regressor_forward.1} parent=0 // pred_check_branch
    %23 = sbr.rel (0) target = $region5
  $region4: #{regressor_forward.1} parent=0 // pred_region
    _
  $region5: #{regressor_forward.1} parent=0 // pred_fallthru
    _
  // Predicated region
  $region6: #{regressor_forward.1} parent=0 // pred_check
    _
  $region7: #{regressor_forward.1} parent=0 // pred_check_branch
    %25 = sbr.rel (0) target = $region9
  $region8: #{regressor_forward.1} parent=0 // pred_region
    _
  $region9: #{regressor_forward.1} parent=0 // pred_fallthru
    _
  // Predicated region
  $region10: #{regressor_forward.1} parent=0 // pred_check
    _
  $region11: #{regressor_forward.1} parent=0 // pred_check_branch
    %27 = sbr.rel (0) target = $region13
  $region12: #{regressor_forward.1} parent=0 // pred_region
    _
  $region13: #{regressor_forward.1} parent=0 // pred_fallthru
    _
  // Predicated region
  $region14: #{regressor_forward.1} parent=0 // pred_check
    _
  $region15: #{regressor_forward.1} parent=0 // pred_check_branch
    %29 = sbr.rel (0) target = $region17
  $region16: #{regressor_forward.1} parent=0 // pred_region
    _
  $region17: #{regressor_forward.1} parent=0 // pred_fallthru
    _
  // Predicated region
  $region18: #{regressor_forward.1} parent=0 // pred_check
    _
  $region19: #{regressor_forward.1} parent=0 // pred_check_branch
    %31 = sbr.rel (0) target = $region21
  $region20: #{regressor_forward.1} parent=0 // pred_region
    _
  $region21: #{regressor_forward.1} parent=0 // pred_fallthru
    _
  // Predicated region
  $region22: #{regressor_forward.1} parent=0 // pred_check
    _
  $region23: #{regressor_forward.1} parent=0 // pred_check_branch
    %33 = sbr.rel (0) target = $region25
  $region24: #{regressor_forward.1} parent=0 // pred_region
    _
  $region25: #{regressor_forward.1} parent=0 // pred_fallthru
    _
  // Predicated region
  $region26: #{regressor_forward.1} parent=0 // pred_check
    _
  $region27: #{regressor_forward.1} parent=0 // pred_check_branch
    %35 = sbr.rel (0) target = $region29
  $region28: #{regressor_forward.1} parent=0 // pred_region
    _
  $region29: #{regressor_forward.1} parent=0 // pred_fallthru
    _
  // Predicated region
  $region30: #{regressor_forward.1} parent=0 // pred_check
    _
  $region31: #{regressor_forward.1} parent=0 // pred_check_branch
    %37 = sbr.rel (0) target = $region33
  $region32: #{regressor_forward.1} parent=0 // pred_region
    _
  $region33: #{regressor_forward.1} parent=0 // pred_fallthru
    _
  // Predicated region
  $region34: #{regressor_forward.1} parent=0 // pred_check
    _
  $region35: #{regressor_forward.1} parent=0 // pred_check_branch
    %39 = sbr.rel (0) target = $region37
  $region36: #{regressor_forward.1} parent=0 // pred_region
    _
  $region37: #{regressor_forward.1} parent=0 // pred_fallthru
    _
  // Predicated region
  $region38: #{regressor_forward.1} parent=0 // pred_check
    _
  $region39: #{regressor_forward.1} parent=0 // pred_check_branch
    %41 = sbr.rel (0) target = $region41
  $region40: #{regressor_forward.1} parent=0 // pred_region
    _
  $region41: #{regressor_forward.1} parent=0 // pred_fallthru
    _
  // Predicated region
  $region42: #{regressor_forward.1} parent=0 // pred_check
    _
  $region43: #{regressor_forward.1} parent=0 // pred_check_branch
    %43 = sbr.rel (0) target = $region45
  $region44: #{regressor_forward.1} parent=0 // pred_region
    _
  $region45: #{regressor_forward.1} parent=0 // pred_fallthru
    _
  // Predicated region
  $region46: #{regressor_forward.1} parent=0 // pred_check
    _
  $region47: #{regressor_forward.1} parent=0 // pred_check_branch
    %45 = sbr.rel (0) target = $region49
  $region48: #{regressor_forward.1} parent=0 // pred_region
    _
  $region49: #{regressor_forward.1} parent=0 // pred_fallthru
    _
  // Predicated region
  $region50: #{regressor_forward.1} parent=0 // pred_check
    _
  $region51: #{regressor_forward.1} parent=0 // pred_check_branch
    %47 = sbr.rel (0) target = $region53
  $region52: #{regressor_forward.1} parent=0 // pred_region
    _
  $region53: #{regressor_forward.1} parent=0 // pred_fallthru
    _
  // Predicated region
  $region54: #{regressor_forward.1} parent=0 // pred_check
    _
  $region55: #{regressor_forward.1} parent=0 // pred_check_branch
    %49 = sbr.rel (0) target = $region57
  $region56: #{regressor_forward.1} parent=0 // pred_region
    _
  $region57: #{regressor_forward.1} parent=0 // pred_fallthru
    _
  // Predicated region
  $region58: #{regressor_forward.1} parent=0 // pred_check
    _
  $region59: #{regressor_forward.1} parent=0 // pred_check_branch
    %51 = sbr.rel (0) target = $region61
  $region60: #{regressor_forward.1} parent=0 // pred_region
    _
  $region61: #{regressor_forward.1} parent=0 // pred_fallthru
    _
  // Predicated region
  $region62: #{regressor_forward.1} parent=0 // pred_check
    _
  $region63: #{regressor_forward.1} parent=0 // pred_check_branch
    %53 = sbr.rel (0) target = $region65
  $region64: #{regressor_forward.1} parent=0 // pred_region
    _
  $region65: #{regressor_forward.1} parent=0 // pred_fallthru
    _
  // Predicated region
  $region66: #{regressor_forward.1} parent=0 // pred_check
    _
  $region67: #{regressor_forward.1} parent=0 // pred_check_branch
    %55 = sbr.rel (0) target = $region69
  $region68: #{regressor_forward.1} parent=0 // pred_region
    _
  $region69: #{regressor_forward.1} parent=0 // pred_fallthru
    _
  %v56 = vld [vmem:[%s0] sm:$0xff]
  %v57 = vld [vmem:[%s0 + $0x8] sm:$0xff]
  %v58 = vld [vmem:[%s0 + $0x10] sm:$0xff]
  %v59 = vld [vmem:[%s0 + $0x18] sm:$0xff]
  %v60 = vld [vmem:[%s0 + $0x20] sm:$0xff]
  %v61 = vld [vmem:[%s0 + $0x28] sm:$0xff]
  %v62 = vld [vmem:[%s0 + $0x30] sm:$0xff]
  %v63 = vld [vmem:[%s0 + $0x38] sm:$0xff]
  %v64 = vld [vmem:[%s0 + $0x40] sm:$0xff]
  %v65 = vld [vmem:[%s0 + $0x48] sm:$0xff]
  %v66 = vld [vmem:[%s0 + $0x50] sm:$0xff]
  %v67 = vld [vmem:[%s0 + $0x58] sm:$0xff]
  %v68 = vld [vmem:[%s0 + $0x60] sm:$0xff]
  %v69 = vld [vmem:[%s0 + $0x68] sm:$0xff]
  %v70 = vld [vmem:[%s0 + $0x70] sm:$0xff]
  %v71 = vld [vmem:[%s0 + $0x78] sm:$0xff]
  %v72 = vld [vmem:[%s0 + $0x80] sm:$0xff]
  %v73 = vld [vmem:[%s0 + $0x88] sm:$0xff]
  %v74 = vld [vmem:[%s0 + $0x90] sm:$0xff]
  %v75 = vld [vmem:[%s0 + $0x98] sm:$0xff]
  %v76 = vld [vmem:[%s0 + $0xa0] sm:$0xff]
  %v77 = vld [vmem:[%s0 + $0xa8] sm:$0xff]
  %v78 = vld [vmem:[%s0 + $0xb0] sm:$0xff]
  %v79 = vld [vmem:[%s0 + $0xb8] sm:$0xff]
  %v80 = vld [vmem:[%s0 + $0xc0] sm:$0xff]
  %v81 = vld [vmem:[%s0 + $0xc8] sm:$0xff]
  %v82 = vld [vmem:[%s0 + $0xd0] sm:$0xff]
  %v83 = vld [vmem:[%s0 + $0xd8] sm:$0xff]
  %v84 = vld [vmem:[%s0 + $0xe0] sm:$0xff]
  %v85 = vld [vmem:[%s0 + $0xe8] sm:$0xff]
  %v86 = vld [vmem:[%s0 + $0xf0] sm:$0xff]
  %v87 = vld [vmem:[%s0 + $0xf8] sm:$0xff]
  %v88 = vld [vmem:[%s0 + $0x100] sm:$0xff]
  %v89 = vld [vmem:[%s0 + $0x108] sm:$0xff]
  %v90 = vld [vmem:[%s0 + $0x110] sm:$0xff]
  %v91 = vld [vmem:[%s0 + $0x118] sm:$0xff]
  %v92 = vld [vmem:[%s0 + $0x120] sm:$0xff]
  %v93 = vld [vmem:[%s0 + $0x128] sm:$0xff]
  %v94 = vld [vmem:[%s0 + $0x130] sm:$0xff]
  %v95 = vld [vmem:[%s0 + $0x138] sm:$0xff]
  %v96 = vld [vmem:[%s0 + $0x140] sm:$0xff]
  %v97 = vld [vmem:[%s0 + $0x148] sm:$0xff]
  %v98 = vld [vmem:[%s0 + $0x150] sm:$0xff]
  %v99 = vld [vmem:[%s0 + $0x158] sm:$0xff]
  %v100 = vld [vmem:[%s0 + $0x160] sm:$0xff]
  %v101 = vld [vmem:[%s0 + $0x168] sm:$0xff]
  %v102 = vld [vmem:[%s0 + $0x170] sm:$0xff]
  %v103 = vld [vmem:[%s0 + $0x178] sm:$0xff]
  %v104 = vld [vmem:[%s0 + $0x180] sm:$0xff]
  %v105 = vld [vmem:[%s0 + $0x188] sm:$0xff]
  %v106 = vld [vmem:[%s0 + $0x190] sm:$0xff]
  %v107 = vld [vmem:[%s0 + $0x198] sm:$0xff]
  %v108 = vld [vmem:[%s0 + $0x1a0] sm:$0xff]
  %v109 = vld [vmem:[%s0 + $0x1a8] sm:$0xff]
  %v110 = vld [vmem:[%s0 + $0x1b0] sm:$0xff]
  %v111 = vld [vmem:[%s0 + $0x1b8] sm:$0xff]
  %v112 = vld [vmem:[%s0 + $0x1c0] sm:$0xff]
  %v113 = vld [vmem:[%s0 + $0x1c8] sm:$0xff]
  %v114 = vld [vmem:[%s0 + $0x1d0] sm:$0xff]
  %v115 = vld [vmem:[%s0 + $0x1d8] sm:$0xff]
  %v116 = vld [vmem:[%s0 + $0x1e0] sm:$0xff]
  %v117 = vld [vmem:[%s0 + $0x1e8] sm:$0xff]
  %v118 = vld [vmem:[%s0 + $0x1f0] sm:$0xff]
  %v119 = vld [vmem:[%s0 + $0x1f8] sm:$0xff]
  %v120 = vld [vmem:[%s0 + $0x200] sm:$0xff]
  %v121 = vld [vmem:[%s0 + $0x208] sm:$0xff]
  %v122 = vld [vmem:[%s0 + $0x210] sm:$0xff]
  %v123 = vld [vmem:[%s0 + $0x218] sm:$0xff]
  %v124 = vld [vmem:[%s0 + $0x220] sm:$0xff]
  %v125 = vld [vmem:[%s0 + $0x228] sm:$0xff]
  %v126 = vld [vmem:[%s0 + $0x230] sm:$0xff]
  %v127 = vld [vmem:[%s0 + $0x238] sm:$0xff]
  %v128 = vld [vmem:[%s0 + $0x240] sm:$0xff]
  %v129 = vld [vmem:[%s0 + $0x248] sm:$0xff]
  %v130 = vld [vmem:[%s0 + $0x250] sm:$0xff]
  %v131 = vld [vmem:[%s0 + $0x258] sm:$0xff]
  %v132 = vld [vmem:[%s0 + $0x260] sm:$0xff]
  %v133 = vld [vmem:[%s0 + $0x268] sm:$0xff]
  %v134 = vld [vmem:[%s0 + $0x270] sm:$0xff]
  %v135 = vld [vmem:[%s0 + $0x278] sm:$0xff]
  %v136 = vld [vmem:[%s0 + $0x280] sm:$0xff]
  %v137 = vld [vmem:[%s0 + $0x288] sm:$0xff]
  %v138 = vld [vmem:[%s0 + $0x290] sm:$0xff]
  %v139 = vld [vmem:[%s0 + $0x298] sm:$0xff]
  %v140 = vld [vmem:[%s0 + $0x2a0] sm:$0xff]
  %v141 = vld [vmem:[%s0 + $0x2a8] sm:$0xff]
  %v142 = vld [vmem:[%s0 + $0x2b0] sm:$0xff]
  %v143 = vld [vmem:[%s0 + $0x2b8] sm:$0xff]
  %v144 = vld [vmem:[%s0 + $0x2c0] sm:$0xff]
  %v145 = vld [vmem:[%s0 + $0x2c8] sm:$0xff]
  %v146 = vld [vmem:[%s0 + $0x2d0] sm:$0xff]
  %v147 = vld [vmem:[%s0 + $0x2d8] sm:$0xff]
  %v148 = vld [vmem:[%s0 + $0x2e0] sm:$0xff]
  %v149 = vld [vmem:[%s0 + $0x2e8] sm:$0xff]
  %v150 = vld [vmem:[%s0 + $0x2f0] sm:$0xff]
  %v151 = vld [vmem:[%s0 + $0x2f8] sm:$0xff]
  %v152 = vld [vmem:[%s0 + $0x300] sm:$0xff]
  %v153 = vld [vmem:[%s0 + $0x308] sm:$0xff]
  %v154 = vld [vmem:[%s0 + $0x310] sm:$0xff]
  %v155 = vld [vmem:[%s0 + $0x318] sm:$0xff]
  %v156 = vld [vmem:[%s0 + $0x320] sm:$0xff]
  %v157 = vld [vmem:[%s0 + $0x328] sm:$0xff]
  %v158 = vld [vmem:[%s0 + $0x330] sm:$0xff]
  %v159 = vld [vmem:[%s0 + $0x338] sm:$0xff]
  %v160 = vld [vmem:[%s0 + $0x340] sm:$0xff]
  %v161 = vld [vmem:[%s0 + $0x348] sm:$0xff]
  %v162 = vld [vmem:[%s0 + $0x350] sm:$0xff]
  %v163 = vld [vmem:[%s0 + $0x358] sm:$0xff]
  %v164 = vld [vmem:[%s0 + $0x360] sm:$0xff]
  %v165 = vld [vmem:[%s0 + $0x368] sm:$0xff]
  %v166 = vld [vmem:[%s0 + $0x370] sm:$0xff]
  %v167 = vld [vmem:[%s0 + $0x378] sm:$0xff]
  %v168 = vld [vmem:[%s0 + $0x380] sm:$0xff]
  %v169 = vld [vmem:[%s0 + $0x388] sm:$0xff]
  %v170 = vld [vmem:[%s0 + $0x390] sm:$0xff]
  %v171 = vld [vmem:[%s0 + $0x398] sm:$0xff]
  %v172 = vld [vmem:[%s0 + $0x3a0] sm:$0xff]
  %v173 = vld [vmem:[%s0 + $0x3a8] sm:$0xff]
  %v174 = vld [vmem:[%s0 + $0x3b0] sm:$0xff]
  %v175 = vld [vmem:[%s0 + $0x3b8] sm:$0xff]
  %v176 = vld [vmem:[%s0 + $0x3c0] sm:$0xff]
  %v177 = vld [vmem:[%s0 + $0x3c8] sm:$0xff]
  %v178 = vld [vmem:[%s0 + $0x3d0] sm:$0xff]
  %v179 = vld [vmem:[%s0 + $0x3d8] sm:$0xff]
  %v180 = vld [vmem:[%s0 + $0x3e0] sm:$0xff]
  %v181 = vld [vmem:[%s0 + $0x3e8] sm:$0xff]
  %v182 = vld [vmem:[%s0 + $0x3f0] sm:$0xff]
  %v183 = vld [vmem:[%s0 + $0x3f8] sm:$0xff]
  %v184 = vld [vmem:[%s0 + $0x400] sm:$0xff]
  %v185 = vld [vmem:[%s0 + $0x408] sm:$0xff]
  %v186 = vld [vmem:[%s0 + $0x410] sm:$0xff]
  %v187 = vld [vmem:[%s0 + $0x418] sm:$0xff]
  %v188 = vld [vmem:[%s0 + $0x420] sm:$0xff]
  %v189 = vld [vmem:[%s0 + $0x428] sm:$0xff]
  %v190 = vld [vmem:[%s0 + $0x430] sm:$0xff]
  %v191 = vld [vmem:[%s0 + $0x438] sm:$0xff]
  %v192 = vld [vmem:[%s0 + $0x440] sm:$0xff]
  %v193 = vld [vmem:[%s0 + $0x448] sm:$0xff]
  %v194 = vld [vmem:[%s0 + $0x450] sm:$0xff]
  %v195 = vld [vmem:[%s0 + $0x458] sm:$0xff]
  %v196 = vld [vmem:[%s0 + $0x460] sm:$0xff]
  %v197 = vld [vmem:[%s0 + $0x468] sm:$0xff]
  %v198 = vld [vmem:[%s0 + $0x470] sm:$0xff]
  %v199 = vld [vmem:[%s0 + $0x478] sm:$0xff]
  %v200 = vld [vmem:[%s0 + $0x480] sm:$0xff]
  %v201 = vld [vmem:[%s0 + $0x488] sm:$0xff]
  %v202 = vld [vmem:[%s0 + $0x490] sm:$0xff]
  %v203 = vld [vmem:[%s0 + $0x498] sm:$0xff]
  %v204 = vld [vmem:[%s0 + $0x4a0] sm:$0xff]
  %v205 = vld [vmem:[%s0 + $0x4a8] sm:$0xff]
  %v206 = vld [vmem:[%s0 + $0x4b0] sm:$0xff]
  %v207 = vld [vmem:[%s0 + $0x4b8] sm:$0xff]
  %v208 = vld [vmem:[%s0 + $0x4c0] sm:$0xff]
  %v209 = vld [vmem:[%s0 + $0x4c8] sm:$0xff]
  %v210 = vld [vmem:[%s0 + $0x4d0] sm:$0xff]
  %v211 = vld [vmem:[%s0 + $0x4d8] sm:$0xff]
  %v212 = vld [vmem:[%s0 + $0x4e0] sm:$0xff]
  %v213 = vld [vmem:[%s0 + $0x4e8] sm:$0xff]
  %v214 = vld [vmem:[%s0 + $0x4f0] sm:$0xff]
  %v215 = vld [vmem:[%s0 + $0x4f8] sm:$0xff]
  %v216 = vld [vmem:[%s0 + $0x500] sm:$0xff]
  %v217 = vld [vmem:[%s0 + $0x508] sm:$0xff]
  %v218 = vld [vmem:[%s0 + $0x510] sm:$0xff]
  %v219 = vld [vmem:[%s0 + $0x518] sm:$0xff]
  %v220 = vld [vmem:[%s0 + $0x520] sm:$0xff]
  %v221 = vld [vmem:[%s0 + $0x528] sm:$0xff]
  %v222 = vld [vmem:[%s0 + $0x530] sm:$0xff]
  %v223 = vld [vmem:[%s0 + $0x538] sm:$0xff]
  %v224 = vld [vmem:[%s0 + $0x540] sm:$0xff]
  %v225 = vld [vmem:[%s0 + $0x548] sm:$0xff]
  %v226 = vld [vmem:[%s0 + $0x550] sm:$0xff]
  %v227 = vld [vmem:[%s0 + $0x558] sm:$0xff]
  %v228 = vld [vmem:[%s0 + $0x560] sm:$0xff]
  %v229 = vld [vmem:[%s0 + $0x568] sm:$0xff]
  %v230 = vld [vmem:[%s0 + $0x570] sm:$0xff]
  %v231 = vld [vmem:[%s0 + $0x578] sm:$0xff]
  %v232 = vld [vmem:[%s0 + $0x580] sm:$0xff]
  %v233 = vld [vmem:[%s0 + $0x588] sm:$0xff]
  %v234 = vld [vmem:[%s0 + $0x590] sm:$0xff]
  %v235 = vld [vmem:[%s0 + $0x598] sm:$0xff]
  %v236 = vld [vmem:[%s0 + $0x5a0] sm:$0xff]
  %v237 = vld [vmem:[%s0 + $0x5a8] sm:$0xff]
  %v238 = vld [vmem:[%s0 + $0x5b0] sm:$0xff]
  %v239 = vld [vmem:[%s0 + $0x5b8] sm:$0xff]
  %v240 = vld [vmem:[%s0 + $0x5c0] sm:$0xff]
  %v241 = vld [vmem:[%s0 + $0x5c8] sm:$0xff]
  %v242 = vld [vmem:[%s0 + $0x5d0] sm:$0xff]
  %v243 = vld [vmem:[%s0 + $0x5d8] sm:$0xff]
  %v244 = vld [vmem:[%s0 + $0x5e0] sm:$0xff]
  %v245 = vld [vmem:[%s0 + $0x5e8] sm:$0xff]
  %v246 = vld [vmem:[%s0 + $0x5f0] sm:$0xff]
  %v247 = vld [vmem:[%s0 + $0x5f8] sm:$0xff]
  %v248 = vld [vmem:[%s0 + $0x600] sm:$0xff]
  %v249 = vld [vmem:[%s0 + $0x608] sm:$0xff]
  %v250 = vld [vmem:[%s0 + $0x610] sm:$0xff]
  %v251 = vld [vmem:[%s0 + $0x618] sm:$0xff]
  %v252 = vld [vmem:[%s0 + $0x620] sm:$0xff]
  %v253 = vld [vmem:[%s0 + $0x628] sm:$0xff]
  %v254 = vld [vmem:[%s0 + $0x630] sm:$0xff]
  %v255 = vld [vmem:[%s0 + $0x638] sm:$0xff]
  %v256 = vld [vmem:[%s0 + $0x640] sm:$0xff]
  %v257 = vld [vmem:[%s0 + $0x648] sm:$0xff]
  %v258 = vld [vmem:[%s0 + $0x650] sm:$0xff]
  %v259 = vld [vmem:[%s0 + $0x658] sm:$0xff]
  %v260 = vld [vmem:[%s0 + $0x660] sm:$0xff]
  %v261 = vld [vmem:[%s0 + $0x668] sm:$0xff]
  %v262 = vld [vmem:[%s0 + $0x670] sm:$0xff]
  %v263 = vld [vmem:[%s0 + $0x678] sm:$0xff]
  %v264 = vld [vmem:[%s0 + $0x680] sm:$0xff]
  %v265 = vld [vmem:[%s0 + $0x688] sm:$0xff]
  %v266 = vld [vmem:[%s0 + $0x690] sm:$0xff]
  %v267 = vld [vmem:[%s0 + $0x698] sm:$0xff]
  %v268 = vld [vmem:[%s0 + $0x6a0] sm:$0xff]
  %v269 = vld [vmem:[%s0 + $0x6a8] sm:$0xff]
  %v270 = vld [vmem:[%s0 + $0x6b0] sm:$0xff]
  %v271 = vld [vmem:[%s0 + $0x6b8] sm:$0xff]
  %v272 = vld [vmem:[%s0 + $0x6c0] sm:$0xff]
  %v273 = vld [vmem:[%s0 + $0x6c8] sm:$0xff]
  %v274 = vld [vmem:[%s0 + $0x6d0] sm:$0xff]
  %v275 = vld [vmem:[%s0 + $0x6d8] sm:$0xff]
  %v276 = vld [vmem:[%s0 + $0x6e0] sm:$0xff]
  %v277 = vld [vmem:[%s0 + $0x6e8] sm:$0xff]
  %v278 = vld [vmem:[%s0 + $0x6f0] sm:$0xff]
  %v279 = vld [vmem:[%s0 + $0x6f8] sm:$0xff]
  %v280 = vld [vmem:[%s0 + $0x700] sm:$0xff]
  %v281 = vld [vmem:[%s1] sm:$0xf]
  %v282 = vld [vmem:[%s2] sm:$0x1]
  %v284 = vlaneseq
  %v285 = vshrl.u32 %v284, 7
  %v286 = vsub.s32 0, %v285
  %v287 = vrot.slane %v282, %v286
  %vm289 = vcmask 31744
  %v291 = vsel %vm289, %v56, 0
  %v294 = vsel %vm289, %v57, 0
  %v297 = vsel %vm289, %v58, 0
  %v300 = vsel %vm289, %v59, 0
  %v303 = vsel %vm289, %v60, 0
  %v306 = vsel %vm289, %v61, 0
  %v309 = vsel %vm289, %v62, 0
  %v312 = vsel %vm289, %v63, 0
  %v315 = vsel %vm289, %v64, 0
  %v318 = vsel %vm289, %v65, 0
  %v321 = vsel %vm289, %v66, 0
  %v324 = vsel %vm289, %v67, 0
  %v327 = vsel %vm289, %v68, 0
  %v330 = vsel %vm289, %v69, 0
  %v333 = vsel %vm289, %v70, 0
  %v336 = vsel %vm289, %v71, 0
  %v339 = vsel %vm289, %v72, 0
  %v342 = vsel %vm289, %v73, 0
  %v345 = vsel %vm289, %v74, 0
  %v348 = vsel %vm289, %v75, 0
  %v351 = vsel %vm289, %v76, 0
  %v354 = vsel %vm289, %v77, 0
  %v357 = vsel %vm289, %v78, 0
  %v360 = vsel %vm289, %v79, 0
  %v363 = vsel %vm289, %v80, 0
  %v366 = vsel %vm289, %v81, 0
  %v369 = vsel %vm289, %v82, 0
  %v372 = vsel %vm289, %v83, 0
  %v375 = vsel %vm289, %v84, 0
  %v378 = vsel %vm289, %v85, 0
  %v381 = vsel %vm289, %v86, 0
  %v384 = vsel %vm289, %v87, 0
  %v387 = vsel %vm289, %v88, 0
  %v390 = vsel %vm289, %v89, 0
  %v393 = vsel %vm289, %v90, 0
  %v396 = vsel %vm289, %v91, 0
  %v399 = vsel %vm289, %v92, 0
  %v402 = vsel %vm289, %v93, 0
  %v405 = vsel %vm289, %v94, 0
  %v408 = vsel %vm289, %v95, 0
  %v411 = vsel %vm289, %v96, 0
  %v414 = vsel %vm289, %v97, 0
  %v417 = vsel %vm289, %v98, 0
  %v420 = vsel %vm289, %v99, 0
  %v423 = vsel %vm289, %v100, 0
  %v426 = vsel %vm289, %v101, 0
  %v429 = vsel %vm289, %v102, 0
  %v432 = vsel %vm289, %v103, 0
  %v435 = vsel %vm289, %v104, 0
  %v438 = vsel %vm289, %v105, 0
  %v441 = vsel %vm289, %v106, 0
  %v444 = vsel %vm289, %v107, 0
  %v447 = vsel %vm289, %v108, 0
  %v450 = vsel %vm289, %v109, 0
  %v453 = vsel %vm289, %v110, 0
  %v456 = vsel %vm289, %v111, 0
  %v459 = vsel %vm289, %v112, 0
  %v462 = vsel %vm289, %v113, 0
  %v465 = vsel %vm289, %v114, 0
  %v468 = vsel %vm289, %v115, 0
  %v471 = vsel %vm289, %v116, 0
  %v474 = vsel %vm289, %v117, 0
  %v477 = vsel %vm289, %v118, 0
  %v480 = vsel %vm289, %v119, 0
  %v483 = vsel %vm289, %v120, 0
  %v486 = vsel %vm289, %v121, 0
  %v489 = vsel %vm289, %v122, 0
  %v492 = vsel %vm289, %v123, 0
  %v495 = vsel %vm289, %v124, 0
  %v498 = vsel %vm289, %v125, 0
  %v501 = vsel %vm289, %v126, 0
  %v504 = vsel %vm289, %v127, 0
  %v507 = vsel %vm289, %v128, 0
  %v510 = vsel %vm289, %v129, 0
  %v513 = vsel %vm289, %v130, 0
  %v516 = vsel %vm289, %v131, 0
  %v519 = vsel %vm289, %v132, 0
  %v522 = vsel %vm289, %v133, 0
  %v525 = vsel %vm289, %v134, 0
  %v528 = vsel %vm289, %v135, 0
  %v531 = vsel %vm289, %v136, 0
  %v534 = vsel %vm289, %v137, 0
  %v537 = vsel %vm289, %v138, 0
  %v540 = vsel %vm289, %v139, 0
  %v543 = vsel %vm289, %v140, 0
  %v546 = vsel %vm289, %v141, 0
  %v549 = vsel %vm289, %v142, 0
  %v552 = vsel %vm289, %v143, 0
  %v555 = vsel %vm289, %v144, 0
  %v558 = vsel %vm289, %v145, 0
  %v561 = vsel %vm289, %v146, 0
  %v564 = vsel %vm289, %v147, 0
  %v567 = vsel %vm289, %v148, 0
  %v570 = vsel %vm289, %v149, 0
  %v573 = vsel %vm289, %v150, 0
  %v576 = vsel %vm289, %v151, 0
  %v579 = vsel %vm289, %v152, 0
  %v582 = vsel %vm289, %v153, 0
  %v585 = vsel %vm289, %v154, 0
  %v588 = vsel %vm289, %v155, 0
  %v591 = vsel %vm289, %v156, 0
  %v594 = vsel %vm289, %v157, 0
  %v597 = vsel %vm289, %v158, 0
  %v600 = vsel %vm289, %v159, 0
  %v603 = vsel %vm289, %v160, 0
  %v606 = vsel %vm289, %v161, 0
  %v609 = vsel %vm289, %v162, 0
  %v612 = vsel %vm289, %v163, 0
  %v615 = vsel %vm289, %v164, 0
  %v618 = vsel %vm289, %v165, 0
  %v621 = vsel %vm289, %v166, 0
  %v624 = vsel %vm289, %v167, 0
  %v627 = vsel %vm289, %v168, 0
  %v630 = vsel %vm289, %v169, 0
  %v633 = vsel %vm289, %v170, 0
  %v636 = vsel %vm289, %v171, 0
  %v639 = vsel %vm289, %v172, 0
  %v642 = vsel %vm289, %v173, 0
  %v645 = vsel %vm289, %v174, 0
  %v648 = vsel %vm289, %v175, 0
  %v651 = vsel %vm289, %v176, 0
  %v654 = vsel %vm289, %v177, 0
  %v657 = vsel %vm289, %v178, 0
  %v660 = vsel %vm289, %v179, 0
  %v663 = vsel %vm289, %v180, 0
  %v666 = vsel %vm289, %v181, 0
  %v669 = vsel %vm289, %v182, 0
  %v672 = vsel %vm289, %v183, 0
  %v675 = vsel %vm289, %v184, 0
  %v678 = vsel %vm289, %v185, 0
  %v681 = vsel %vm289, %v186, 0
  %v684 = vsel %vm289, %v187, 0
  %v687 = vsel %vm289, %v188, 0
  %v690 = vsel %vm289, %v189, 0
  %v693 = vsel %vm289, %v190, 0
  %v696 = vsel %vm289, %v191, 0
  %v699 = vsel %vm289, %v192, 0
  %v702 = vsel %vm289, %v193, 0
  %v705 = vsel %vm289, %v194, 0
  %v708 = vsel %vm289, %v195, 0
  %v711 = vsel %vm289, %v196, 0
  %v714 = vsel %vm289, %v197, 0
  %v717 = vsel %vm289, %v198, 0
  %v720 = vsel %vm289, %v199, 0
  %v723 = vsel %vm289, %v200, 0
  %v726 = vsel %vm289, %v201, 0
  %v729 = vsel %vm289, %v202, 0
  %v732 = vsel %vm289, %v203, 0
  %v735 = vsel %vm289, %v204, 0
  %v738 = vsel %vm289, %v205, 0
  %v741 = vsel %vm289, %v206, 0
  %v744 = vsel %vm289, %v207, 0
  %v747 = vsel %vm289, %v208, 0
  %v750 = vsel %vm289, %v209, 0
  %v753 = vsel %vm289, %v210, 0
  %v756 = vsel %vm289, %v211, 0
  %v759 = vsel %vm289, %v212, 0
  %v762 = vsel %vm289, %v213, 0
  %v765 = vsel %vm289, %v214, 0
  %v768 = vsel %vm289, %v215, 0
  %v771 = vsel %vm289, %v216, 0
  %v774 = vsel %vm289, %v217, 0
  %v777 = vsel %vm289, %v218, 0
  %v780 = vsel %vm289, %v219, 0
  %v783 = vsel %vm289, %v220, 0
  %v786 = vsel %vm289, %v221, 0
  %v789 = vsel %vm289, %v222, 0
  %v792 = vsel %vm289, %v223, 0
  %v795 = vsel %vm289, %v224, 0
  %v798 = vsel %vm289, %v225, 0
  %v801 = vsel %vm289, %v226, 0
  %v804 = vsel %vm289, %v227, 0
  %v807 = vsel %vm289, %v228, 0
  %v810 = vsel %vm289, %v229, 0
  %v813 = vsel %vm289, %v230, 0
  %v816 = vsel %vm289, %v231, 0
  %v819 = vsel %vm289, %v232, 0
  %v822 = vsel %vm289, %v233, 0
  %v825 = vsel %vm289, %v234, 0
  %v828 = vsel %vm289, %v235, 0
  %v831 = vsel %vm289, %v236, 0
  %v834 = vsel %vm289, %v237, 0
  %v837 = vsel %vm289, %v238, 0
  %v840 = vsel %vm289, %v239, 0
  %v843 = vsel %vm289, %v240, 0
  %v846 = vsel %vm289, %v241, 0
  %v849 = vsel %vm289, %v242, 0
  %v852 = vsel %vm289, %v243, 0
  %v855 = vsel %vm289, %v244, 0
  %v858 = vsel %vm289, %v245, 0
  %v861 = vsel %vm289, %v246, 0
  %v864 = vsel %vm289, %v247, 0
  %v867 = vsel %vm289, %v248, 0
  %v870 = vsel %vm289, %v249, 0
  %v873 = vsel %vm289, %v250, 0
  %v876 = vsel %vm289, %v251, 0
  %v879 = vsel %vm289, %v252, 0
  %v882 = vsel %vm289, %v253, 0
  %v885 = vsel %vm289, %v254, 0
  %v888 = vsel %vm289, %v255, 0
  %v891 = vsel %vm289, %v256, 0
  %v894 = vsel %vm289, %v257, 0
  %v897 = vsel %vm289, %v258, 0
  %v900 = vsel %vm289, %v259, 0
  %v903 = vsel %vm289, %v260, 0
  %v906 = vsel %vm289, %v261, 0
  %v909 = vsel %vm289, %v262, 0
  %v912 = vsel %vm289, %v263, 0
  %v915 = vsel %vm289, %v264, 0
  %v918 = vsel %vm289, %v265, 0
  %v921 = vsel %vm289, %v266, 0
  %v924 = vsel %vm289, %v267, 0
  %v927 = vsel %vm289, %v268, 0
  %v930 = vsel %vm289, %v269, 0
  %v933 = vsel %vm289, %v270, 0
  %v936 = vsel %vm289, %v271, 0
  %v939 = vsel %vm289, %v272, 0
  %v942 = vsel %vm289, %v273, 0
  %v945 = vsel %vm289, %v274, 0
  %v948 = vsel %vm289, %v275, 0
  %v951 = vsel %vm289, %v276, 0
  %v954 = vsel %vm289, %v277, 0
  %v957 = vsel %vm289, %v278, 0
  %v960 = vsel %vm289, %v279, 0
  %v963 = vsel %vm289, %v280, 0
  %vm965 = vcmask 1043456
  %v967 = vsel %vm965, %v281, 0
  %969 = vmatprep.subr.mxu0 0.0
  %970 = vmatpush1.msra.mxu0 %v967
  %971 = vmatprep.subr.mxu0 0.0
  %972 = vmatpush1.msra.mxu0 0.0
  %973 = vmatprep.subr.mxu0 0.0
  %974 = vmatpush1.msra.mxu0 0.0
  %975 = vmatprep.subr.mxu0 0.0
  %976 = vmatpush1.msra.mxu0 0.0
  %977 = vmatprep.subr.mxu0 0.0
  %978 = vmatpush1.msra.mxu0 0.0
  %979 = vmatprep.subr.mxu0 0.0
  %980 = vmatpush1.msra.mxu0 0.0
  %981 = vmatprep.subr.mxu0 0.0
  %982 = vmatpush1.msra.mxu0 0.0
  %983 = vmatprep.subr.mxu0 0.0
  %984 = vmatpush1.msra.mxu0 0.0
  %985 = vmatprep.subr.mxu0 0.0
  %986 = vmatpush1.msra.mxu0 0.0
  %987 = vmatprep.subr.mxu0 0.0
  %988 = vmatpush1.msra.mxu0 0.0
  %989 = vmatprep.subr.mxu0 0.0
  %990 = vmatpush1.msra.mxu0 0.0
  %991 = vmatprep.subr.mxu0 0.0
  %992 = vmatpush1.msra.mxu0 0.0
  %993 = vmatprep.subr.mxu0 0.0
  %994 = vmatpush1.msra.mxu0 0.0
  %995 = vmatprep.subr.mxu0 0.0
  %996 = vmatpush1.msra.mxu0 0.0
  %997 = vmatprep.subr.mxu0 0.0
  %998 = vmatpush1.msra.mxu0 0.0
  %999 = vmatprep.subr.mxu0 0.0
  %1000 = vmatpush1.msra.mxu0 0.0
  %1001 = vmatprep.subr.mxu0 0.0
  %1002 = vmatpush1.msra.mxu0 0.0
  %1003 = vmatprep.subr.mxu0 0.0
  %1004 = vmatpush1.msra.mxu0 0.0
  %1005 = vmatprep.subr.mxu0 0.0
  %1006 = vmatpush1.msra.mxu0 0.0
  %1007 = vmatprep.subr.mxu0 0.0
  %1008 = vmatpush1.msra.mxu0 0.0
  %1009 = vmatprep.subr.mxu0 0.0
  %1010 = vmatpush1.msra.mxu0 0.0
  %1011 = vmatprep.subr.mxu0 0.0
  %1012 = vmatpush1.msra.mxu0 0.0
  %1013 = vmatprep.subr.mxu0 0.0
  %1014 = vmatpush1.msra.mxu0 0.0
  %1015 = vmatprep.subr.mxu0 0.0
  %1016 = vmatpush1.msra.mxu0 0.0
  %1017 = vmatprep.subr.mxu0 0.0
  %1018 = vmatpush1.msra.mxu0 0.0
  %1019 = vmatprep.subr.mxu0 0.0
  %1020 = vmatpush1.msra.mxu0 0.0
  %1021 = vmatprep.subr.mxu0 0.0
  %1022 = vmatpush1.msra.mxu0 0.0
  %1023 = vmatprep.subr.mxu0 0.0
  %1024 = vmatpush1.msra.mxu0 0.0
  %1025 = vmatprep.subr.mxu0 0.0
  %1026 = vmatpush1.msra.mxu0 0.0
  %1027 = vmatprep.subr.mxu0 0.0
  %1028 = vmatpush1.msra.mxu0 0.0
  %1029 = vmatprep.subr.mxu0 0.0
  %1030 = vmatpush1.msra.mxu0 0.0
  %1031 = vmatprep.subr.mxu0 0.0
  %1032 = vmatpush1.msra.mxu0 0.0
  %1033 = vmatprep.mubr.f32.mxu0 0.0
  %1034 = vmatmul.mubr.f32.gmra.mrb[0].mxu0 %v291
  %v1035 = vpop.f32.mrb[0].mxu0
  %v1036 = vadd.f32 %v287, %v1035
  %v1037 = vpop.f32.mrb[0].mxu0
  %1038 = vmatprep.mubr.f32.mxu0 0.0
  %1039 = vmatmul.mubr.f32.gmra.mrb[0].mxu0 %v294
  %v1040 = vpop.f32.mrb[0].mxu0
  %v1041 = vadd.f32 %v287, %v1040
  %v1042 = vpop.f32.mrb[0].mxu0
  %1043 = vmatprep.mubr.f32.mxu0 0.0
  %1044 = vmatmul.mubr.f32.gmra.mrb[0].mxu0 %v297
  %v1045 = vpop.f32.mrb[0].mxu0
  %v1046 = vadd.f32 %v287, %v1045
  %v1047 = vpop.f32.mrb[0].mxu0
  %1048 = vmatprep.mubr.f32.mxu0 0.0
  %1049 = vmatmul.mubr.f32.gmra.mrb[0].mxu0 %v300
  %v1050 = vpop.f32.mrb[0].mxu0
  %v1051 = vadd.f32 %v287, %v1050
  %v1052 = vpop.f32.mrb[0].mxu0
  %1053 = vmatprep.mubr.f32.mxu0 0.0
  %1054 = vmatmul.mubr.f32.gmra.mrb[0].mxu0 %v303
  %v1055 = vpop.f32.mrb[0].mxu0
  %v1056 = vadd.f32 %v287, %v1055
  %v1057 = vpop.f32.mrb[0].mxu0
  %1058 = vmatprep.mubr.f32.mxu0 0.0
  %1059 = vmatmul.mubr.f32.gmra.mrb[0].mxu0 %v306
  %v1060 = vpop.f32.mrb[0].mxu0
  %v1061 = vadd.f32 %v287, %v1060
  %v1062 = vpop.f32.mrb[0].mxu0
  %1063 = vmatprep.mubr.f32.mxu0 0.0
  %1064 = vmatmul.mubr.f32.gmra.mrb[0].mxu0 %v309
  %v1065 = vpop.f32.mrb[0].mxu0
  %v1066 = vadd.f32 %v287, %v1065
  %v1067 = vpop.f32.mrb[0].mxu0
  %1068 = vmatprep.mubr.f32.mxu0 0.0
  %1069 = vmatmul.mubr.f32.gmra.mrb[0].mxu0 %v312
  %v1070 = vpop.f32.mrb[0].mxu0
  %v1071 = vadd.f32 %v287, %v1070
  %v1072 = vpop.f32.mrb[0].mxu0
  %1073 = vmatprep.mubr.f32.mxu0 0.0
  %1074 = vmatmul.mubr.f32.gmra.mrb[0].mxu0 %v315
  %v1075 = vpop.f32.mrb[0].mxu0
  %v1076 = vadd.f32 %v287, %v1075
  %v1077 = vpop.f32.mrb[0].mxu0
  %1078 = vmatprep.mubr.f32.mxu0 0.0
  %1079 = vmatmul.mubr.f32.gmra.mrb[0].mxu0 %v318
  %v1080 = vpop.f32.mrb[0].mxu0
  %v1081 = vadd.f32 %v287, %v1080
  %v1082 = vpop.f32.mrb[0].mxu0
  %1083 = vmatprep.mubr.f32.mxu0 0.0
  %1084 = vmatmul.mubr.f32.gmra.mrb[0].mxu0 %v321
  %v1085 = vpop.f32.mrb[0].mxu0
  %v1086 = vadd.f32 %v287, %v1085
  %v1087 = vpop.f32.mrb[0].mxu0
  %1088 = vmatprep.mubr.f32.mxu0 0.0
  %1089 = vmatmul.mubr.f32.gmra.mrb[0].mxu0 %v324
  %v1090 = vpop.f32.mrb[0].mxu0
  %v1091 = vadd.f32 %v287, %v1090
  %v1092 = vpop.f32.mrb[0].mxu0
  %1093 = vmatprep.mubr.f32.mxu0 0.0
  %1094 = vmatmul.mubr.f32.gmra.mrb[0].mxu0 %v327
  %v1095 = vpop.f32.mrb[0].mxu0
  %v1096 = vadd.f32 %v287, %v1095
  %v1097 = vpop.f32.mrb[0].mxu0
  %1098 = vmatprep.mubr.f32.mxu0 0.0
  %1099 = vmatmul.mubr.f32.gmra.mrb[0].mxu0 %v330
  %v1100 = vpop.f32.mrb[0].mxu0
  %v1101 = vadd.f32 %v287, %v1100
  %v1102 = vpop.f32.mrb[0].mxu0
  %1103 = vmatprep.mubr.f32.mxu0 0.0
  %1104 = vmatmul.mubr.f32.gmra.mrb[0].mxu0 %v333
  %v1105 = vpop.f32.mrb[0].mxu0
  %v1106 = vpop.f32.mrb[0].mxu0
  %1107 = vmatprep.mubr.f32.mxu0 0.0
  %1108 = vmatmul.mubr.f32.gmra.mrb[0].mxu0 %v336
  %v1109 = vpop.f32.mrb[0].mxu0
  %v1110 = vadd.f32 %v287, %v1109
  %v1111 = vpop.f32.mrb[0].mxu0
  %1112 = vmatprep.mubr.f32.mxu0 0.0
  %1113 = vmatmul.mubr.f32.gmra.mrb[0].mxu0 %v339
  %v1114 = vpop.f32.mrb[0].mxu0
  %v1115 = vadd.f32 %v287, %v1114
  %v1116 = vpop.f32.mrb[0].mxu0
  %1117 = vmatprep.mubr.f32.mxu0 0.0
  %1118 = vmatmul.mubr.f32.gmra.mrb[0].mxu0 %v342
  %v1119 = vpop.f32.mrb[0].mxu0
  %v1120 = vadd.f32 %v287, %v1119
  %v1121 = vpop.f32.mrb[0].mxu0
  %1122 = vmatprep.mubr.f32.mxu0 0.0
  %1123 = vmatmul.mubr.f32.gmra.mrb[0].mxu0 %v345
  %v1124 = vpop.f32.mrb[0].mxu0
  %v1125 = vadd.f32 %v287, %v1124
  %v1126 = vpop.f32.mrb[0].mxu0
  %1127 = vmatprep.mubr.f32.mxu0 0.0
  %1128 = vmatmul.mubr.f32.gmra.mrb[0].mxu0 %v348
  %v1129 = vpop.f32.mrb[0].mxu0
  %v1130 = vadd.f32 %v287, %v1129
  %v1131 = vpop.f32.mrb[0].mxu0
  %1132 = vmatprep.mubr.f32.mxu0 0.0
  %1133 = vmatmul.mubr.f32.gmra.mrb[0].mxu0 %v351
  %v1134 = vpop.f32.mrb[0].mxu0
  %v1135 = vadd.f32 %v287, %v1134
  %v1136 = vpop.f32.mrb[0].mxu0
  %1137 = vmatprep.mubr.f32.mxu0 0.0
  %1138 = vmatmul.mubr.f32.gmra.mrb[0].mxu0 %v354
  %v1139 = vpop.f32.mrb[0].mxu0
  %v1140 = vadd.f32 %v287, %v1139
  %v1141 = vpop.f32.mrb[0].mxu0
  %1142 = vmatprep.mubr.f32.mxu0 0.0
  %1143 = vmatmul.mubr.f32.gmra.mrb[0].mxu0 %v357
  %v1144 = vpop.f32.mrb[0].mxu0
  %v1145 = vadd.f32 %v287, %v1144
  %v1146 = vpop.f32.mrb[0].mxu0
  %1147 = vmatprep.mubr.f32.mxu0 0.0
  %1148 = vmatmul.mubr.f32.gmra.mrb[0].mxu0 %v360
  %v1149 = vpop.f32.mrb[0].mxu0
  %v1150 = vadd.f32 %v287, %v1149
  %v1151 = vpop.f32.mrb[0].mxu0
  %1152 = vmatprep.mubr.f32.mxu0 0.0
  %1153 = vmatmul.mubr.f32.gmra.mrb[0].mxu0 %v363
  %v1154 = vpop.f32.mrb[0].mxu0
  %v1155 = vadd.f32 %v287, %v1154
  %v1156 = vpop.f32.mrb[0].mxu0
  %1157 = vmatprep.mubr.f32.mxu0 0.0
  %1158 = vmatmul.mubr.f32.gmra.mrb[0].mxu0 %v366
  %v1159 = vpop.f32.mrb[0].mxu0
  %v1160 = vadd.f32 %v287, %v1159
  %v1161 = vpop.f32.mrb[0].mxu0
  %1162 = vmatprep.mubr.f32.mxu0 0.0
  %1163 = vmatmul.mubr.f32.gmra.mrb[0].mxu0 %v369
  %v1164 = vpop.f32.mrb[0].mxu0
  %v1165 = vadd.f32 %v287, %v1164
  %v1166 = vpop.f32.mrb[0].mxu0
  %1167 = vmatprep.mubr.f32.mxu0 0.0
  %1168 = vmatmul.mubr.f32.gmra.mrb[0].mxu0 %v372
  %v1169 = vpop.f32.mrb[0].mxu0
  %v1170 = vadd.f32 %v287, %v1169
  %v1171 = vpop.f32.mrb[0].mxu0
  %1172 = vmatprep.mubr.f32.mxu0 0.0
  %1173 = vmatmul.mubr.f32.gmra.mrb[0].mxu0 %v375
  %v1174 = vpop.f32.mrb[0].mxu0
  %v1175 = vadd.f32 %v287, %v1174
  %v1176 = vpop.f32.mrb[0].mxu0
  %1177 = vmatprep.mubr.f32.mxu0 0.0
  %1178 = vmatmul.mubr.f32.gmra.mrb[0].mxu0 %v378
  %v1179 = vpop.f32.mrb[0].mxu0
  %v1180 = vpop.f32.mrb[0].mxu0
  %1181 = vmatprep.mubr.f32.mxu0 0.0
  %1182 = vmatmul.mubr.f32.gmra.mrb[0].mxu0 %v381
  %v1183 = vpop.f32.mrb[0].mxu0
  %v1184 = vadd.f32 %v287, %v1183
  %v1185 = vpop.f32.mrb[0].mxu0
  %1186 = vmatprep.mubr.f32.mxu0 0.0
  %1187 = vmatmul.mubr.f32.gmra.mrb[0].mxu0 %v384
  %v1188 = vpop.f32.mrb[0].mxu0
  %v1189 = vadd.f32 %v287, %v1188
  %v1190 = vpop.f32.mrb[0].mxu0
  %1191 = vmatprep.mubr.f32.mxu0 0.0
  %1192 = vmatmul.mubr.f32.gmra.mrb[0].mxu0 %v387
  %v1193 = vpop.f32.mrb[0].mxu0
  %v1194 = vadd.f32 %v287, %v1193
  %v1195 = vpop.f32.mrb[0].mxu0
  %1196 = vmatprep.mubr.f32.mxu0 0.0
  %1197 = vmatmul.mubr.f32.gmra.mrb[0].mxu0 %v390
  %v1198 = vpop.f32.mrb[0].mxu0
  %v1199 = vadd.f32 %v287, %v1198
  %v1200 = vpop.f32.mrb[0].mxu0
  %1201 = vmatprep.mubr.f32.mxu0 0.0
  %1202 = vmatmul.mubr.f32.gmra.mrb[0].mxu0 %v393
  %v1203 = vpop.f32.mrb[0].mxu0
  %v1204 = vadd.f32 %v287, %v1203
  %v1205 = vpop.f32.mrb[0].mxu0
  %1206 = vmatprep.mubr.f32.mxu0 0.0
  %1207 = vmatmul.mubr.f32.gmra.mrb[0].mxu0 %v396
  %v1208 = vpop.f32.mrb[0].mxu0
  %v1209 = vadd.f32 %v287, %v1208
  %v1210 = vpop.f32.mrb[0].mxu0
  %1211 = vmatprep.mubr.f32.mxu0 0.0
  %1212 = vmatmul.mubr.f32.gmra.mrb[0].mxu0 %v399
  %v1213 = vpop.f32.mrb[0].mxu0
  %v1214 = vadd.f32 %v287, %v1213
  %v1215 = vpop.f32.mrb[0].mxu0
  %1216 = vmatprep.mubr.f32.mxu0 0.0
  %1217 = vmatmul.mubr.f32.gmra.mrb[0].mxu0 %v402
  %v1218 = vpop.f32.mrb[0].mxu0
  %v1219 = vadd.f32 %v287, %v1218
  %v1220 = vpop.f32.mrb[0].mxu0
  %1221 = vmatprep.mubr.f32.mxu0 0.0
  %1222 = vmatmul.mubr.f32.gmra.mrb[0].mxu0 %v405
  %v1223 = vpop.f32.mrb[0].mxu0
  %v1224 = vadd.f32 %v287, %v1223
  %v1225 = vpop.f32.mrb[0].mxu0
  %1226 = vmatprep.mubr.f32.mxu0 0.0
  %1227 = vmatmul.mubr.f32.gmra.mrb[0].mxu0 %v408
  %v1228 = vpop.f32.mrb[0].mxu0
  %v1229 = vadd.f32 %v287, %v1228
  %v1230 = vpop.f32.mrb[0].mxu0
  %1231 = vmatprep.mubr.f32.mxu0 0.0
  %1232 = vmatmul.mubr.f32.gmra.mrb[0].mxu0 %v411
  %v1233 = vpop.f32.mrb[0].mxu0
  %v1234 = vadd.f32 %v287, %v1233
  %v1235 = vpop.f32.mrb[0].mxu0
  %1236 = vmatprep.mubr.f32.mxu0 0.0
  %1237 = vmatmul.mubr.f32.gmra.mrb[0].mxu0 %v414
  %v1238 = vpop.f32.mrb[0].mxu0
  %v1239 = vadd.f32 %v287, %v1238
  %v1240 = vpop.f32.mrb[0].mxu0
  %1241 = vmatprep.mubr.f32.mxu0 0.0
  %1242 = vmatmul.mubr.f32.gmra.mrb[0].mxu0 %v417
  %v1243 = vpop.f32.mrb[0].mxu0
  %v1244 = vadd.f32 %v287, %v1243
  %v1245 = vpop.f32.mrb[0].mxu0
  %1246 = vmatprep.mubr.f32.mxu0 0.0
  %1247 = vmatmul.mubr.f32.gmra.mrb[0].mxu0 %v420
  %v1248 = vpop.f32.mrb[0].mxu0
  %v1249 = vadd.f32 %v287, %v1248
  %v1250 = vpop.f32.mrb[0].mxu0
  %1251 = vmatprep.mubr.f32.mxu0 0.0
  %1252 = vmatmul.mubr.f32.gmra.mrb[0].mxu0 %v423
  %v1253 = vpop.f32.mrb[0].mxu0
  %v1254 = vpop.f32.mrb[0].mxu0
  %1255 = vmatprep.mubr.f32.mxu0 0.0
  %1256 = vmatmul.mubr.f32.gmra.mrb[0].mxu0 %v426
  %v1257 = vpop.f32.mrb[0].mxu0
  %v1258 = vadd.f32 %v287, %v1257
  %v1259 = vpop.f32.mrb[0].mxu0
  %1260 = vmatprep.mubr.f32.mxu0 0.0
  %1261 = vmatmul.mubr.f32.gmra.mrb[0].mxu0 %v429
  %v1262 = vpop.f32.mrb[0].mxu0
  %v1263 = vadd.f32 %v287, %v1262
  %v1264 = vpop.f32.mrb[0].mxu0
  %1265 = vmatprep.mubr.f32.mxu0 0.0
  %1266 = vmatmul.mubr.f32.gmra.mrb[0].mxu0 %v432
  %v1267 = vpop.f32.mrb[0].mxu0
  %v1268 = vadd.f32 %v287, %v1267
  %v1269 = vpop.f32.mrb[0].mxu0
  %1270 = vmatprep.mubr.f32.mxu0 0.0
  %1271 = vmatmul.mubr.f32.gmra.mrb[0].mxu0 %v435
  %v1272 = vpop.f32.mrb[0].mxu0
  %v1273 = vadd.f32 %v287, %v1272
  %v1274 = vpop.f32.mrb[0].mxu0
  %1275 = vmatprep.mubr.f32.mxu0 0.0
  %1276 = vmatmul.mubr.f32.gmra.mrb[0].mxu0 %v438
  %v1277 = vpop.f32.mrb[0].mxu0
  %v1278 = vadd.f32 %v287, %v1277
  %v1279 = vpop.f32.mrb[0].mxu0
  %1280 = vmatprep.mubr.f32.mxu0 0.0
  %1281 = vmatmul.mubr.f32.gmra.mrb[0].mxu0 %v441
  %v1282 = vpop.f32.mrb[0].mxu0
  %v1283 = vadd.f32 %v287, %v1282
  %v1284 = vpop.f32.mrb[0].mxu0
  %1285 = vmatprep.mubr.f32.mxu0 0.0
  %1286 = vmatmul.mubr.f32.gmra.mrb[0].mxu0 %v444
  %v1287 = vpop.f32.mrb[0].mxu0
  %v1288 = vadd.f32 %v287, %v1287
  %v1289 = vpop.f32.mrb[0].mxu0
  %1290 = vmatprep.mubr.f32.mxu0 0.0
  %1291 = vmatmul.mubr.f32.gmra.mrb[0].mxu0 %v447
  %v1292 = vpop.f32.mrb[0].mxu0
  %v1293 = vadd.f32 %v287, %v1292
  %v1294 = vpop.f32.mrb[0].mxu0
  %1295 = vmatprep.mubr.f32.mxu0 0.0
  %1296 = vmatmul.mubr.f32.gmra.mrb[0].mxu0 %v450
  %v1297 = vpop.f32.mrb[0].mxu0
  %v1298 = vadd.f32 %v287, %v1297
  %v1299 = vpop.f32.mrb[0].mxu0
  %1300 = vmatprep.mubr.f32.mxu0 0.0
  %1301 = vmatmul.mubr.f32.gmra.mrb[0].mxu0 %v453
  %v1302 = vpop.f32.mrb[0].mxu0
  %v1303 = vadd.f32 %v287, %v1302
  %v1304 = vpop.f32.mrb[0].mxu0
  %1305 = vmatprep.mubr.f32.mxu0 0.0
  %1306 = vmatmul.mubr.f32.gmra.mrb[0].mxu0 %v456
  %v1307 = vpop.f32.mrb[0].mxu0
  %v1308 = vadd.f32 %v287, %v1307
  %v1309 = vpop.f32.mrb[0].mxu0
  %1310 = vmatprep.mubr.f32.mxu0 0.0
  %1311 = vmatmul.mubr.f32.gmra.mrb[0].mxu0 %v459
  %v1312 = vpop.f32.mrb[0].mxu0
  %v1313 = vadd.f32 %v287, %v1312
  %v1314 = vpop.f32.mrb[0].mxu0
  %1315 = vmatprep.mubr.f32.mxu0 0.0
  %1316 = vmatmul.mubr.f32.gmra.mrb[0].mxu0 %v462
  %v1317 = vpop.f32.mrb[0].mxu0
  %v1318 = vadd.f32 %v287, %v1317
  %v1319 = vpop.f32.mrb[0].mxu0
  %1320 = vmatprep.mubr.f32.mxu0 0.0
  %1321 = vmatmul.mubr.f32.gmra.mrb[0].mxu0 %v465
  %v1322 = vpop.f32.mrb[0].mxu0
  %v1323 = vadd.f32 %v287, %v1322
  %v1324 = vpop.f32.mrb[0].mxu0
  %1325 = vmatprep.mubr.f32.mxu0 0.0
  %1326 = vmatmul.mubr.f32.gmra.mrb[0].mxu0 %v468
  %v1327 = vpop.f32.mrb[0].mxu0
  %v1328 = vpop.f32.mrb[0].mxu0
  %1329 = vmatprep.mubr.f32.mxu0 0.0
  %1330 = vmatmul.mubr.f32.gmra.mrb[0].mxu0 %v471
  %v1331 = vpop.f32.mrb[0].mxu0
  %v1332 = vadd.f32 %v287, %v1331
  %v1333 = vpop.f32.mrb[0].mxu0
  %1334 = vmatprep.mubr.f32.mxu0 0.0
  %1335 = vmatmul.mubr.f32.gmra.mrb[0].mxu0 %v474
  %v1336 = vpop.f32.mrb[0].mxu0
  %v1337 = vadd.f32 %v287, %v1336
  %v1338 = vpop.f32.mrb[0].mxu0
  %1339 = vmatprep.mubr.f32.mxu0 0.0
  %1340 = vmatmul.mubr.f32.gmra.mrb[0].mxu0 %v477
  %v1341 = vpop.f32.mrb[0].mxu0
  %v1342 = vadd.f32 %v287, %v1341
  %v1343 = vpop.f32.mrb[0].mxu0
  %1344 = vmatprep.mubr.f32.mxu0 0.0
  %1345 = vmatmul.mubr.f32.gmra.mrb[0].mxu0 %v480
  %v1346 = vpop.f32.mrb[0].mxu0
  %v1347 = vadd.f32 %v287, %v1346
  %v1348 = vpop.f32.mrb[0].mxu0
  %1349 = vmatprep.mubr.f32.mxu0 0.0
  %1350 = vmatmul.mubr.f32.gmra.mrb[0].mxu0 %v483
  %v1351 = vpop.f32.mrb[0].mxu0
  %v1352 = vadd.f32 %v287, %v1351
  %v1353 = vpop.f32.mrb[0].mxu0
  %1354 = vmatprep.mubr.f32.mxu0 0.0
  %1355 = vmatmul.mubr.f32.gmra.mrb[0].mxu0 %v486
  %v1356 = vpop.f32.mrb[0].mxu0
  %v1357 = vadd.f32 %v287, %v1356
  %v1358 = vpop.f32.mrb[0].mxu0
  %1359 = vmatprep.mubr.f32.mxu0 0.0
  %1360 = vmatmul.mubr.f32.gmra.mrb[0].mxu0 %v489
  %v1361 = vpop.f32.mrb[0].mxu0
  %v1362 = vadd.f32 %v287, %v1361
  %v1363 = vpop.f32.mrb[0].mxu0
  %1364 = vmatprep.mubr.f32.mxu0 0.0
  %1365 = vmatmul.mubr.f32.gmra.mrb[0].mxu0 %v492
  %v1366 = vpop.f32.mrb[0].mxu0
  %v1367 = vadd.f32 %v287, %v1366
  %v1368 = vpop.f32.mrb[0].mxu0
  %1369 = vmatprep.mubr.f32.mxu0 0.0
  %1370 = vmatmul.mubr.f32.gmra.mrb[0].mxu0 %v495
  %v1371 = vpop.f32.mrb[0].mxu0
  %v1372 = vadd.f32 %v287, %v1371
  %v1373 = vpop.f32.mrb[0].mxu0
  %1374 = vmatprep.mubr.f32.mxu0 0.0
  %1375 = vmatmul.mubr.f32.gmra.mrb[0].mxu0 %v498
  %v1376 = vpop.f32.mrb[0].mxu0
  %v1377 = vadd.f32 %v287, %v1376
  %v1378 = vpop.f32.mrb[0].mxu0
  %1379 = vmatprep.mubr.f32.mxu0 0.0
  %1380 = vmatmul.mubr.f32.gmra.mrb[0].mxu0 %v501
  %v1381 = vpop.f32.mrb[0].mxu0
  %v1382 = vadd.f32 %v287, %v1381
  %v1383 = vpop.f32.mrb[0].mxu0
  %1384 = vmatprep.mubr.f32.mxu0 0.0
  %1385 = vmatmul.mubr.f32.gmra.mrb[0].mxu0 %v504
  %v1386 = vpop.f32.mrb[0].mxu0
  %v1387 = vadd.f32 %v287, %v1386
  %v1388 = vpop.f32.mrb[0].mxu0
  %1389 = vmatprep.mubr.f32.mxu0 0.0
  %1390 = vmatmul.mubr.f32.gmra.mrb[0].mxu0 %v507
  %v1391 = vpop.f32.mrb[0].mxu0
  %v1392 = vadd.f32 %v287, %v1391
  %v1393 = vpop.f32.mrb[0].mxu0
  %1394 = vmatprep.mubr.f32.mxu0 0.0
  %1395 = vmatmul.mubr.f32.gmra.mrb[0].mxu0 %v510
  %v1396 = vpop.f32.mrb[0].mxu0
  %v1397 = vadd.f32 %v287, %v1396
  %v1398 = vpop.f32.mrb[0].mxu0
  %1399 = vmatprep.mubr.f32.mxu0 0.0
  %1400 = vmatmul.mubr.f32.gmra.mrb[0].mxu0 %v513
  %v1401 = vpop.f32.mrb[0].mxu0
  %v1402 = vpop.f32.mrb[0].mxu0
  %1403 = vmatprep.mubr.f32.mxu0 0.0
  %1404 = vmatmul.mubr.f32.gmra.mrb[0].mxu0 %v516
  %v1405 = vpop.f32.mrb[0].mxu0
  %v1406 = vadd.f32 %v287, %v1405
  %v1407 = vpop.f32.mrb[0].mxu0
  %1408 = vmatprep.mubr.f32.mxu0 0.0
  %1409 = vmatmul.mubr.f32.gmra.mrb[0].mxu0 %v519
  %v1410 = vpop.f32.mrb[0].mxu0
  %v1411 = vadd.f32 %v287, %v1410
  %v1412 = vpop.f32.mrb[0].mxu0
  %1413 = vmatprep.mubr.f32.mxu0 0.0
  %1414 = vmatmul.mubr.f32.gmra.mrb[0].mxu0 %v522
  %v1415 = vpop.f32.mrb[0].mxu0
  %v1416 = vadd.f32 %v287, %v1415
  %v1417 = vpop.f32.mrb[0].mxu0
  %1418 = vmatprep.mubr.f32.mxu0 0.0
  %1419 = vmatmul.mubr.f32.gmra.mrb[0].mxu0 %v525
  %v1420 = vpop.f32.mrb[0].mxu0
  %v1421 = vadd.f32 %v287, %v1420
  %v1422 = vpop.f32.mrb[0].mxu0
  %1423 = vmatprep.mubr.f32.mxu0 0.0
  %1424 = vmatmul.mubr.f32.gmra.mrb[0].mxu0 %v528
  %v1425 = vpop.f32.mrb[0].mxu0
  %v1426 = vadd.f32 %v287, %v1425
  %v1427 = vpop.f32.mrb[0].mxu0
  %1428 = vmatprep.mubr.f32.mxu0 0.0
  %1429 = vmatmul.mubr.f32.gmra.mrb[0].mxu0 %v531
  %v1430 = vpop.f32.mrb[0].mxu0
  %v1431 = vadd.f32 %v287, %v1430
  %v1432 = vpop.f32.mrb[0].mxu0
  %1433 = vmatprep.mubr.f32.mxu0 0.0
  %1434 = vmatmul.mubr.f32.gmra.mrb[0].mxu0 %v534
  %v1435 = vpop.f32.mrb[0].mxu0
  %v1436 = vadd.f32 %v287, %v1435
  %v1437 = vpop.f32.mrb[0].mxu0
  %1438 = vmatprep.mubr.f32.mxu0 0.0
  %1439 = vmatmul.mubr.f32.gmra.mrb[0].mxu0 %v537
  %v1440 = vpop.f32.mrb[0].mxu0
  %v1441 = vadd.f32 %v287, %v1440
  %v1442 = vpop.f32.mrb[0].mxu0
  %1443 = vmatprep.mubr.f32.mxu0 0.0
  %1444 = vmatmul.mubr.f32.gmra.mrb[0].mxu0 %v540
  %v1445 = vpop.f32.mrb[0].mxu0
  %v1446 = vadd.f32 %v287, %v1445
  %v1447 = vpop.f32.mrb[0].mxu0
  %1448 = vmatprep.mubr.f32.mxu0 0.0
  %1449 = vmatmul.mubr.f32.gmra.mrb[0].mxu0 %v543
  %v1450 = vpop.f32.mrb[0].mxu0
  %v1451 = vadd.f32 %v287, %v1450
  %v1452 = vpop.f32.mrb[0].mxu0
  %1453 = vmatprep.mubr.f32.mxu0 0.0
  %1454 = vmatmul.mubr.f32.gmra.mrb[0].mxu0 %v546
  %v1455 = vpop.f32.mrb[0].mxu0
  %v1456 = vadd.f32 %v287, %v1455
  %v1457 = vpop.f32.mrb[0].mxu0
  %1458 = vmatprep.mubr.f32.mxu0 0.0
  %1459 = vmatmul.mubr.f32.gmra.mrb[0].mxu0 %v549
  %v1460 = vpop.f32.mrb[0].mxu0
  %v1461 = vadd.f32 %v287, %v1460
  %v1462 = vpop.f32.mrb[0].mxu0
  %1463 = vmatprep.mubr.f32.mxu0 0.0
  %1464 = vmatmul.mubr.f32.gmra.mrb[0].mxu0 %v552
  %v1465 = vpop.f32.mrb[0].mxu0
  %v1466 = vadd.f32 %v287, %v1465
  %v1467 = vpop.f32.mrb[0].mxu0
  %1468 = vmatprep.mubr.f32.mxu0 0.0
  %1469 = vmatmul.mubr.f32.gmra.mrb[0].mxu0 %v555
  %v1470 = vpop.f32.mrb[0].mxu0
  %v1471 = vadd.f32 %v287, %v1470
  %v1472 = vpop.f32.mrb[0].mxu0
  %1473 = vmatprep.mubr.f32.mxu0 0.0
  %1474 = vmatmul.mubr.f32.gmra.mrb[0].mxu0 %v558
  %v1475 = vpop.f32.mrb[0].mxu0
  %v1476 = vpop.f32.mrb[0].mxu0
  %1477 = vmatprep.mubr.f32.mxu0 0.0
  %1478 = vmatmul.mubr.f32.gmra.mrb[0].mxu0 %v561
  %v1479 = vpop.f32.mrb[0].mxu0
  %v1480 = vadd.f32 %v287, %v1479
  %v1481 = vpop.f32.mrb[0].mxu0
  %1482 = vmatprep.mubr.f32.mxu0 0.0
  %1483 = vmatmul.mubr.f32.gmra.mrb[0].mxu0 %v564
  %v1484 = vpop.f32.mrb[0].mxu0
  %v1485 = vadd.f32 %v287, %v1484
  %v1486 = vpop.f32.mrb[0].mxu0
  %1487 = vmatprep.mubr.f32.mxu0 0.0
  %1488 = vmatmul.mubr.f32.gmra.mrb[0].mxu0 %v567
  %v1489 = vpop.f32.mrb[0].mxu0
  %v1490 = vadd.f32 %v287, %v1489
  %v1491 = vpop.f32.mrb[0].mxu0
  %1492 = vmatprep.mubr.f32.mxu0 0.0
  %1493 = vmatmul.mubr.f32.gmra.mrb[0].mxu0 %v570
  %v1494 = vpop.f32.mrb[0].mxu0
  %v1495 = vadd.f32 %v287, %v1494
  %v1496 = vpop.f32.mrb[0].mxu0
  %1497 = vmatprep.mubr.f32.mxu0 0.0
  %1498 = vmatmul.mubr.f32.gmra.mrb[0].mxu0 %v573
  %v1499 = vpop.f32.mrb[0].mxu0
  %v1500 = vadd.f32 %v287, %v1499
  %v1501 = vpop.f32.mrb[0].mxu0
  %1502 = vmatprep.mubr.f32.mxu0 0.0
  %1503 = vmatmul.mubr.f32.gmra.mrb[0].mxu0 %v576
  %v1504 = vpop.f32.mrb[0].mxu0
  %v1505 = vadd.f32 %v287, %v1504
  %v1506 = vpop.f32.mrb[0].mxu0
  %1507 = vmatprep.mubr.f32.mxu0 0.0
  %1508 = vmatmul.mubr.f32.gmra.mrb[0].mxu0 %v579
  %v1509 = vpop.f32.mrb[0].mxu0
  %v1510 = vadd.f32 %v287, %v1509
  %v1511 = vpop.f32.mrb[0].mxu0
  %1512 = vmatprep.mubr.f32.mxu0 0.0
  %1513 = vmatmul.mubr.f32.gmra.mrb[0].mxu0 %v582
  %v1514 = vpop.f32.mrb[0].mxu0
  %v1515 = vadd.f32 %v287, %v1514
  %v1516 = vpop.f32.mrb[0].mxu0
  %1517 = vmatprep.mubr.f32.mxu0 0.0
  %1518 = vmatmul.mubr.f32.gmra.mrb[0].mxu0 %v585
  %v1519 = vpop.f32.mrb[0].mxu0
  %v1520 = vadd.f32 %v287, %v1519
  %v1521 = vpop.f32.mrb[0].mxu0
  %1522 = vmatprep.mubr.f32.mxu0 0.0
  %1523 = vmatmul.mubr.f32.gmra.mrb[0].mxu0 %v588
  %v1524 = vpop.f32.mrb[0].mxu0
  %v1525 = vadd.f32 %v287, %v1524
  %v1526 = vpop.f32.mrb[0].mxu0
  %1527 = vmatprep.mubr.f32.mxu0 0.0
  %1528 = vmatmul.mubr.f32.gmra.mrb[0].mxu0 %v591
  %v1529 = vpop.f32.mrb[0].mxu0
  %v1530 = vadd.f32 %v287, %v1529
  %v1531 = vpop.f32.mrb[0].mxu0
  %1532 = vmatprep.mubr.f32.mxu0 0.0
  %1533 = vmatmul.mubr.f32.gmra.mrb[0].mxu0 %v594
  %v1534 = vpop.f32.mrb[0].mxu0
  %v1535 = vadd.f32 %v287, %v1534
  %v1536 = vpop.f32.mrb[0].mxu0
  %1537 = vmatprep.mubr.f32.mxu0 0.0
  %1538 = vmatmul.mubr.f32.gmra.mrb[0].mxu0 %v597
  %v1539 = vpop.f32.mrb[0].mxu0
  %v1540 = vadd.f32 %v287, %v1539
  %v1541 = vpop.f32.mrb[0].mxu0
  %1542 = vmatprep.mubr.f32.mxu0 0.0
  %1543 = vmatmul.mubr.f32.gmra.mrb[0].mxu0 %v600
  %v1544 = vpop.f32.mrb[0].mxu0
  %v1545 = vadd.f32 %v287, %v1544
  %v1546 = vpop.f32.mrb[0].mxu0
  %1547 = vmatprep.mubr.f32.mxu0 0.0
  %1548 = vmatmul.mubr.f32.gmra.mrb[0].mxu0 %v603
  %v1549 = vpop.f32.mrb[0].mxu0
  %v1550 = vpop.f32.mrb[0].mxu0
  %1551 = vmatprep.mubr.f32.mxu0 0.0
  %1552 = vmatmul.mubr.f32.gmra.mrb[0].mxu0 %v606
  %v1553 = vpop.f32.mrb[0].mxu0
  %v1554 = vadd.f32 %v287, %v1553
  %v1555 = vpop.f32.mrb[0].mxu0
  %1556 = vmatprep.mubr.f32.mxu0 0.0
  %1557 = vmatmul.mubr.f32.gmra.mrb[0].mxu0 %v609
  %v1558 = vpop.f32.mrb[0].mxu0
  %v1559 = vadd.f32 %v287, %v1558
  %v1560 = vpop.f32.mrb[0].mxu0
  %1561 = vmatprep.mubr.f32.mxu0 0.0
  %1562 = vmatmul.mubr.f32.gmra.mrb[0].mxu0 %v612
  %v1563 = vpop.f32.mrb[0].mxu0
  %v1564 = vadd.f32 %v287, %v1563
  %v1565 = vpop.f32.mrb[0].mxu0
  %1566 = vmatprep.mubr.f32.mxu0 0.0
  %1567 = vmatmul.mubr.f32.gmra.mrb[0].mxu0 %v615
  %v1568 = vpop.f32.mrb[0].mxu0
  %v1569 = vadd.f32 %v287, %v1568
  %v1570 = vpop.f32.mrb[0].mxu0
  %1571 = vmatprep.mubr.f32.mxu0 0.0
  %1572 = vmatmul.mubr.f32.gmra.mrb[0].mxu0 %v618
  %v1573 = vpop.f32.mrb[0].mxu0
  %v1574 = vadd.f32 %v287, %v1573
  %v1575 = vpop.f32.mrb[0].mxu0
  %1576 = vmatprep.mubr.f32.mxu0 0.0
  %1577 = vmatmul.mubr.f32.gmra.mrb[0].mxu0 %v621
  %v1578 = vpop.f32.mrb[0].mxu0
  %v1579 = vadd.f32 %v287, %v1578
  %v1580 = vpop.f32.mrb[0].mxu0
  %1581 = vmatprep.mubr.f32.mxu0 0.0
  %1582 = vmatmul.mubr.f32.gmra.mrb[0].mxu0 %v624
  %v1583 = vpop.f32.mrb[0].mxu0
  %v1584 = vadd.f32 %v287, %v1583
  %v1585 = vpop.f32.mrb[0].mxu0
  %1586 = vmatprep.mubr.f32.mxu0 0.0
  %1587 = vmatmul.mubr.f32.gmra.mrb[0].mxu0 %v627
  %v1588 = vpop.f32.mrb[0].mxu0
  %v1589 = vadd.f32 %v287, %v1588
  %v1590 = vpop.f32.mrb[0].mxu0
  %1591 = vmatprep.mubr.f32.mxu0 0.0
  %1592 = vmatmul.mubr.f32.gmra.mrb[0].mxu0 %v630
  %v1593 = vpop.f32.mrb[0].mxu0
  %v1594 = vadd.f32 %v287, %v1593
  %v1595 = vpop.f32.mrb[0].mxu0
  %1596 = vmatprep.mubr.f32.mxu0 0.0
  %1597 = vmatmul.mubr.f32.gmra.mrb[0].mxu0 %v633
  %v1598 = vpop.f32.mrb[0].mxu0
  %v1599 = vadd.f32 %v287, %v1598
  %v1600 = vpop.f32.mrb[0].mxu0
  %1601 = vmatprep.mubr.f32.mxu0 0.0
  %1602 = vmatmul.mubr.f32.gmra.mrb[0].mxu0 %v636
  %v1603 = vpop.f32.mrb[0].mxu0
  %v1604 = vadd.f32 %v287, %v1603
  %v1605 = vpop.f32.mrb[0].mxu0
  %1606 = vmatprep.mubr.f32.mxu0 0.0
  %1607 = vmatmul.mubr.f32.gmra.mrb[0].mxu0 %v639
  %v1608 = vpop.f32.mrb[0].mxu0
  %v1609 = vadd.f32 %v287, %v1608
  %v1610 = vpop.f32.mrb[0].mxu0
  %1611 = vmatprep.mubr.f32.mxu0 0.0
  %1612 = vmatmul.mubr.f32.gmra.mrb[0].mxu0 %v642
  %v1613 = vpop.f32.mrb[0].mxu0
  %v1614 = vadd.f32 %v287, %v1613
  %v1615 = vpop.f32.mrb[0].mxu0
  %1616 = vmatprep.mubr.f32.mxu0 0.0
  %1617 = vmatmul.mubr.f32.gmra.mrb[0].mxu0 %v645
  %v1618 = vpop.f32.mrb[0].mxu0
  %v1619 = vadd.f32 %v287, %v1618
  %v1620 = vpop.f32.mrb[0].mxu0
  %1621 = vmatprep.mubr.f32.mxu0 0.0
  %1622 = vmatmul.mubr.f32.gmra.mrb[0].mxu0 %v648
  %v1623 = vpop.f32.mrb[0].mxu0
  %v1624 = vpop.f32.mrb[0].mxu0
  %1625 = vmatprep.mubr.f32.mxu0 0.0
  %1626 = vmatmul.mubr.f32.gmra.mrb[0].mxu0 %v651
  %v1627 = vpop.f32.mrb[0].mxu0
  %v1628 = vadd.f32 %v287, %v1627
  %v1629 = vpop.f32.mrb[0].mxu0
  %1630 = vmatprep.mubr.f32.mxu0 0.0
  %1631 = vmatmul.mubr.f32.gmra.mrb[0].mxu0 %v654
  %v1632 = vpop.f32.mrb[0].mxu0
  %v1633 = vadd.f32 %v287, %v1632
  %v1634 = vpop.f32.mrb[0].mxu0
  %1635 = vmatprep.mubr.f32.mxu0 0.0
  %1636 = vmatmul.mubr.f32.gmra.mrb[0].mxu0 %v657
  %v1637 = vpop.f32.mrb[0].mxu0
  %v1638 = vadd.f32 %v287, %v1637
  %v1639 = vpop.f32.mrb[0].mxu0
  %1640 = vmatprep.mubr.f32.mxu0 0.0
  %1641 = vmatmul.mubr.f32.gmra.mrb[0].mxu0 %v660
  %v1642 = vpop.f32.mrb[0].mxu0
  %v1643 = vadd.f32 %v287, %v1642
  %v1644 = vpop.f32.mrb[0].mxu0
  %1645 = vmatprep.mubr.f32.mxu0 0.0
  %1646 = vmatmul.mubr.f32.gmra.mrb[0].mxu0 %v663
  %v1647 = vpop.f32.mrb[0].mxu0
  %v1648 = vadd.f32 %v287, %v1647
  %v1649 = vpop.f32.mrb[0].mxu0
  %1650 = vmatprep.mubr.f32.mxu0 0.0
  %1651 = vmatmul.mubr.f32.gmra.mrb[0].mxu0 %v666
  %v1652 = vpop.f32.mrb[0].mxu0
  %v1653 = vadd.f32 %v287, %v1652
  %v1654 = vpop.f32.mrb[0].mxu0
  %1655 = vmatprep.mubr.f32.mxu0 0.0
  %1656 = vmatmul.mubr.f32.gmra.mrb[0].mxu0 %v669
  %v1657 = vpop.f32.mrb[0].mxu0
  %v1658 = vadd.f32 %v287, %v1657
  %v1659 = vpop.f32.mrb[0].mxu0
  %1660 = vmatprep.mubr.f32.mxu0 0.0
  %1661 = vmatmul.mubr.f32.gmra.mrb[0].mxu0 %v672
  %v1662 = vpop.f32.mrb[0].mxu0
  %v1663 = vadd.f32 %v287, %v1662
  %v1664 = vpop.f32.mrb[0].mxu0
  %1665 = vmatprep.mubr.f32.mxu0 0.0
  %1666 = vmatmul.mubr.f32.gmra.mrb[0].mxu0 %v675
  %v1667 = vpop.f32.mrb[0].mxu0
  %v1668 = vadd.f32 %v287, %v1667
  %v1669 = vpop.f32.mrb[0].mxu0
  %1670 = vmatprep.mubr.f32.mxu0 0.0
  %1671 = vmatmul.mubr.f32.gmra.mrb[0].mxu0 %v678
  %v1672 = vpop.f32.mrb[0].mxu0
  %v1673 = vadd.f32 %v287, %v1672
  %v1674 = vpop.f32.mrb[0].mxu0
  %1675 = vmatprep.mubr.f32.mxu0 0.0
  %1676 = vmatmul.mubr.f32.gmra.mrb[0].mxu0 %v681
  %v1677 = vpop.f32.mrb[0].mxu0
  %v1678 = vadd.f32 %v287, %v1677
  %v1679 = vpop.f32.mrb[0].mxu0
  %1680 = vmatprep.mubr.f32.mxu0 0.0
  %1681 = vmatmul.mubr.f32.gmra.mrb[0].mxu0 %v684
  %v1682 = vpop.f32.mrb[0].mxu0
  %v1683 = vadd.f32 %v287, %v1682
  %v1684 = vpop.f32.mrb[0].mxu0
  %1685 = vmatprep.mubr.f32.mxu0 0.0
  %1686 = vmatmul.mubr.f32.gmra.mrb[0].mxu0 %v687
  %v1687 = vpop.f32.mrb[0].mxu0
  %v1688 = vadd.f32 %v287, %v1687
  %v1689 = vpop.f32.mrb[0].mxu0
  %1690 = vmatprep.mubr.f32.mxu0 0.0
  %1691 = vmatmul.mubr.f32.gmra.mrb[0].mxu0 %v690
  %v1692 = vpop.f32.mrb[0].mxu0
  %v1693 = vadd.f32 %v287, %v1692
  %v1694 = vpop.f32.mrb[0].mxu0
  %1695 = vmatprep.mubr.f32.mxu0 0.0
  %1696 = vmatmul.mubr.f32.gmra.mrb[0].mxu0 %v693
  %v1697 = vpop.f32.mrb[0].mxu0
  %v1698 = vpop.f32.mrb[0].mxu0
  %1699 = vmatprep.mubr.f32.mxu0 0.0
  %1700 = vmatmul.mubr.f32.gmra.mrb[0].mxu0 %v696
  %v1701 = vpop.f32.mrb[0].mxu0
  %v1702 = vadd.f32 %v287, %v1701
  %v1703 = vpop.f32.mrb[0].mxu0
  %1704 = vmatprep.mubr.f32.mxu0 0.0
  %1705 = vmatmul.mubr.f32.gmra.mrb[0].mxu0 %v699
  %v1706 = vpop.f32.mrb[0].mxu0
  %v1707 = vadd.f32 %v287, %v1706
  %v1708 = vpop.f32.mrb[0].mxu0
  %1709 = vmatprep.mubr.f32.mxu0 0.0
  %1710 = vmatmul.mubr.f32.gmra.mrb[0].mxu0 %v702
  %v1711 = vpop.f32.mrb[0].mxu0
  %v1712 = vadd.f32 %v287, %v1711
  %v1713 = vpop.f32.mrb[0].mxu0
  %1714 = vmatprep.mubr.f32.mxu0 0.0
  %1715 = vmatmul.mubr.f32.gmra.mrb[0].mxu0 %v705
  %v1716 = vpop.f32.mrb[0].mxu0
  %v1717 = vadd.f32 %v287, %v1716
  %v1718 = vpop.f32.mrb[0].mxu0
  %1719 = vmatprep.mubr.f32.mxu0 0.0
  %1720 = vmatmul.mubr.f32.gmra.mrb[0].mxu0 %v708
  %v1721 = vpop.f32.mrb[0].mxu0
  %v1722 = vadd.f32 %v287, %v1721
  %v1723 = vpop.f32.mrb[0].mxu0
  %1724 = vmatprep.mubr.f32.mxu0 0.0
  %1725 = vmatmul.mubr.f32.gmra.mrb[0].mxu0 %v711
  %v1726 = vpop.f32.mrb[0].mxu0
  %v1727 = vadd.f32 %v287, %v1726
  %v1728 = vpop.f32.mrb[0].mxu0
  %1729 = vmatprep.mubr.f32.mxu0 0.0
  %1730 = vmatmul.mubr.f32.gmra.mrb[0].mxu0 %v714
  %v1731 = vpop.f32.mrb[0].mxu0
  %v1732 = vadd.f32 %v287, %v1731
  %v1733 = vpop.f32.mrb[0].mxu0
  %1734 = vmatprep.mubr.f32.mxu0 0.0
  %1735 = vmatmul.mubr.f32.gmra.mrb[0].mxu0 %v717
  %v1736 = vpop.f32.mrb[0].mxu0
  %v1737 = vadd.f32 %v287, %v1736
  %v1738 = vpop.f32.mrb[0].mxu0
  %1739 = vmatprep.mubr.f32.mxu0 0.0
  %1740 = vmatmul.mubr.f32.gmra.mrb[0].mxu0 %v720
  %v1741 = vpop.f32.mrb[0].mxu0
  %v1742 = vadd.f32 %v287, %v1741
  %v1743 = vpop.f32.mrb[0].mxu0
  %1744 = vmatprep.mubr.f32.mxu0 0.0
  %1745 = vmatmul.mubr.f32.gmra.mrb[0].mxu0 %v723
  %v1746 = vpop.f32.mrb[0].mxu0
  %v1747 = vadd.f32 %v287, %v1746
  %v1748 = vpop.f32.mrb[0].mxu0
  %1749 = vmatprep.mubr.f32.mxu0 0.0
  %1750 = vmatmul.mubr.f32.gmra.mrb[0].mxu0 %v726
  %v1751 = vpop.f32.mrb[0].mxu0
  %v1752 = vadd.f32 %v287, %v1751
  %v1753 = vpop.f32.mrb[0].mxu0
  %1754 = vmatprep.mubr.f32.mxu0 0.0
  %1755 = vmatmul.mubr.f32.gmra.mrb[0].mxu0 %v729
  %v1756 = vpop.f32.mrb[0].mxu0
  %v1757 = vadd.f32 %v287, %v1756
  %v1758 = vpop.f32.mrb[0].mxu0
  %1759 = vmatprep.mubr.f32.mxu0 0.0
  %1760 = vmatmul.mubr.f32.gmra.mrb[0].mxu0 %v732
  %v1761 = vpop.f32.mrb[0].mxu0
  %v1762 = vadd.f32 %v287, %v1761
  %v1763 = vpop.f32.mrb[0].mxu0
  %1764 = vmatprep.mubr.f32.mxu0 0.0
  %1765 = vmatmul.mubr.f32.gmra.mrb[0].mxu0 %v735
  %v1766 = vpop.f32.mrb[0].mxu0
  %v1767 = vadd.f32 %v287, %v1766
  %v1768 = vpop.f32.mrb[0].mxu0
  %1769 = vmatprep.mubr.f32.mxu0 0.0
  %1770 = vmatmul.mubr.f32.gmra.mrb[0].mxu0 %v738
  %v1771 = vpop.f32.mrb[0].mxu0
  %v1772 = vpop.f32.mrb[0].mxu0
  %1773 = vmatprep.mubr.f32.mxu0 0.0
  %1774 = vmatmul.mubr.f32.gmra.mrb[0].mxu0 %v741
  %v1775 = vpop.f32.mrb[0].mxu0
  %v1776 = vadd.f32 %v287, %v1775
  %v1777 = vpop.f32.mrb[0].mxu0
  %1778 = vmatprep.mubr.f32.mxu0 0.0
  %1779 = vmatmul.mubr.f32.gmra.mrb[0].mxu0 %v744
  %v1780 = vpop.f32.mrb[0].mxu0
  %v1781 = vadd.f32 %v287, %v1780
  %v1782 = vpop.f32.mrb[0].mxu0
  %1783 = vmatprep.mubr.f32.mxu0 0.0
  %1784 = vmatmul.mubr.f32.gmra.mrb[0].mxu0 %v747
  %v1785 = vpop.f32.mrb[0].mxu0
  %v1786 = vadd.f32 %v287, %v1785
  %v1787 = vpop.f32.mrb[0].mxu0
  %1788 = vmatprep.mubr.f32.mxu0 0.0
  %1789 = vmatmul.mubr.f32.gmra.mrb[0].mxu0 %v750
  %v1790 = vpop.f32.mrb[0].mxu0
  %v1791 = vadd.f32 %v287, %v1790
  %v1792 = vpop.f32.mrb[0].mxu0
  %1793 = vmatprep.mubr.f32.mxu0 0.0
  %1794 = vmatmul.mubr.f32.gmra.mrb[0].mxu0 %v753
  %v1795 = vpop.f32.mrb[0].mxu0
  %v1796 = vadd.f32 %v287, %v1795
  %v1797 = vpop.f32.mrb[0].mxu0
  %1798 = vmatprep.mubr.f32.mxu0 0.0
  %1799 = vmatmul.mubr.f32.gmra.mrb[0].mxu0 %v756
  %v1800 = vpop.f32.mrb[0].mxu0
  %v1801 = vadd.f32 %v287, %v1800
  %v1802 = vpop.f32.mrb[0].mxu0
  %1803 = vmatprep.mubr.f32.mxu0 0.0
  %1804 = vmatmul.mubr.f32.gmra.mrb[0].mxu0 %v759
  %v1805 = vpop.f32.mrb[0].mxu0
  %v1806 = vadd.f32 %v287, %v1805
  %v1807 = vpop.f32.mrb[0].mxu0
  %1808 = vmatprep.mubr.f32.mxu0 0.0
  %1809 = vmatmul.mubr.f32.gmra.mrb[0].mxu0 %v762
  %v1810 = vpop.f32.mrb[0].mxu0
  %v1811 = vadd.f32 %v287, %v1810
  %v1812 = vpop.f32.mrb[0].mxu0
  %1813 = vmatprep.mubr.f32.mxu0 0.0
  %1814 = vmatmul.mubr.f32.gmra.mrb[0].mxu0 %v765
  %v1815 = vpop.f32.mrb[0].mxu0
  %v1816 = vadd.f32 %v287, %v1815
  %v1817 = vpop.f32.mrb[0].mxu0
  %1818 = vmatprep.mubr.f32.mxu0 0.0
  %1819 = vmatmul.mubr.f32.gmra.mrb[0].mxu0 %v768
  %v1820 = vpop.f32.mrb[0].mxu0
  %v1821 = vadd.f32 %v287, %v1820
  %v1822 = vpop.f32.mrb[0].mxu0
  %1823 = vmatprep.mubr.f32.mxu0 0.0
  %1824 = vmatmul.mubr.f32.gmra.mrb[0].mxu0 %v771
  %v1825 = vpop.f32.mrb[0].mxu0
  %v1826 = vadd.f32 %v287, %v1825
  %v1827 = vpop.f32.mrb[0].mxu0
  %1828 = vmatprep.mubr.f32.mxu0 0.0
  %1829 = vmatmul.mubr.f32.gmra.mrb[0].mxu0 %v774
  %v1830 = vpop.f32.mrb[0].mxu0
  %v1831 = vadd.f32 %v287, %v1830
  %v1832 = vpop.f32.mrb[0].mxu0
  %1833 = vmatprep.mubr.f32.mxu0 0.0
  %1834 = vmatmul.mubr.f32.gmra.mrb[0].mxu0 %v777
  %v1835 = vpop.f32.mrb[0].mxu0
  %v1836 = vadd.f32 %v287, %v1835
  %v1837 = vpop.f32.mrb[0].mxu0
  %1838 = vmatprep.mubr.f32.mxu0 0.0
  %1839 = vmatmul.mubr.f32.gmra.mrb[0].mxu0 %v780
  %v1840 = vpop.f32.mrb[0].mxu0
  %v1841 = vadd.f32 %v287, %v1840
  %v1842 = vpop.f32.mrb[0].mxu0
  %1843 = vmatprep.mubr.f32.mxu0 0.0
  %1844 = vmatmul.mubr.f32.gmra.mrb[0].mxu0 %v783
  %v1845 = vpop.f32.mrb[0].mxu0
  %v1846 = vpop.f32.mrb[0].mxu0
  %1847 = vmatprep.mubr.f32.mxu0 0.0
  %1848 = vmatmul.mubr.f32.gmra.mrb[0].mxu0 %v786
  %v1849 = vpop.f32.mrb[0].mxu0
  %v1850 = vadd.f32 %v287, %v1849
  %v1851 = vpop.f32.mrb[0].mxu0
  %1852 = vmatprep.mubr.f32.mxu0 0.0
  %1853 = vmatmul.mubr.f32.gmra.mrb[0].mxu0 %v789
  %v1854 = vpop.f32.mrb[0].mxu0
  %v1855 = vadd.f32 %v287, %v1854
  %v1856 = vpop.f32.mrb[0].mxu0
  %1857 = vmatprep.mubr.f32.mxu0 0.0
  %1858 = vmatmul.mubr.f32.gmra.mrb[0].mxu0 %v792
  %v1859 = vpop.f32.mrb[0].mxu0
  %v1860 = vadd.f32 %v287, %v1859
  %v1861 = vpop.f32.mrb[0].mxu0
  %1862 = vmatprep.mubr.f32.mxu0 0.0
  %1863 = vmatmul.mubr.f32.gmra.mrb[0].mxu0 %v795
  %v1864 = vpop.f32.mrb[0].mxu0
  %v1865 = vadd.f32 %v287, %v1864
  %v1866 = vpop.f32.mrb[0].mxu0
  %1867 = vmatprep.mubr.f32.mxu0 0.0
  %1868 = vmatmul.mubr.f32.gmra.mrb[0].mxu0 %v798
  %v1869 = vpop.f32.mrb[0].mxu0
  %v1870 = vadd.f32 %v287, %v1869
  %v1871 = vpop.f32.mrb[0].mxu0
  %1872 = vmatprep.mubr.f32.mxu0 0.0
  %1873 = vmatmul.mubr.f32.gmra.mrb[0].mxu0 %v801
  %v1874 = vpop.f32.mrb[0].mxu0
  %v1875 = vadd.f32 %v287, %v1874
  %v1876 = vpop.f32.mrb[0].mxu0
  %1877 = vmatprep.mubr.f32.mxu0 0.0
  %1878 = vmatmul.mubr.f32.gmra.mrb[0].mxu0 %v804
  %v1879 = vpop.f32.mrb[0].mxu0
  %v1880 = vadd.f32 %v287, %v1879
  %v1881 = vpop.f32.mrb[0].mxu0
  %1882 = vmatprep.mubr.f32.mxu0 0.0
  %1883 = vmatmul.mubr.f32.gmra.mrb[0].mxu0 %v807
  %v1884 = vpop.f32.mrb[0].mxu0
  %v1885 = vadd.f32 %v287, %v1884
  %v1886 = vpop.f32.mrb[0].mxu0
  %1887 = vmatprep.mubr.f32.mxu0 0.0
  %1888 = vmatmul.mubr.f32.gmra.mrb[0].mxu0 %v810
  %v1889 = vpop.f32.mrb[0].mxu0
  %v1890 = vadd.f32 %v287, %v1889
  %v1891 = vpop.f32.mrb[0].mxu0
  %1892 = vmatprep.mubr.f32.mxu0 0.0
  %1893 = vmatmul.mubr.f32.gmra.mrb[0].mxu0 %v813
  %v1894 = vpop.f32.mrb[0].mxu0
  %v1895 = vadd.f32 %v287, %v1894
  %v1896 = vpop.f32.mrb[0].mxu0
  %1897 = vmatprep.mubr.f32.mxu0 0.0
  %1898 = vmatmul.mubr.f32.gmra.mrb[0].mxu0 %v816
  %v1899 = vpop.f32.mrb[0].mxu0
  %v1900 = vadd.f32 %v287, %v1899
  %v1901 = vpop.f32.mrb[0].mxu0
  %1902 = vmatprep.mubr.f32.mxu0 0.0
  %1903 = vmatmul.mubr.f32.gmra.mrb[0].mxu0 %v819
  %v1904 = vpop.f32.mrb[0].mxu0
  %v1905 = vadd.f32 %v287, %v1904
  %v1906 = vpop.f32.mrb[0].mxu0
  %1907 = vmatprep.mubr.f32.mxu0 0.0
  %1908 = vmatmul.mubr.f32.gmra.mrb[0].mxu0 %v822
  %v1909 = vpop.f32.mrb[0].mxu0
  %v1910 = vadd.f32 %v287, %v1909
  %v1911 = vpop.f32.mrb[0].mxu0
  %1912 = vmatprep.mubr.f32.mxu0 0.0
  %1913 = vmatmul.mubr.f32.gmra.mrb[0].mxu0 %v825
  %v1914 = vpop.f32.mrb[0].mxu0
  %v1915 = vadd.f32 %v287, %v1914
  %v1916 = vpop.f32.mrb[0].mxu0
  %1917 = vmatprep.mubr.f32.mxu0 0.0
  %1918 = vmatmul.mubr.f32.gmra.mrb[0].mxu0 %v828
  %v1919 = vpop.f32.mrb[0].mxu0
  %v1920 = vpop.f32.mrb[0].mxu0
  %1921 = vmatprep.mubr.f32.mxu0 0.0
  %1922 = vmatmul.mubr.f32.gmra.mrb[0].mxu0 %v831
  %v1923 = vpop.f32.mrb[0].mxu0
  %v1924 = vadd.f32 %v287, %v1923
  %v1925 = vpop.f32.mrb[0].mxu0
  %1926 = vmatprep.mubr.f32.mxu0 0.0
  %1927 = vmatmul.mubr.f32.gmra.mrb[0].mxu0 %v834
  %v1928 = vpop.f32.mrb[0].mxu0
  %v1929 = vadd.f32 %v287, %v1928
  %v1930 = vpop.f32.mrb[0].mxu0
  %1931 = vmatprep.mubr.f32.mxu0 0.0
  %1932 = vmatmul.mubr.f32.gmra.mrb[0].mxu0 %v837
  %v1933 = vpop.f32.mrb[0].mxu0
  %v1934 = vadd.f32 %v287, %v1933
  %v1935 = vpop.f32.mrb[0].mxu0
  %1936 = vmatprep.mubr.f32.mxu0 0.0
  %1937 = vmatmul.mubr.f32.gmra.mrb[0].mxu0 %v840
  %v1938 = vpop.f32.mrb[0].mxu0
  %v1939 = vadd.f32 %v287, %v1938
  %v1940 = vpop.f32.mrb[0].mxu0
  %1941 = vmatprep.mubr.f32.mxu0 0.0
  %1942 = vmatmul.mubr.f32.gmra.mrb[0].mxu0 %v843
  %v1943 = vpop.f32.mrb[0].mxu0
  %v1944 = vadd.f32 %v287, %v1943
  %v1945 = vpop.f32.mrb[0].mxu0
  %1946 = vmatprep.mubr.f32.mxu0 0.0
  %1947 = vmatmul.mubr.f32.gmra.mrb[0].mxu0 %v846
  %v1948 = vpop.f32.mrb[0].mxu0
  %v1949 = vadd.f32 %v287, %v1948
  %v1950 = vpop.f32.mrb[0].mxu0
  %1951 = vmatprep.mubr.f32.mxu0 0.0
  %1952 = vmatmul.mubr.f32.gmra.mrb[0].mxu0 %v849
  %v1953 = vpop.f32.mrb[0].mxu0
  %v1954 = vadd.f32 %v287, %v1953
  %v1955 = vpop.f32.mrb[0].mxu0
  %1956 = vmatprep.mubr.f32.mxu0 0.0
  %1957 = vmatmul.mubr.f32.gmra.mrb[0].mxu0 %v852
  %v1958 = vpop.f32.mrb[0].mxu0
  %v1959 = vadd.f32 %v287, %v1958
  %v1960 = vpop.f32.mrb[0].mxu0
  %1961 = vmatprep.mubr.f32.mxu0 0.0
  %1962 = vmatmul.mubr.f32.gmra.mrb[0].mxu0 %v855
  %v1963 = vpop.f32.mrb[0].mxu0
  %v1964 = vadd.f32 %v287, %v1963
  %v1965 = vpop.f32.mrb[0].mxu0
  %1966 = vmatprep.mubr.f32.mxu0 0.0
  %1967 = vmatmul.mubr.f32.gmra.mrb[0].mxu0 %v858
  %v1968 = vpop.f32.mrb[0].mxu0
  %v1969 = vadd.f32 %v287, %v1968
  %v1970 = vpop.f32.mrb[0].mxu0
  %1971 = vmatprep.mubr.f32.mxu0 0.0
  %1972 = vmatmul.mubr.f32.gmra.mrb[0].mxu0 %v861
  %v1973 = vpop.f32.mrb[0].mxu0
  %v1974 = vadd.f32 %v287, %v1973
  %v1975 = vpop.f32.mrb[0].mxu0
  %1976 = vmatprep.mubr.f32.mxu0 0.0
  %1977 = vmatmul.mubr.f32.gmra.mrb[0].mxu0 %v864
  %v1978 = vpop.f32.mrb[0].mxu0
  %v1979 = vadd.f32 %v287, %v1978
  %v1980 = vpop.f32.mrb[0].mxu0
  %1981 = vmatprep.mubr.f32.mxu0 0.0
  %1982 = vmatmul.mubr.f32.gmra.mrb[0].mxu0 %v867
  %v1983 = vpop.f32.mrb[0].mxu0
  %v1984 = vadd.f32 %v287, %v1983
  %v1985 = vpop.f32.mrb[0].mxu0
  %1986 = vmatprep.mubr.f32.mxu0 0.0
  %1987 = vmatmul.mubr.f32.gmra.mrb[0].mxu0 %v870
  %v1988 = vpop.f32.mrb[0].mxu0
  %v1989 = vadd.f32 %v287, %v1988
  %v1990 = vpop.f32.mrb[0].mxu0
  %1991 = vmatprep.mubr.f32.mxu0 0.0
  %1992 = vmatmul.mubr.f32.gmra.mrb[0].mxu0 %v873
  %v1993 = vpop.f32.mrb[0].mxu0
  %v1994 = vpop.f32.mrb[0].mxu0
  %1995 = vmatprep.mubr.f32.mxu0 0.0
  %1996 = vmatmul.mubr.f32.gmra.mrb[0].mxu0 %v876
  %v1997 = vpop.f32.mrb[0].mxu0
  %v1998 = vadd.f32 %v287, %v1997
  %v1999 = vpop.f32.mrb[0].mxu0
  %2000 = vmatprep.mubr.f32.mxu0 0.0
  %2001 = vmatmul.mubr.f32.gmra.mrb[0].mxu0 %v879
  %v2002 = vpop.f32.mrb[0].mxu0
  %v2003 = vadd.f32 %v287, %v2002
  %v2004 = vpop.f32.mrb[0].mxu0
  %2005 = vmatprep.mubr.f32.mxu0 0.0
  %2006 = vmatmul.mubr.f32.gmra.mrb[0].mxu0 %v882
  %v2007 = vpop.f32.mrb[0].mxu0
  %v2008 = vadd.f32 %v287, %v2007
  %v2009 = vpop.f32.mrb[0].mxu0
  %2010 = vmatprep.mubr.f32.mxu0 0.0
  %2011 = vmatmul.mubr.f32.gmra.mrb[0].mxu0 %v885
  %v2012 = vpop.f32.mrb[0].mxu0
  %v2013 = vadd.f32 %v287, %v2012
  %v2014 = vpop.f32.mrb[0].mxu0
  %2015 = vmatprep.mubr.f32.mxu0 0.0
  %2016 = vmatmul.mubr.f32.gmra.mrb[0].mxu0 %v888
  %v2017 = vpop.f32.mrb[0].mxu0
  %v2018 = vadd.f32 %v287, %v2017
  %v2019 = vpop.f32.mrb[0].mxu0
  %2020 = vmatprep.mubr.f32.mxu0 0.0
  %2021 = vmatmul.mubr.f32.gmra.mrb[0].mxu0 %v891
  %v2022 = vpop.f32.mrb[0].mxu0
  %v2023 = vadd.f32 %v287, %v2022
  %v2024 = vpop.f32.mrb[0].mxu0
  %2025 = vmatprep.mubr.f32.mxu0 0.0
  %2026 = vmatmul.mubr.f32.gmra.mrb[0].mxu0 %v894
  %v2027 = vpop.f32.mrb[0].mxu0
  %v2028 = vadd.f32 %v287, %v2027
  %v2029 = vpop.f32.mrb[0].mxu0
  %2030 = vmatprep.mubr.f32.mxu0 0.0
  %2031 = vmatmul.mubr.f32.gmra.mrb[0].mxu0 %v897
  %v2032 = vpop.f32.mrb[0].mxu0
  %v2033 = vadd.f32 %v287, %v2032
  %v2034 = vpop.f32.mrb[0].mxu0
  %2035 = vmatprep.mubr.f32.mxu0 0.0
  %2036 = vmatmul.mubr.f32.gmra.mrb[0].mxu0 %v900
  %v2037 = vpop.f32.mrb[0].mxu0
  %v2038 = vadd.f32 %v287, %v2037
  %v2039 = vpop.f32.mrb[0].mxu0
  %2040 = vmatprep.mubr.f32.mxu0 0.0
  %2041 = vmatmul.mubr.f32.gmra.mrb[0].mxu0 %v903
  %v2042 = vpop.f32.mrb[0].mxu0
  %v2043 = vadd.f32 %v287, %v2042
  %v2044 = vpop.f32.mrb[0].mxu0
  %2045 = vmatprep.mubr.f32.mxu0 0.0
  %2046 = vmatmul.mubr.f32.gmra.mrb[0].mxu0 %v906
  %v2047 = vpop.f32.mrb[0].mxu0
  %v2048 = vadd.f32 %v287, %v2047
  %v2049 = vpop.f32.mrb[0].mxu0
  %2050 = vmatprep.mubr.f32.mxu0 0.0
  %2051 = vmatmul.mubr.f32.gmra.mrb[0].mxu0 %v909
  %v2052 = vpop.f32.mrb[0].mxu0
  %v2053 = vadd.f32 %v287, %v2052
  %v2054 = vpop.f32.mrb[0].mxu0
  %2055 = vmatprep.mubr.f32.mxu0 0.0
  %2056 = vmatmul.mubr.f32.gmra.mrb[0].mxu0 %v912
  %v2057 = vpop.f32.mrb[0].mxu0
  %v2058 = vadd.f32 %v287, %v2057
  %v2059 = vpop.f32.mrb[0].mxu0
  %2060 = vmatprep.mubr.f32.mxu0 0.0
  %2061 = vmatmul.mubr.f32.gmra.mrb[0].mxu0 %v915
  %v2062 = vpop.f32.mrb[0].mxu0
  %v2063 = vadd.f32 %v287, %v2062
  %v2064 = vpop.f32.mrb[0].mxu0
  %2065 = vmatprep.mubr.f32.mxu0 0.0
  %2066 = vmatmul.mubr.f32.gmra.mrb[0].mxu0 %v918
  %v2067 = vpop.f32.mrb[0].mxu0
  %v2068 = vpop.f32.mrb[0].mxu0
  %2069 = vmatprep.mubr.f32.mxu0 0.0
  %2070 = vmatmul.mubr.f32.gmra.mrb[0].mxu0 %v921
  %v2071 = vpop.f32.mrb[0].mxu0
  %v2072 = vpop.f32.mrb[0].mxu0
  %2073 = vmatprep.mubr.f32.mxu0 0.0
  %2074 = vmatmul.mubr.f32.gmra.mrb[0].mxu0 %v924
  %v2075 = vpop.f32.mrb[0].mxu0
  %v2076 = vpop.f32.mrb[0].mxu0
  %2077 = vmatprep.mubr.f32.mxu0 0.0
  %2078 = vmatmul.mubr.f32.gmra.mrb[0].mxu0 %v927
  %v2079 = vpop.f32.mrb[0].mxu0
  %v2080 = vpop.f32.mrb[0].mxu0
  %2081 = vmatprep.mubr.f32.mxu0 0.0
  %2082 = vmatmul.mubr.f32.gmra.mrb[0].mxu0 %v930
  %v2083 = vpop.f32.mrb[0].mxu0
  %v2084 = vpop.f32.mrb[0].mxu0
  %2085 = vmatprep.mubr.f32.mxu0 0.0
  %2086 = vmatmul.mubr.f32.gmra.mrb[0].mxu0 %v933
  %v2087 = vpop.f32.mrb[0].mxu0
  %v2088 = vpop.f32.mrb[0].mxu0
  %2089 = vmatprep.mubr.f32.mxu0 0.0
  %2090 = vmatmul.mubr.f32.gmra.mrb[0].mxu0 %v936
  %v2091 = vpop.f32.mrb[0].mxu0
  %v2092 = vpop.f32.mrb[0].mxu0
  %2093 = vmatprep.mubr.f32.mxu0 0.0
  %2094 = vmatmul.mubr.f32.gmra.mrb[0].mxu0 %v939
  %v2095 = vpop.f32.mrb[0].mxu0
  %v2096 = vpop.f32.mrb[0].mxu0
  %2097 = vmatprep.mubr.f32.mxu0 0.0
  %2098 = vmatmul.mubr.f32.gmra.mrb[0].mxu0 %v942
  %v2099 = vpop.f32.mrb[0].mxu0
  %v2100 = vpop.f32.mrb[0].mxu0
  %2101 = vmatprep.mubr.f32.mxu0 0.0
  %2102 = vmatmul.mubr.f32.gmra.mrb[0].mxu0 %v945
  %v2103 = vpop.f32.mrb[0].mxu0
  %v2104 = vpop.f32.mrb[0].mxu0
  %2105 = vmatprep.mubr.f32.mxu0 0.0
  %2106 = vmatmul.mubr.f32.gmra.mrb[0].mxu0 %v948
  %v2107 = vpop.f32.mrb[0].mxu0
  %v2108 = vpop.f32.mrb[0].mxu0
  %2109 = vmatprep.mubr.f32.mxu0 0.0
  %2110 = vmatmul.mubr.f32.gmra.mrb[0].mxu0 %v951
  %v2111 = vpop.f32.mrb[0].mxu0
  %v2112 = vpop.f32.mrb[0].mxu0
  %2113 = vmatprep.mubr.f32.mxu0 0.0
  %2114 = vmatmul.mubr.f32.gmra.mrb[0].mxu0 %v954
  %v2115 = vpop.f32.mrb[0].mxu0
  %v2116 = vpop.f32.mrb[0].mxu0
  %2117 = vmatprep.mubr.f32.mxu0 0.0
  %2118 = vmatmul.mubr.f32.gmra.mrb[0].mxu0 %v957
  %v2119 = vpop.f32.mrb[0].mxu0
  %v2120 = vpop.f32.mrb[0].mxu0
  %2121 = vmatprep.mubr.f32.mxu0 0.0
  %2122 = vmatmul.mubr.f32.gmra.mrb[0].mxu0 %v960
  %v2123 = vpop.f32.mrb[0].mxu0
  %v2124 = vpop.f32.mrb[0].mxu0
  %2125 = vmatprep.mubr.f32.mxu0 0.0
  %2126 = vmatmul.mubr.f32.gmra.mrb[0].mxu0 %v963
  %v2127 = vpop.f32.mrb[0].mxu0
  %v2128 = vpop.f32.mrb[0].mxu0
  %2129 = vdwg.mxu0
  %v2130 = vmax.f32 %v1036, 0.0
  %v2131 = vmax.f32 %v1041, 0.0
  %v2132 = vmax.f32 %v1046, 0.0
  %v2133 = vmax.f32 %v1051, 0.0
  %v2134 = vmax.f32 %v1056, 0.0
  %v2135 = vmax.f32 %v1061, 0.0
  %v2136 = vmax.f32 %v1066, 0.0
  %v2137 = vmax.f32 %v1071, 0.0
  %v2138 = vmax.f32 %v1076, 0.0
  %v2139 = vmax.f32 %v1081, 0.0
  %v2140 = vmax.f32 %v1086, 0.0
  %v2141 = vmax.f32 %v1091, 0.0
  %v2142 = vmax.f32 %v1096, 0.0
  %v2143 = vmax.f32 %v1101, 0.0
  %v2144 = vmax.f32 %v1110, 0.0
  %v2145 = vmax.f32 %v1115, 0.0
  %v2146 = vmax.f32 %v1120, 0.0
  %v2147 = vmax.f32 %v1125, 0.0
  %v2148 = vmax.f32 %v1130, 0.0
  %v2149 = vmax.f32 %v1135, 0.0
  %v2150 = vmax.f32 %v1140, 0.0
  %v2151 = vmax.f32 %v1145, 0.0
  %v2152 = vmax.f32 %v1150, 0.0
  %v2153 = vmax.f32 %v1155, 0.0
  %v2154 = vmax.f32 %v1160, 0.0
  %v2155 = vmax.f32 %v1165, 0.0
  %v2156 = vmax.f32 %v1170, 0.0
  %v2157 = vmax.f32 %v1175, 0.0
  %v2158 = vmax.f32 %v1184, 0.0
  %v2159 = vmax.f32 %v1189, 0.0
  %v2160 = vmax.f32 %v1194, 0.0
  %v2161 = vmax.f32 %v1199, 0.0
  %v2162 = vmax.f32 %v1204, 0.0
  %v2163 = vmax.f32 %v1209, 0.0
  %v2164 = vmax.f32 %v1214, 0.0
  %v2165 = vmax.f32 %v1219, 0.0
  %v2166 = vmax.f32 %v1224, 0.0
  %v2167 = vmax.f32 %v1229, 0.0
  %v2168 = vmax.f32 %v1234, 0.0
  %v2169 = vmax.f32 %v1239, 0.0
  %v2170 = vmax.f32 %v1244, 0.0
  %v2171 = vmax.f32 %v1249, 0.0
  %v2172 = vmax.f32 %v1258, 0.0
  %v2173 = vmax.f32 %v1263, 0.0
  %v2174 = vmax.f32 %v1268, 0.0
  %v2175 = vmax.f32 %v1273, 0.0
  %v2176 = vmax.f32 %v1278, 0.0
  %v2177 = vmax.f32 %v1283, 0.0
  %v2178 = vmax.f32 %v1288, 0.0
  %v2179 = vmax.f32 %v1293, 0.0
  %v2180 = vmax.f32 %v1298, 0.0
  %v2181 = vmax.f32 %v1303, 0.0
  %v2182 = vmax.f32 %v1308, 0.0
  %v2183 = vmax.f32 %v1313, 0.0
  %v2184 = vmax.f32 %v1318, 0.0
  %v2185 = vmax.f32 %v1323, 0.0
  %v2186 = vmax.f32 %v1332, 0.0
  %v2187 = vmax.f32 %v1337, 0.0
  %v2188 = vmax.f32 %v1342, 0.0
  %v2189 = vmax.f32 %v1347, 0.0
  %v2190 = vmax.f32 %v1352, 0.0
  %v2191 = vmax.f32 %v1357, 0.0
  %v2192 = vmax.f32 %v1362, 0.0
  %v2193 = vmax.f32 %v1367, 0.0
  %v2194 = vmax.f32 %v1372, 0.0
  %v2195 = vmax.f32 %v1377, 0.0
  %v2196 = vmax.f32 %v1382, 0.0
  %v2197 = vmax.f32 %v1387, 0.0
  %v2198 = vmax.f32 %v1392, 0.0
  %v2199 = vmax.f32 %v1397, 0.0
  %v2200 = vmax.f32 %v1406, 0.0
  %v2201 = vmax.f32 %v1411, 0.0
  %v2202 = vmax.f32 %v1416, 0.0
  %v2203 = vmax.f32 %v1421, 0.0
  %v2204 = vmax.f32 %v1426, 0.0
  %v2205 = vmax.f32 %v1431, 0.0
  %v2206 = vmax.f32 %v1436, 0.0
  %v2207 = vmax.f32 %v1441, 0.0
  %v2208 = vmax.f32 %v1446, 0.0
  %v2209 = vmax.f32 %v1451, 0.0
  %v2210 = vmax.f32 %v1456, 0.0
  %v2211 = vmax.f32 %v1461, 0.0
  %v2212 = vmax.f32 %v1466, 0.0
  %v2213 = vmax.f32 %v1471, 0.0
  %v2214 = vmax.f32 %v1480, 0.0
  %v2215 = vmax.f32 %v1485, 0.0
  %v2216 = vmax.f32 %v1490, 0.0
  %v2217 = vmax.f32 %v1495, 0.0
  %v2218 = vmax.f32 %v1500, 0.0
  %v2219 = vmax.f32 %v1505, 0.0
  %v2220 = vmax.f32 %v1510, 0.0
  %v2221 = vmax.f32 %v1515, 0.0
  %v2222 = vmax.f32 %v1520, 0.0
  %v2223 = vmax.f32 %v1525, 0.0
  %v2224 = vmax.f32 %v1530, 0.0
  %v2225 = vmax.f32 %v1535, 0.0
  %v2226 = vmax.f32 %v1540, 0.0
  %v2227 = vmax.f32 %v1545, 0.0
  %v2228 = vmax.f32 %v1554, 0.0
  %v2229 = vmax.f32 %v1559, 0.0
  %v2230 = vmax.f32 %v1564, 0.0
  %v2231 = vmax.f32 %v1569, 0.0
  %v2232 = vmax.f32 %v1574, 0.0
  %v2233 = vmax.f32 %v1579, 0.0
  %v2234 = vmax.f32 %v1584, 0.0
  %v2235 = vmax.f32 %v1589, 0.0
  %v2236 = vmax.f32 %v1594, 0.0
  %v2237 = vmax.f32 %v1599, 0.0
  %v2238 = vmax.f32 %v1604, 0.0
  %v2239 = vmax.f32 %v1609, 0.0
  %v2240 = vmax.f32 %v1614, 0.0
  %v2241 = vmax.f32 %v1619, 0.0
  %v2242 = vmax.f32 %v1628, 0.0
  %v2243 = vmax.f32 %v1633, 0.0
  %v2244 = vmax.f32 %v1638, 0.0
  %v2245 = vmax.f32 %v1643, 0.0
  %v2246 = vmax.f32 %v1648, 0.0
  %v2247 = vmax.f32 %v1653, 0.0
  %v2248 = vmax.f32 %v1658, 0.0
  %v2249 = vmax.f32 %v1663, 0.0
  %v2250 = vmax.f32 %v1668, 0.0
  %v2251 = vmax.f32 %v1673, 0.0
  %v2252 = vmax.f32 %v1678, 0.0
  %v2253 = vmax.f32 %v1683, 0.0
  %v2254 = vmax.f32 %v1688, 0.0
  %v2255 = vmax.f32 %v1693, 0.0
  %v2256 = vmax.f32 %v1702, 0.0
  %v2257 = vmax.f32 %v1707, 0.0
  %v2258 = vmax.f32 %v1712, 0.0
  %v2259 = vmax.f32 %v1717, 0.0
  %v2260 = vmax.f32 %v1722, 0.0
  %v2261 = vmax.f32 %v1727, 0.0
  %v2262 = vmax.f32 %v1732, 0.0
  %v2263 = vmax.f32 %v1737, 0.0
  %v2264 = vmax.f32 %v1742, 0.0
  %v2265 = vmax.f32 %v1747, 0.0
  %v2266 = vmax.f32 %v1752, 0.0
  %v2267 = vmax.f32 %v1757, 0.0
  %v2268 = vmax.f32 %v1762, 0.0
  %v2269 = vmax.f32 %v1767, 0.0
  %v2270 = vmax.f32 %v1776, 0.0
  %v2271 = vmax.f32 %v1781, 0.0
  %v2272 = vmax.f32 %v1786, 0.0
  %v2273 = vmax.f32 %v1791, 0.0
  %v2274 = vmax.f32 %v1796, 0.0
  %v2275 = vmax.f32 %v1801, 0.0
  %v2276 = vmax.f32 %v1806, 0.0
  %v2277 = vmax.f32 %v1811, 0.0
  %v2278 = vmax.f32 %v1816, 0.0
  %v2279 = vmax.f32 %v1821, 0.0
  %v2280 = vmax.f32 %v1826, 0.0
  %v2281 = vmax.f32 %v1831, 0.0
  %v2282 = vmax.f32 %v1836, 0.0
  %v2283 = vmax.f32 %v1841, 0.0
  %v2284 = vmax.f32 %v1850, 0.0
  %v2285 = vmax.f32 %v1855, 0.0
  %v2286 = vmax.f32 %v1860, 0.0
  %v2287 = vmax.f32 %v1865, 0.0
  %v2288 = vmax.f32 %v1870, 0.0
  %v2289 = vmax.f32 %v1875, 0.0
  %v2290 = vmax.f32 %v1880, 0.0
  %v2291 = vmax.f32 %v1885, 0.0
  %v2292 = vmax.f32 %v1890, 0.0
  %v2293 = vmax.f32 %v1895, 0.0
  %v2294 = vmax.f32 %v1900, 0.0
  %v2295 = vmax.f32 %v1905, 0.0
  %v2296 = vmax.f32 %v1910, 0.0
  %v2297 = vmax.f32 %v1915, 0.0
  %v2298 = vmax.f32 %v1924, 0.0
  %v2299 = vmax.f32 %v1929, 0.0
  %v2300 = vmax.f32 %v1934, 0.0
  %v2301 = vmax.f32 %v1939, 0.0
  %v2302 = vmax.f32 %v1944, 0.0
  %v2303 = vmax.f32 %v1949, 0.0
  %v2304 = vmax.f32 %v1954, 0.0
  %v2305 = vmax.f32 %v1959, 0.0
  %v2306 = vmax.f32 %v1964, 0.0
  %v2307 = vmax.f32 %v1969, 0.0
  %v2308 = vmax.f32 %v1974, 0.0
  %v2309 = vmax.f32 %v1979, 0.0
  %v2310 = vmax.f32 %v1984, 0.0
  %v2311 = vmax.f32 %v1989, 0.0
  %v2312 = vmax.f32 %v1998, 0.0
  %v2313 = vmax.f32 %v2003, 0.0
  %v2314 = vmax.f32 %v2008, 0.0
  %v2315 = vmax.f32 %v2013, 0.0
  %v2316 = vmax.f32 %v2018, 0.0
  %v2317 = vmax.f32 %v2023, 0.0
  %v2318 = vmax.f32 %v2028, 0.0
  %v2319 = vmax.f32 %v2033, 0.0
  %v2320 = vmax.f32 %v2038, 0.0
  %v2321 = vmax.f32 %v2043, 0.0
  %v2322 = vmax.f32 %v2048, 0.0
  %v2323 = vmax.f32 %v2053, 0.0
  %v2324 = vmax.f32 %v2058, 0.0
  %v2325 = vmax.f32 %v2063, 0.0
  %2375 = vrot.lane.b32.xlu0 %v2131, 16
  %v2376 = vpop.permute.xlu0 %2375
  %2377 = vrot.lane.b32.xlu0 %v2133, 16
  %v2378 = vpop.permute.xlu0 %2377
  %2379 = vrot.lane.b32.xlu0 %v2135, 16
  %v2380 = vpop.permute.xlu0 %2379
  %2381 = vrot.lane.b32.xlu0 %v2137, 16
  %v2382 = vpop.permute.xlu0 %2381
  %2383 = vrot.lane.b32.xlu0 %v2139, 16
  %v2384 = vpop.permute.xlu0 %2383
  %2385 = vrot.lane.b32.xlu0 %v2141, 16
  %v2386 = vpop.permute.xlu0 %2385
  %2387 = vrot.lane.b32.xlu0 %v2143, 16
  %v2388 = vpop.permute.xlu0 %2387
  %2389 = vrot.lane.b32.xlu0 %v2159, 16
  %v2390 = vpop.permute.xlu0 %2389
  %2391 = vrot.lane.b32.xlu0 %v2161, 16
  %v2392 = vpop.permute.xlu0 %2391
  %2393 = vrot.lane.b32.xlu0 %v2163, 16
  %v2394 = vpop.permute.xlu0 %2393
  %2395 = vrot.lane.b32.xlu0 %v2165, 16
  %v2396 = vpop.permute.xlu0 %2395
  %2397 = vrot.lane.b32.xlu0 %v2167, 16
  %v2398 = vpop.permute.xlu0 %2397
  %2399 = vrot.lane.b32.xlu0 %v2169, 16
  %v2400 = vpop.permute.xlu0 %2399
  %2401 = vrot.lane.b32.xlu0 %v2171, 16
  %v2402 = vpop.permute.xlu0 %2401
  %2403 = vrot.lane.b32.xlu0 %v2187, 16
  %v2404 = vpop.permute.xlu0 %2403
  %2405 = vrot.lane.b32.xlu0 %v2189, 16
  %v2406 = vpop.permute.xlu0 %2405
  %2407 = vrot.lane.b32.xlu0 %v2191, 16
  %v2408 = vpop.permute.xlu0 %2407
  %2409 = vrot.lane.b32.xlu0 %v2193, 16
  %v2410 = vpop.permute.xlu0 %2409
  %2411 = vrot.lane.b32.xlu0 %v2195, 16
  %v2412 = vpop.permute.xlu0 %2411
  %2413 = vrot.lane.b32.xlu0 %v2197, 16
  %v2414 = vpop.permute.xlu0 %2413
  %2415 = vrot.lane.b32.xlu0 %v2199, 16
  %v2416 = vpop.permute.xlu0 %2415
  %2417 = vrot.lane.b32.xlu0 %v2215, 16
  %v2418 = vpop.permute.xlu0 %2417
  %2419 = vrot.lane.b32.xlu0 %v2217, 16
  %v2420 = vpop.permute.xlu0 %2419
  %2421 = vrot.lane.b32.xlu0 %v2219, 16
  %v2422 = vpop.permute.xlu0 %2421
  %2423 = vrot.lane.b32.xlu0 %v2221, 16
  %v2424 = vpop.permute.xlu0 %2423
  %2425 = vrot.lane.b32.xlu0 %v2223, 16
  %v2426 = vpop.permute.xlu0 %2425
  %2427 = vrot.lane.b32.xlu0 %v2225, 16
  %v2428 = vpop.permute.xlu0 %2427
  %2429 = vrot.lane.b32.xlu0 %v2227, 16
  %v2430 = vpop.permute.xlu0 %2429
  %2431 = vrot.lane.b32.xlu0 %v2243, 16
  %v2432 = vpop.permute.xlu0 %2431
  %2433 = vrot.lane.b32.xlu0 %v2245, 16
  %v2434 = vpop.permute.xlu0 %2433
  %2435 = vrot.lane.b32.xlu0 %v2247, 16
  %v2436 = vpop.permute.xlu0 %2435
  %2437 = vrot.lane.b32.xlu0 %v2249, 16
  %v2438 = vpop.permute.xlu0 %2437
  %2439 = vrot.lane.b32.xlu0 %v2251, 16
  %v2440 = vpop.permute.xlu0 %2439
  %2441 = vrot.lane.b32.xlu0 %v2253, 16
  %v2442 = vpop.permute.xlu0 %2441
  %2443 = vrot.lane.b32.xlu0 %v2255, 16
  %v2444 = vpop.permute.xlu0 %2443
  %2445 = vrot.lane.b32.xlu0 %v2271, 16
  %v2446 = vpop.permute.xlu0 %2445
  %2447 = vrot.lane.b32.xlu0 %v2273, 16
  %v2448 = vpop.permute.xlu0 %2447
  %2449 = vrot.lane.b32.xlu0 %v2275, 16
  %v2450 = vpop.permute.xlu0 %2449
  %2451 = vrot.lane.b32.xlu0 %v2277, 16
  %v2452 = vpop.permute.xlu0 %2451
  %2453 = vrot.lane.b32.xlu0 %v2279, 16
  %v2454 = vpop.permute.xlu0 %2453
  %2455 = vrot.lane.b32.xlu0 %v2281, 16
  %v2456 = vpop.permute.xlu0 %2455
  %2457 = vrot.lane.b32.xlu0 %v2283, 16
  %v2458 = vpop.permute.xlu0 %2457
  %2459 = vrot.lane.b32.xlu0 %v2299, 16
  %v2460 = vpop.permute.xlu0 %2459
  %2461 = vrot.lane.b32.xlu0 %v2301, 16
  %v2462 = vpop.permute.xlu0 %2461
  %2463 = vrot.lane.b32.xlu0 %v2303, 16
  %v2464 = vpop.permute.xlu0 %2463
  %2465 = vrot.lane.b32.xlu0 %v2305, 16
  %v2466 = vpop.permute.xlu0 %2465
  %2467 = vrot.lane.b32.xlu0 %v2307, 16
  %v2468 = vpop.permute.xlu0 %2467
  %2469 = vrot.lane.b32.xlu0 %v2309, 16
  %v2470 = vpop.permute.xlu0 %2469
  %2471 = vrot.lane.b32.xlu0 %v2311, 16
  %v2472 = vpop.permute.xlu0 %2471
  %2571 = vrot.lane.b32.xlu0 %v2144, 32
  %v2572 = vpop.permute.xlu0 %2571
  %2573 = vrot.lane.b32.xlu0 %v2146, 32
  %v2574 = vpop.permute.xlu0 %2573
  %2575 = vrot.lane.b32.xlu0 %v2148, 32
  %v2576 = vpop.permute.xlu0 %2575
  %2577 = vrot.lane.b32.xlu0 %v2150, 32
  %v2578 = vpop.permute.xlu0 %2577
  %2579 = vrot.lane.b32.xlu0 %v2152, 32
  %v2580 = vpop.permute.xlu0 %2579
  %2581 = vrot.lane.b32.xlu0 %v2154, 32
  %v2582 = vpop.permute.xlu0 %2581
  %2583 = vrot.lane.b32.xlu0 %v2156, 32
  %v2584 = vpop.permute.xlu0 %2583
  %2585 = vrot.lane.b32.xlu0 %v2172, 32
  %v2586 = vpop.permute.xlu0 %2585
  %2587 = vrot.lane.b32.xlu0 %v2174, 32
  %v2588 = vpop.permute.xlu0 %2587
  %2589 = vrot.lane.b32.xlu0 %v2176, 32
  %v2590 = vpop.permute.xlu0 %2589
  %2591 = vrot.lane.b32.xlu0 %v2178, 32
  %v2592 = vpop.permute.xlu0 %2591
  %2593 = vrot.lane.b32.xlu0 %v2180, 32
  %v2594 = vpop.permute.xlu0 %2593
  %2595 = vrot.lane.b32.xlu0 %v2182, 32
  %v2596 = vpop.permute.xlu0 %2595
  %2597 = vrot.lane.b32.xlu0 %v2184, 32
  %v2598 = vpop.permute.xlu0 %2597
  %2599 = vrot.lane.b32.xlu0 %v2200, 32
  %v2600 = vpop.permute.xlu0 %2599
  %2601 = vrot.lane.b32.xlu0 %v2202, 32
  %v2602 = vpop.permute.xlu0 %2601
  %2603 = vrot.lane.b32.xlu0 %v2204, 32
  %v2604 = vpop.permute.xlu0 %2603
  %2605 = vrot.lane.b32.xlu0 %v2206, 32
  %v2606 = vpop.permute.xlu0 %2605
  %2607 = vrot.lane.b32.xlu0 %v2208, 32
  %v2608 = vpop.permute.xlu0 %2607
  %2609 = vrot.lane.b32.xlu0 %v2210, 32
  %v2610 = vpop.permute.xlu0 %2609
  %2611 = vrot.lane.b32.xlu0 %v2212, 32
  %v2612 = vpop.permute.xlu0 %2611
  %2613 = vrot.lane.b32.xlu0 %v2228, 32
  %v2614 = vpop.permute.xlu0 %2613
  %2615 = vrot.lane.b32.xlu0 %v2230, 32
  %v2616 = vpop.permute.xlu0 %2615
  %2617 = vrot.lane.b32.xlu0 %v2232, 32
  %v2618 = vpop.permute.xlu0 %2617
  %2619 = vrot.lane.b32.xlu0 %v2234, 32
  %v2620 = vpop.permute.xlu0 %2619
  %2621 = vrot.lane.b32.xlu0 %v2236, 32
  %v2622 = vpop.permute.xlu0 %2621
  %2623 = vrot.lane.b32.xlu0 %v2238, 32
  %v2624 = vpop.permute.xlu0 %2623
  %2625 = vrot.lane.b32.xlu0 %v2240, 32
  %v2626 = vpop.permute.xlu0 %2625
  %2627 = vrot.lane.b32.xlu0 %v2256, 32
  %v2628 = vpop.permute.xlu0 %2627
  %2629 = vrot.lane.b32.xlu0 %v2258, 32
  %v2630 = vpop.permute.xlu0 %2629
  %2631 = vrot.lane.b32.xlu0 %v2260, 32
  %v2632 = vpop.permute.xlu0 %2631
  %2633 = vrot.lane.b32.xlu0 %v2262, 32
  %v2634 = vpop.permute.xlu0 %2633
  %2635 = vrot.lane.b32.xlu0 %v2264, 32
  %v2636 = vpop.permute.xlu0 %2635
  %2637 = vrot.lane.b32.xlu0 %v2266, 32
  %v2638 = vpop.permute.xlu0 %2637
  %2639 = vrot.lane.b32.xlu0 %v2268, 32
  %v2640 = vpop.permute.xlu0 %2639
  %2641 = vrot.lane.b32.xlu0 %v2284, 32
  %v2642 = vpop.permute.xlu0 %2641
  %2643 = vrot.lane.b32.xlu0 %v2286, 32
  %v2644 = vpop.permute.xlu0 %2643
  %2645 = vrot.lane.b32.xlu0 %v2288, 32
  %v2646 = vpop.permute.xlu0 %2645
  %2647 = vrot.lane.b32.xlu0 %v2290, 32
  %v2648 = vpop.permute.xlu0 %2647
  %2649 = vrot.lane.b32.xlu0 %v2292, 32
  %v2650 = vpop.permute.xlu0 %2649
  %2651 = vrot.lane.b32.xlu0 %v2294, 32
  %v2652 = vpop.permute.xlu0 %2651
  %2653 = vrot.lane.b32.xlu0 %v2296, 32
  %v2654 = vpop.permute.xlu0 %2653
  %2655 = vrot.lane.b32.xlu0 %v2312, 32
  %v2656 = vpop.permute.xlu0 %2655
  %2657 = vrot.lane.b32.xlu0 %v2314, 32
  %v2658 = vpop.permute.xlu0 %2657
  %2659 = vrot.lane.b32.xlu0 %v2316, 32
  %v2660 = vpop.permute.xlu0 %2659
  %2661 = vrot.lane.b32.xlu0 %v2318, 32
  %v2662 = vpop.permute.xlu0 %2661
  %2663 = vrot.lane.b32.xlu0 %v2320, 32
  %v2664 = vpop.permute.xlu0 %2663
  %2665 = vrot.lane.b32.xlu0 %v2322, 32
  %v2666 = vpop.permute.xlu0 %2665
  %2667 = vrot.lane.b32.xlu0 %v2324, 32
  %v2668 = vpop.permute.xlu0 %2667
  %2767 = vrot.lane.b32.xlu0 %v2145, 48
  %v2768 = vpop.permute.xlu0 %2767
  %2769 = vrot.lane.b32.xlu0 %v2147, 48
  %v2770 = vpop.permute.xlu0 %2769
  %2771 = vrot.lane.b32.xlu0 %v2149, 48
  %v2772 = vpop.permute.xlu0 %2771
  %2773 = vrot.lane.b32.xlu0 %v2151, 48
  %v2774 = vpop.permute.xlu0 %2773
  %2775 = vrot.lane.b32.xlu0 %v2153, 48
  %v2776 = vpop.permute.xlu0 %2775
  %2777 = vrot.lane.b32.xlu0 %v2155, 48
  %v2778 = vpop.permute.xlu0 %2777
  %2779 = vrot.lane.b32.xlu0 %v2157, 48
  %v2780 = vpop.permute.xlu0 %2779
  %2781 = vrot.lane.b32.xlu0 %v2173, 48
  %v2782 = vpop.permute.xlu0 %2781
  %2783 = vrot.lane.b32.xlu0 %v2175, 48
  %v2784 = vpop.permute.xlu0 %2783
  %2785 = vrot.lane.b32.xlu0 %v2177, 48
  %v2786 = vpop.permute.xlu0 %2785
  %2787 = vrot.lane.b32.xlu0 %v2179, 48
  %v2788 = vpop.permute.xlu0 %2787
  %2789 = vrot.lane.b32.xlu0 %v2181, 48
  %v2790 = vpop.permute.xlu0 %2789
  %2791 = vrot.lane.b32.xlu0 %v2183, 48
  %v2792 = vpop.permute.xlu0 %2791
  %2793 = vrot.lane.b32.xlu0 %v2185, 48
  %v2794 = vpop.permute.xlu0 %2793
  %2795 = vrot.lane.b32.xlu0 %v2201, 48
  %v2796 = vpop.permute.xlu0 %2795
  %2797 = vrot.lane.b32.xlu0 %v2203, 48
  %v2798 = vpop.permute.xlu0 %2797
  %2799 = vrot.lane.b32.xlu0 %v2205, 48
  %v2800 = vpop.permute.xlu0 %2799
  %2801 = vrot.lane.b32.xlu0 %v2207, 48
  %v2802 = vpop.permute.xlu0 %2801
  %2803 = vrot.lane.b32.xlu0 %v2209, 48
  %v2804 = vpop.permute.xlu0 %2803
  %2805 = vrot.lane.b32.xlu0 %v2211, 48
  %v2806 = vpop.permute.xlu0 %2805
  %2807 = vrot.lane.b32.xlu0 %v2213, 48
  %v2808 = vpop.permute.xlu0 %2807
  %2809 = vrot.lane.b32.xlu0 %v2229, 48
  %v2810 = vpop.permute.xlu0 %2809
  %2811 = vrot.lane.b32.xlu0 %v2231, 48
  %v2812 = vpop.permute.xlu0 %2811
  %2813 = vrot.lane.b32.xlu0 %v2233, 48
  %v2814 = vpop.permute.xlu0 %2813
  %2815 = vrot.lane.b32.xlu0 %v2235, 48
  %v2816 = vpop.permute.xlu0 %2815
  %2817 = vrot.lane.b32.xlu0 %v2237, 48
  %v2818 = vpop.permute.xlu0 %2817
  %2819 = vrot.lane.b32.xlu0 %v2239, 48
  %v2820 = vpop.permute.xlu0 %2819
  %2821 = vrot.lane.b32.xlu0 %v2241, 48
  %v2822 = vpop.permute.xlu0 %2821
  %2823 = vrot.lane.b32.xlu0 %v2257, 48
  %v2824 = vpop.permute.xlu0 %2823
  %2825 = vrot.lane.b32.xlu0 %v2259, 48
  %v2826 = vpop.permute.xlu0 %2825
  %2827 = vrot.lane.b32.xlu0 %v2261, 48
  %v2828 = vpop.permute.xlu0 %2827
  %2829 = vrot.lane.b32.xlu0 %v2263, 48
  %v2830 = vpop.permute.xlu0 %2829
  %2831 = vrot.lane.b32.xlu0 %v2265, 48
  %v2832 = vpop.permute.xlu0 %2831
  %2833 = vrot.lane.b32.xlu0 %v2267, 48
  %v2834 = vpop.permute.xlu0 %2833
  %2835 = vrot.lane.b32.xlu0 %v2269, 48
  %v2836 = vpop.permute.xlu0 %2835
  %2837 = vrot.lane.b32.xlu0 %v2285, 48
  %v2838 = vpop.permute.xlu0 %2837
  %2839 = vrot.lane.b32.xlu0 %v2287, 48
  %v2840 = vpop.permute.xlu0 %2839
  %2841 = vrot.lane.b32.xlu0 %v2289, 48
  %v2842 = vpop.permute.xlu0 %2841
  %2843 = vrot.lane.b32.xlu0 %v2291, 48
  %v2844 = vpop.permute.xlu0 %2843
  %2845 = vrot.lane.b32.xlu0 %v2293, 48
  %v2846 = vpop.permute.xlu0 %2845
  %2847 = vrot.lane.b32.xlu0 %v2295, 48
  %v2848 = vpop.permute.xlu0 %2847
  %2849 = vrot.lane.b32.xlu0 %v2297, 48
  %v2850 = vpop.permute.xlu0 %2849
  %2851 = vrot.lane.b32.xlu0 %v2313, 48
  %v2852 = vpop.permute.xlu0 %2851
  %2853 = vrot.lane.b32.xlu0 %v2315, 48
  %v2854 = vpop.permute.xlu0 %2853
  %2855 = vrot.lane.b32.xlu0 %v2317, 48
  %v2856 = vpop.permute.xlu0 %2855
  %2857 = vrot.lane.b32.xlu0 %v2319, 48
  %v2858 = vpop.permute.xlu0 %2857
  %2859 = vrot.lane.b32.xlu0 %v2321, 48
  %v2860 = vpop.permute.xlu0 %2859
  %2861 = vrot.lane.b32.xlu0 %v2323, 48
  %v2862 = vpop.permute.xlu0 %2861
  %2863 = vrot.lane.b32.xlu0 %v2325, 48
  %v2864 = vpop.permute.xlu0 %2863
  %vm2914 = vcmask 130048
  %v2915 = vsel %vm2914, %v2130, %v2376
  %v2916 = vsel %vm2914, %v2132, %v2378
  %v2917 = vsel %vm2914, %v2134, %v2380
  %v2918 = vsel %vm2914, %v2136, %v2382
  %v2919 = vsel %vm2914, %v2138, %v2384
  %v2920 = vsel %vm2914, %v2140, %v2386
  %v2921 = vsel %vm2914, %v2142, %v2388
  %v2922 = vsel %vm2914, %v2158, %v2390
  %v2923 = vsel %vm2914, %v2160, %v2392
  %v2924 = vsel %vm2914, %v2162, %v2394
  %v2925 = vsel %vm2914, %v2164, %v2396
  %v2926 = vsel %vm2914, %v2166, %v2398
  %v2927 = vsel %vm2914, %v2168, %v2400
  %v2928 = vsel %vm2914, %v2170, %v2402
  %v2929 = vsel %vm2914, %v2186, %v2404
  %v2930 = vsel %vm2914, %v2188, %v2406
  %v2931 = vsel %vm2914, %v2190, %v2408
  %v2932 = vsel %vm2914, %v2192, %v2410
  %v2933 = vsel %vm2914, %v2194, %v2412
  %v2934 = vsel %vm2914, %v2196, %v2414
  %v2935 = vsel %vm2914, %v2198, %v2416
  %v2936 = vsel %vm2914, %v2214, %v2418
  %v2937 = vsel %vm2914, %v2216, %v2420
  %v2938 = vsel %vm2914, %v2218, %v2422
  %v2939 = vsel %vm2914, %v2220, %v2424
  %v2940 = vsel %vm2914, %v2222, %v2426
  %v2941 = vsel %vm2914, %v2224, %v2428
  %v2942 = vsel %vm2914, %v2226, %v2430
  %v2943 = vsel %vm2914, %v2242, %v2432
  %v2944 = vsel %vm2914, %v2244, %v2434
  %v2945 = vsel %vm2914, %v2246, %v2436
  %v2946 = vsel %vm2914, %v2248, %v2438
  %v2947 = vsel %vm2914, %v2250, %v2440
  %v2948 = vsel %vm2914, %v2252, %v2442
  %v2949 = vsel %vm2914, %v2254, %v2444
  %v2950 = vsel %vm2914, %v2270, %v2446
  %v2951 = vsel %vm2914, %v2272, %v2448
  %v2952 = vsel %vm2914, %v2274, %v2450
  %v2953 = vsel %vm2914, %v2276, %v2452
  %v2954 = vsel %vm2914, %v2278, %v2454
  %v2955 = vsel %vm2914, %v2280, %v2456
  %v2956 = vsel %vm2914, %v2282, %v2458
  %v2957 = vsel %vm2914, %v2298, %v2460
  %v2958 = vsel %vm2914, %v2300, %v2462
  %v2959 = vsel %vm2914, %v2302, %v2464
  %v2960 = vsel %vm2914, %v2304, %v2466
  %v2961 = vsel %vm2914, %v2306, %v2468
  %v2962 = vsel %vm2914, %v2308, %v2470
  %v2963 = vsel %vm2914, %v2310, %v2472
  %vm2964 = vcmask 261120
  %v2965 = vsel %vm2964, %v2915, %v2572
  %v2966 = vsel %vm2964, %v2916, %v2574
  %v2967 = vsel %vm2964, %v2917, %v2576
  %v2968 = vsel %vm2964, %v2918, %v2578
  %v2969 = vsel %vm2964, %v2919, %v2580
  %v2970 = vsel %vm2964, %v2920, %v2582
  %v2971 = vsel %vm2964, %v2921, %v2584
  %v2972 = vsel %vm2964, %v2922, %v2586
  %v2973 = vsel %vm2964, %v2923, %v2588
  %v2974 = vsel %vm2964, %v2924, %v2590
  %v2975 = vsel %vm2964, %v2925, %v2592
  %v2976 = vsel %vm2964, %v2926, %v2594
  %v2977 = vsel %vm2964, %v2927, %v2596
  %v2978 = vsel %vm2964, %v2928, %v2598
  %v2979 = vsel %vm2964, %v2929, %v2600
  %v2980 = vsel %vm2964, %v2930, %v2602
  %v2981 = vsel %vm2964, %v2931, %v2604
  %v2982 = vsel %vm2964, %v2932, %v2606
  %v2983 = vsel %vm2964, %v2933, %v2608
  %v2984 = vsel %vm2964, %v2934, %v2610
  %v2985 = vsel %vm2964, %v2935, %v2612
  %v2986 = vsel %vm2964, %v2936, %v2614
  %v2987 = vsel %vm2964, %v2937, %v2616
  %v2988 = vsel %vm2964, %v2938, %v2618
  %v2989 = vsel %vm2964, %v2939, %v2620
  %v2990 = vsel %vm2964, %v2940, %v2622
  %v2991 = vsel %vm2964, %v2941, %v2624
  %v2992 = vsel %vm2964, %v2942, %v2626
  %v2993 = vsel %vm2964, %v2943, %v2628
  %v2994 = vsel %vm2964, %v2944, %v2630
  %v2995 = vsel %vm2964, %v2945, %v2632
  %v2996 = vsel %vm2964, %v2946, %v2634
  %v2997 = vsel %vm2964, %v2947, %v2636
  %v2998 = vsel %vm2964, %v2948, %v2638
  %v2999 = vsel %vm2964, %v2949, %v2640
  %v3000 = vsel %vm2964, %v2950, %v2642
  %v3001 = vsel %vm2964, %v2951, %v2644
  %v3002 = vsel %vm2964, %v2952, %v2646
  %v3003 = vsel %vm2964, %v2953, %v2648
  %v3004 = vsel %vm2964, %v2954, %v2650
  %v3005 = vsel %vm2964, %v2955, %v2652
  %v3006 = vsel %vm2964, %v2956, %v2654
  %v3007 = vsel %vm2964, %v2957, %v2656
  %v3008 = vsel %vm2964, %v2958, %v2658
  %v3009 = vsel %vm2964, %v2959, %v2660
  %v3010 = vsel %vm2964, %v2960, %v2662
  %v3011 = vsel %vm2964, %v2961, %v2664
  %v3012 = vsel %vm2964, %v2962, %v2666
  %v3013 = vsel %vm2964, %v2963, %v2668
  %vm3014 = vcmask 392192
  %v3015 = vsel %vm3014, %v2965, %v2768
  %v3016 = vsel %vm3014, %v2966, %v2770
  %v3017 = vsel %vm3014, %v2967, %v2772
  %v3018 = vsel %vm3014, %v2968, %v2774
  %v3019 = vsel %vm3014, %v2969, %v2776
  %v3020 = vsel %vm3014, %v2970, %v2778
  %v3021 = vsel %vm3014, %v2971, %v2780
  %v3022 = vsel %vm3014, %v2972, %v2782
  %v3023 = vsel %vm3014, %v2973, %v2784
  %v3024 = vsel %vm3014, %v2974, %v2786
  %v3025 = vsel %vm3014, %v2975, %v2788
  %v3026 = vsel %vm3014, %v2976, %v2790
  %v3027 = vsel %vm3014, %v2977, %v2792
  %v3028 = vsel %vm3014, %v2978, %v2794
  %v3029 = vsel %vm3014, %v2979, %v2796
  %v3030 = vsel %vm3014, %v2980, %v2798
  %v3031 = vsel %vm3014, %v2981, %v2800
  %v3032 = vsel %vm3014, %v2982, %v2802
  %v3033 = vsel %vm3014, %v2983, %v2804
  %v3034 = vsel %vm3014, %v2984, %v2806
  %v3035 = vsel %vm3014, %v2985, %v2808
  %v3036 = vsel %vm3014, %v2986, %v2810
  %v3037 = vsel %vm3014, %v2987, %v2812
  %v3038 = vsel %vm3014, %v2988, %v2814
  %v3039 = vsel %vm3014, %v2989, %v2816
  %v3040 = vsel %vm3014, %v2990, %v2818
  %v3041 = vsel %vm3014, %v2991, %v2820
  %v3042 = vsel %vm3014, %v2992, %v2822
  %v3043 = vsel %vm3014, %v2993, %v2824
  %v3044 = vsel %vm3014, %v2994, %v2826
  %v3045 = vsel %vm3014, %v2995, %v2828
  %v3046 = vsel %vm3014, %v2996, %v2830
  %v3047 = vsel %vm3014, %v2997, %v2832
  %v3048 = vsel %vm3014, %v2998, %v2834
  %v3049 = vsel %vm3014, %v2999, %v2836
  %v3050 = vsel %vm3014, %v3000, %v2838
  %v3051 = vsel %vm3014, %v3001, %v2840
  %v3052 = vsel %vm3014, %v3002, %v2842
  %v3053 = vsel %vm3014, %v3003, %v2844
  %v3054 = vsel %vm3014, %v3004, %v2846
  %v3055 = vsel %vm3014, %v3005, %v2848
  %v3056 = vsel %vm3014, %v3006, %v2850
  %v3057 = vsel %vm3014, %v3007, %v2852
  %v3058 = vsel %vm3014, %v3008, %v2854
  %v3059 = vsel %vm3014, %v3009, %v2856
  %v3060 = vsel %vm3014, %v3010, %v2858
  %v3061 = vsel %vm3014, %v3011, %v2860
  %v3062 = vsel %vm3014, %v3012, %v2862
  %v3063 = vsel %vm3014, %v3013, %v2864
  %v3064 = vld [vmem:[%s3] sm:$0xff]
  %v3065 = vld [vmem:[%s3 + $0x8] sm:$0xff]
  %v3066 = vld [vmem:[%s3 + $0x10] sm:$0xff]
  %v3067 = vld [vmem:[%s3 + $0x18] sm:$0xff]
  %v3068 = vld [vmem:[%s3 + $0x20] sm:$0xff]
  %v3069 = vld [vmem:[%s3 + $0x28] sm:$0xff]
  %v3070 = vld [vmem:[%s3 + $0x30] sm:$0xff]
  %v3071 = vld [vmem:[%s3 + $0x38] sm:$0xff]
  %v3072 = vld [vmem:[%s4] sm:$0x1]
  %v3074 = vlaneseq
  %v3075 = vshrl.u32 %v3074, 7
  %v3076 = vsub.s32 0, %v3075
  %v3077 = vrot.slane %v3072, %v3076
  %vm3079 = vcmask 523264
  %v3081 = vsel %vm3079, %v3015, 0
  %v3084 = vsel %vm3079, %v3016, 0
  %v3087 = vsel %vm3079, %v3017, 0
  %v3090 = vsel %vm3079, %v3018, 0
  %v3093 = vsel %vm3079, %v3019, 0
  %v3096 = vsel %vm3079, %v3020, 0
  %v3099 = vsel %vm3079, %v3021, 0
  %v3102 = vsel %vm3079, %v3022, 0
  %v3105 = vsel %vm3079, %v3023, 0
  %v3108 = vsel %vm3079, %v3024, 0
  %v3111 = vsel %vm3079, %v3025, 0
  %v3114 = vsel %vm3079, %v3026, 0
  %v3117 = vsel %vm3079, %v3027, 0
  %v3120 = vsel %vm3079, %v3028, 0
  %v3123 = vsel %vm3079, %v3029, 0
  %v3126 = vsel %vm3079, %v3030, 0
  %v3129 = vsel %vm3079, %v3031, 0
  %v3132 = vsel %vm3079, %v3032, 0
  %v3135 = vsel %vm3079, %v3033, 0
  %v3138 = vsel %vm3079, %v3034, 0
  %v3141 = vsel %vm3079, %v3035, 0
  %v3144 = vsel %vm3079, %v3036, 0
  %v3147 = vsel %vm3079, %v3037, 0
  %v3150 = vsel %vm3079, %v3038, 0
  %v3153 = vsel %vm3079, %v3039, 0
  %v3156 = vsel %vm3079, %v3040, 0
  %v3159 = vsel %vm3079, %v3041, 0
  %v3162 = vsel %vm3079, %v3042, 0
  %v3165 = vsel %vm3079, %v3043, 0
  %v3168 = vsel %vm3079, %v3044, 0
  %v3171 = vsel %vm3079, %v3045, 0
  %v3174 = vsel %vm3079, %v3046, 0
  %v3177 = vsel %vm3079, %v3047, 0
  %v3180 = vsel %vm3079, %v3048, 0
  %v3183 = vsel %vm3079, %v3049, 0
  %v3186 = vsel %vm3079, %v3050, 0
  %v3189 = vsel %vm3079, %v3051, 0
  %v3192 = vsel %vm3079, %v3052, 0
  %v3195 = vsel %vm3079, %v3053, 0
  %v3198 = vsel %vm3079, %v3054, 0
  %v3201 = vsel %vm3079, %v3055, 0
  %v3204 = vsel %vm3079, %v3056, 0
  %v3207 = vsel %vm3079, %v3057, 0
  %v3210 = vsel %vm3079, %v3058, 0
  %v3213 = vsel %vm3079, %v3059, 0
  %v3216 = vsel %vm3079, %v3060, 0
  %v3219 = vsel %vm3079, %v3061, 0
  %v3222 = vsel %vm3079, %v3062, 0
  %v3225 = vsel %vm3079, %v3063, 0
  %3227 = vmatprep.subr.mxu0 0.0
  %3228 = vmatpush1.msra.mxu0 %v3064
  %3229 = vmatprep.subr.mxu0 0.0
  %3230 = vmatpush1.msra.mxu0 %v3065
  %3231 = vmatprep.subr.mxu0 0.0
  %3232 = vmatpush1.msra.mxu0 %v3066
  %3233 = vmatprep.subr.mxu0 0.0
  %3234 = vmatpush1.msra.mxu0 %v3067
  %3235 = vmatprep.subr.mxu0 0.0
  %3236 = vmatpush1.msra.mxu0 %v3068
  %3237 = vmatprep.subr.mxu0 0.0
  %3238 = vmatpush1.msra.mxu0 %v3069
  %3239 = vmatprep.subr.mxu0 0.0
  %3240 = vmatpush1.msra.mxu0 %v3070
  %3241 = vmatprep.subr.mxu0 0.0
  %3242 = vmatpush1.msra.mxu0 %v3071
  %3243 = vmatprep.subr.mxu0 0.0
  %3244 = vmatpush1.msra.mxu0 0.0
  %3245 = vmatprep.subr.mxu0 0.0
  %3246 = vmatpush1.msra.mxu0 0.0
  %3247 = vmatprep.subr.mxu0 0.0
  %3248 = vmatpush1.msra.mxu0 0.0
  %3249 = vmatprep.subr.mxu0 0.0
  %3250 = vmatpush1.msra.mxu0 0.0
  %3251 = vmatprep.subr.mxu0 0.0
  %3252 = vmatpush1.msra.mxu0 0.0
  %3253 = vmatprep.subr.mxu0 0.0
  %3254 = vmatpush1.msra.mxu0 0.0
  %3255 = vmatprep.subr.mxu0 0.0
  %3256 = vmatpush1.msra.mxu0 0.0
  %3257 = vmatprep.subr.mxu0 0.0
  %3258 = vmatpush1.msra.mxu0 0.0
  %3259 = vmatprep.subr.mxu0 0.0
  %3260 = vmatpush1.msra.mxu0 0.0
  %3261 = vmatprep.subr.mxu0 0.0
  %3262 = vmatpush1.msra.mxu0 0.0
  %3263 = vmatprep.subr.mxu0 0.0
  %3264 = vmatpush1.msra.mxu0 0.0
  %3265 = vmatprep.subr.mxu0 0.0
  %3266 = vmatpush1.msra.mxu0 0.0
  %3267 = vmatprep.subr.mxu0 0.0
  %3268 = vmatpush1.msra.mxu0 0.0
  %3269 = vmatprep.subr.mxu0 0.0
  %3270 = vmatpush1.msra.mxu0 0.0
  %3271 = vmatprep.subr.mxu0 0.0
  %3272 = vmatpush1.msra.mxu0 0.0
  %3273 = vmatprep.subr.mxu0 0.0
  %3274 = vmatpush1.msra.mxu0 0.0
  %3275 = vmatprep.subr.mxu0 0.0
  %3276 = vmatpush1.msra.mxu0 0.0
  %3277 = vmatprep.subr.mxu0 0.0
  %3278 = vmatpush1.msra.mxu0 0.0
  %3279 = vmatprep.subr.mxu0 0.0
  %3280 = vmatpush1.msra.mxu0 0.0
  %3281 = vmatprep.subr.mxu0 0.0
  %3282 = vmatpush1.msra.mxu0 0.0
  %3283 = vmatprep.subr.mxu0 0.0
  %3284 = vmatpush1.msra.mxu0 0.0
  %3285 = vmatprep.subr.mxu0 0.0
  %3286 = vmatpush1.msra.mxu0 0.0
  %3287 = vmatprep.subr.mxu0 0.0
  %3288 = vmatpush1.msra.mxu0 0.0
  %3289 = vmatprep.subr.mxu0 0.0
  %3290 = vmatpush1.msra.mxu0 0.0
  %3291 = vmatprep.mubr.f32.mxu0 0.0
  %3292 = vmatmul.mubr.f32.gmra.mrb[0].mxu0 %v3081
  %v3293 = vpop.f32.mrb[0].mxu0
  %v3294 = vadd.f32 %v3077, %v3293
  %v3295 = vpop.f32.mrb[0].mxu0
  %3296 = vmatprep.mubr.f32.mxu0 0.0
  %3297 = vmatmul.mubr.f32.gmra.mrb[0].mxu0 %v3084
  %v3298 = vpop.f32.mrb[0].mxu0
  %v3299 = vadd.f32 %v3077, %v3298
  %v3300 = vpop.f32.mrb[0].mxu0
  %3301 = vmatprep.mubr.f32.mxu0 0.0
  %3302 = vmatmul.mubr.f32.gmra.mrb[0].mxu0 %v3087
  %v3303 = vpop.f32.mrb[0].mxu0
  %v3304 = vadd.f32 %v3077, %v3303
  %v3305 = vpop.f32.mrb[0].mxu0
  %3306 = vmatprep.mubr.f32.mxu0 0.0
  %3307 = vmatmul.mubr.f32.gmra.mrb[0].mxu0 %v3090
  %v3308 = vpop.f32.mrb[0].mxu0
  %v3309 = vadd.f32 %v3077, %v3308
  %v3310 = vpop.f32.mrb[0].mxu0
  %3311 = vmatprep.mubr.f32.mxu0 0.0
  %3312 = vmatmul.mubr.f32.gmra.mrb[0].mxu0 %v3093
  %v3313 = vpop.f32.mrb[0].mxu0
  %v3314 = vadd.f32 %v3077, %v3313
  %v3315 = vpop.f32.mrb[0].mxu0
  %3316 = vmatprep.mubr.f32.mxu0 0.0
  %3317 = vmatmul.mubr.f32.gmra.mrb[0].mxu0 %v3096
  %v3318 = vpop.f32.mrb[0].mxu0
  %v3319 = vadd.f32 %v3077, %v3318
  %v3320 = vpop.f32.mrb[0].mxu0
  %3321 = vmatprep.mubr.f32.mxu0 0.0
  %3322 = vmatmul.mubr.f32.gmra.mrb[0].mxu0 %v3099
  %v3323 = vpop.f32.mrb[0].mxu0
  %v3324 = vpop.f32.mrb[0].mxu0
  %3325 = vmatprep.mubr.f32.mxu0 0.0
  %3326 = vmatmul.mubr.f32.gmra.mrb[0].mxu0 %v3102
  %v3327 = vpop.f32.mrb[0].mxu0
  %v3328 = vadd.f32 %v3077, %v3327
  %v3329 = vpop.f32.mrb[0].mxu0
  %3330 = vmatprep.mubr.f32.mxu0 0.0
  %3331 = vmatmul.mubr.f32.gmra.mrb[0].mxu0 %v3105
  %v3332 = vpop.f32.mrb[0].mxu0
  %v3333 = vadd.f32 %v3077, %v3332
  %v3334 = vpop.f32.mrb[0].mxu0
  %3335 = vmatprep.mubr.f32.mxu0 0.0
  %3336 = vmatmul.mubr.f32.gmra.mrb[0].mxu0 %v3108
  %v3337 = vpop.f32.mrb[0].mxu0
  %v3338 = vadd.f32 %v3077, %v3337
  %v3339 = vpop.f32.mrb[0].mxu0
  %3340 = vmatprep.mubr.f32.mxu0 0.0
  %3341 = vmatmul.mubr.f32.gmra.mrb[0].mxu0 %v3111
  %v3342 = vpop.f32.mrb[0].mxu0
  %v3343 = vadd.f32 %v3077, %v3342
  %v3344 = vpop.f32.mrb[0].mxu0
  %3345 = vmatprep.mubr.f32.mxu0 0.0
  %3346 = vmatmul.mubr.f32.gmra.mrb[0].mxu0 %v3114
  %v3347 = vpop.f32.mrb[0].mxu0
  %v3348 = vadd.f32 %v3077, %v3347
  %v3349 = vpop.f32.mrb[0].mxu0
  %3350 = vmatprep.mubr.f32.mxu0 0.0
  %3351 = vmatmul.mubr.f32.gmra.mrb[0].mxu0 %v3117
  %v3352 = vpop.f32.mrb[0].mxu0
  %v3353 = vadd.f32 %v3077, %v3352
  %v3354 = vpop.f32.mrb[0].mxu0
  %3355 = vmatprep.mubr.f32.mxu0 0.0
  %3356 = vmatmul.mubr.f32.gmra.mrb[0].mxu0 %v3120
  %v3357 = vpop.f32.mrb[0].mxu0
  %v3358 = vpop.f32.mrb[0].mxu0
  %3359 = vmatprep.mubr.f32.mxu0 0.0
  %3360 = vmatmul.mubr.f32.gmra.mrb[0].mxu0 %v3123
  %v3361 = vpop.f32.mrb[0].mxu0
  %v3362 = vadd.f32 %v3077, %v3361
  %v3363 = vpop.f32.mrb[0].mxu0
  %3364 = vmatprep.mubr.f32.mxu0 0.0
  %3365 = vmatmul.mubr.f32.gmra.mrb[0].mxu0 %v3126
  %v3366 = vpop.f32.mrb[0].mxu0
  %v3367 = vadd.f32 %v3077, %v3366
  %v3368 = vpop.f32.mrb[0].mxu0
  %3369 = vmatprep.mubr.f32.mxu0 0.0
  %3370 = vmatmul.mubr.f32.gmra.mrb[0].mxu0 %v3129
  %v3371 = vpop.f32.mrb[0].mxu0
  %v3372 = vadd.f32 %v3077, %v3371
  %v3373 = vpop.f32.mrb[0].mxu0
  %3374 = vmatprep.mubr.f32.mxu0 0.0
  %3375 = vmatmul.mubr.f32.gmra.mrb[0].mxu0 %v3132
  %v3376 = vpop.f32.mrb[0].mxu0
  %v3377 = vadd.f32 %v3077, %v3376
  %v3378 = vpop.f32.mrb[0].mxu0
  %3379 = vmatprep.mubr.f32.mxu0 0.0
  %3380 = vmatmul.mubr.f32.gmra.mrb[0].mxu0 %v3135
  %v3381 = vpop.f32.mrb[0].mxu0
  %v3382 = vadd.f32 %v3077, %v3381
  %v3383 = vpop.f32.mrb[0].mxu0
  %3384 = vmatprep.mubr.f32.mxu0 0.0
  %3385 = vmatmul.mubr.f32.gmra.mrb[0].mxu0 %v3138
  %v3386 = vpop.f32.mrb[0].mxu0
  %v3387 = vadd.f32 %v3077, %v3386
  %v3388 = vpop.f32.mrb[0].mxu0
  %3389 = vmatprep.mubr.f32.mxu0 0.0
  %3390 = vmatmul.mubr.f32.gmra.mrb[0].mxu0 %v3141
  %v3391 = vpop.f32.mrb[0].mxu0
  %v3392 = vpop.f32.mrb[0].mxu0
  %3393 = vmatprep.mubr.f32.mxu0 0.0
  %3394 = vmatmul.mubr.f32.gmra.mrb[0].mxu0 %v3144
  %v3395 = vpop.f32.mrb[0].mxu0
  %v3396 = vadd.f32 %v3077, %v3395
  %v3397 = vpop.f32.mrb[0].mxu0
  %3398 = vmatprep.mubr.f32.mxu0 0.0
  %3399 = vmatmul.mubr.f32.gmra.mrb[0].mxu0 %v3147
  %v3400 = vpop.f32.mrb[0].mxu0
  %v3401 = vadd.f32 %v3077, %v3400
  %v3402 = vpop.f32.mrb[0].mxu0
  %3403 = vmatprep.mubr.f32.mxu0 0.0
  %3404 = vmatmul.mubr.f32.gmra.mrb[0].mxu0 %v3150
  %v3405 = vpop.f32.mrb[0].mxu0
  %v3406 = vadd.f32 %v3077, %v3405
  %v3407 = vpop.f32.mrb[0].mxu0
  %3408 = vmatprep.mubr.f32.mxu0 0.0
  %3409 = vmatmul.mubr.f32.gmra.mrb[0].mxu0 %v3153
  %v3410 = vpop.f32.mrb[0].mxu0
  %v3411 = vadd.f32 %v3077, %v3410
  %v3412 = vpop.f32.mrb[0].mxu0
  %3413 = vmatprep.mubr.f32.mxu0 0.0
  %3414 = vmatmul.mubr.f32.gmra.mrb[0].mxu0 %v3156
  %v3415 = vpop.f32.mrb[0].mxu0
  %v3416 = vadd.f32 %v3077, %v3415
  %v3417 = vpop.f32.mrb[0].mxu0
  %3418 = vmatprep.mubr.f32.mxu0 0.0
  %3419 = vmatmul.mubr.f32.gmra.mrb[0].mxu0 %v3159
  %v3420 = vpop.f32.mrb[0].mxu0
  %v3421 = vadd.f32 %v3077, %v3420
  %v3422 = vpop.f32.mrb[0].mxu0
  %3423 = vmatprep.mubr.f32.mxu0 0.0
  %3424 = vmatmul.mubr.f32.gmra.mrb[0].mxu0 %v3162
  %v3425 = vpop.f32.mrb[0].mxu0
  %v3426 = vpop.f32.mrb[0].mxu0
  %3427 = vmatprep.mubr.f32.mxu0 0.0
  %3428 = vmatmul.mubr.f32.gmra.mrb[0].mxu0 %v3165
  %v3429 = vpop.f32.mrb[0].mxu0
  %v3430 = vadd.f32 %v3077, %v3429
  %v3431 = vpop.f32.mrb[0].mxu0
  %3432 = vmatprep.mubr.f32.mxu0 0.0
  %3433 = vmatmul.mubr.f32.gmra.mrb[0].mxu0 %v3168
  %v3434 = vpop.f32.mrb[0].mxu0
  %v3435 = vadd.f32 %v3077, %v3434
  %v3436 = vpop.f32.mrb[0].mxu0
  %3437 = vmatprep.mubr.f32.mxu0 0.0
  %3438 = vmatmul.mubr.f32.gmra.mrb[0].mxu0 %v3171
  %v3439 = vpop.f32.mrb[0].mxu0
  %v3440 = vadd.f32 %v3077, %v3439
  %v3441 = vpop.f32.mrb[0].mxu0
  %3442 = vmatprep.mubr.f32.mxu0 0.0
  %3443 = vmatmul.mubr.f32.gmra.mrb[0].mxu0 %v3174
  %v3444 = vpop.f32.mrb[0].mxu0
  %v3445 = vadd.f32 %v3077, %v3444
  %v3446 = vpop.f32.mrb[0].mxu0
  %3447 = vmatprep.mubr.f32.mxu0 0.0
  %3448 = vmatmul.mubr.f32.gmra.mrb[0].mxu0 %v3177
  %v3449 = vpop.f32.mrb[0].mxu0
  %v3450 = vadd.f32 %v3077, %v3449
  %v3451 = vpop.f32.mrb[0].mxu0
  %3452 = vmatprep.mubr.f32.mxu0 0.0
  %3453 = vmatmul.mubr.f32.gmra.mrb[0].mxu0 %v3180
  %v3454 = vpop.f32.mrb[0].mxu0
  %v3455 = vadd.f32 %v3077, %v3454
  %v3456 = vpop.f32.mrb[0].mxu0
  %3457 = vmatprep.mubr.f32.mxu0 0.0
  %3458 = vmatmul.mubr.f32.gmra.mrb[0].mxu0 %v3183
  %v3459 = vpop.f32.mrb[0].mxu0
  %v3460 = vpop.f32.mrb[0].mxu0
  %3461 = vmatprep.mubr.f32.mxu0 0.0
  %3462 = vmatmul.mubr.f32.gmra.mrb[0].mxu0 %v3186
  %v3463 = vpop.f32.mrb[0].mxu0
  %v3464 = vadd.f32 %v3077, %v3463
  %v3465 = vpop.f32.mrb[0].mxu0
  %3466 = vmatprep.mubr.f32.mxu0 0.0
  %3467 = vmatmul.mubr.f32.gmra.mrb[0].mxu0 %v3189
  %v3468 = vpop.f32.mrb[0].mxu0
  %v3469 = vadd.f32 %v3077, %v3468
  %v3470 = vpop.f32.mrb[0].mxu0
  %3471 = vmatprep.mubr.f32.mxu0 0.0
  %3472 = vmatmul.mubr.f32.gmra.mrb[0].mxu0 %v3192
  %v3473 = vpop.f32.mrb[0].mxu0
  %v3474 = vadd.f32 %v3077, %v3473
  %v3475 = vpop.f32.mrb[0].mxu0
  %3476 = vmatprep.mubr.f32.mxu0 0.0
  %3477 = vmatmul.mubr.f32.gmra.mrb[0].mxu0 %v3195
  %v3478 = vpop.f32.mrb[0].mxu0
  %v3479 = vadd.f32 %v3077, %v3478
  %v3480 = vpop.f32.mrb[0].mxu0
  %3481 = vmatprep.mubr.f32.mxu0 0.0
  %3482 = vmatmul.mubr.f32.gmra.mrb[0].mxu0 %v3198
  %v3483 = vpop.f32.mrb[0].mxu0
  %v3484 = vadd.f32 %v3077, %v3483
  %v3485 = vpop.f32.mrb[0].mxu0
  %3486 = vmatprep.mubr.f32.mxu0 0.0
  %3487 = vmatmul.mubr.f32.gmra.mrb[0].mxu0 %v3201
  %v3488 = vpop.f32.mrb[0].mxu0
  %v3489 = vadd.f32 %v3077, %v3488
  %v3490 = vpop.f32.mrb[0].mxu0
  %3491 = vmatprep.mubr.f32.mxu0 0.0
  %3492 = vmatmul.mubr.f32.gmra.mrb[0].mxu0 %v3204
  %v3493 = vpop.f32.mrb[0].mxu0
  %v3494 = vpop.f32.mrb[0].mxu0
  %3495 = vmatprep.mubr.f32.mxu0 0.0
  %3496 = vmatmul.mubr.f32.gmra.mrb[0].mxu0 %v3207
  %v3497 = vpop.f32.mrb[0].mxu0
  %v3498 = vpop.f32.mrb[0].mxu0
  %3499 = vmatprep.mubr.f32.mxu0 0.0
  %3500 = vmatmul.mubr.f32.gmra.mrb[0].mxu0 %v3210
  %v3501 = vpop.f32.mrb[0].mxu0
  %v3502 = vpop.f32.mrb[0].mxu0
  %3503 = vmatprep.mubr.f32.mxu0 0.0
  %3504 = vmatmul.mubr.f32.gmra.mrb[0].mxu0 %v3213
  %v3505 = vpop.f32.mrb[0].mxu0
  %v3506 = vpop.f32.mrb[0].mxu0
  %3507 = vmatprep.mubr.f32.mxu0 0.0
  %3508 = vmatmul.mubr.f32.gmra.mrb[0].mxu0 %v3216
  %v3509 = vpop.f32.mrb[0].mxu0
  %v3510 = vpop.f32.mrb[0].mxu0
  %3511 = vmatprep.mubr.f32.mxu0 0.0
  %3512 = vmatmul.mubr.f32.gmra.mrb[0].mxu0 %v3219
  %v3513 = vpop.f32.mrb[0].mxu0
  %v3514 = vpop.f32.mrb[0].mxu0
  %3515 = vmatprep.mubr.f32.mxu0 0.0
  %3516 = vmatmul.mubr.f32.gmra.mrb[0].mxu0 %v3222
  %v3517 = vpop.f32.mrb[0].mxu0
  %v3518 = vpop.f32.mrb[0].mxu0
  %3519 = vmatprep.mubr.f32.mxu0 0.0
  %3520 = vmatmul.mubr.f32.gmra.mrb[0].mxu0 %v3225
  %v3521 = vpop.f32.mrb[0].mxu0
  %v3522 = vpop.f32.mrb[0].mxu0
  %3523 = vdwg.mxu0
  %v3524 = vmax.f32 %v3294, 0.0
  %v3525 = vmax.f32 %v3299, 0.0
  %v3526 = vmax.f32 %v3304, 0.0
  %v3527 = vmax.f32 %v3309, 0.0
  %v3528 = vmax.f32 %v3314, 0.0
  %v3529 = vmax.f32 %v3319, 0.0
  %v3530 = vmax.f32 %v3328, 0.0
  %v3531 = vmax.f32 %v3333, 0.0
  %v3532 = vmax.f32 %v3338, 0.0
  %v3533 = vmax.f32 %v3343, 0.0
  %v3534 = vmax.f32 %v3348, 0.0
  %v3535 = vmax.f32 %v3353, 0.0
  %v3536 = vmax.f32 %v3362, 0.0
  %v3537 = vmax.f32 %v3367, 0.0
  %v3538 = vmax.f32 %v3372, 0.0
  %v3539 = vmax.f32 %v3377, 0.0
  %v3540 = vmax.f32 %v3382, 0.0
  %v3541 = vmax.f32 %v3387, 0.0
  %v3542 = vmax.f32 %v3396, 0.0
  %v3543 = vmax.f32 %v3401, 0.0
  %v3544 = vmax.f32 %v3406, 0.0
  %v3545 = vmax.f32 %v3411, 0.0
  %v3546 = vmax.f32 %v3416, 0.0
  %v3547 = vmax.f32 %v3421, 0.0
  %v3548 = vmax.f32 %v3430, 0.0
  %v3549 = vmax.f32 %v3435, 0.0
  %v3550 = vmax.f32 %v3440, 0.0
  %v3551 = vmax.f32 %v3445, 0.0
  %v3552 = vmax.f32 %v3450, 0.0
  %v3553 = vmax.f32 %v3455, 0.0
  %v3554 = vmax.f32 %v3464, 0.0
  %v3555 = vmax.f32 %v3469, 0.0
  %v3556 = vmax.f32 %v3474, 0.0
  %v3557 = vmax.f32 %v3479, 0.0
  %v3558 = vmax.f32 %v3484, 0.0
  %v3559 = vmax.f32 %v3489, 0.0
  %3569 = vrot.lane.b32.xlu0 %v3525, 32
  %v3570 = vpop.permute.xlu0 %3569
  %3571 = vrot.lane.b32.xlu0 %v3527, 32
  %v3572 = vpop.permute.xlu0 %3571
  %3573 = vrot.lane.b32.xlu0 %v3529, 32
  %v3574 = vpop.permute.xlu0 %3573
  %3575 = vrot.lane.b32.xlu0 %v3537, 32
  %v3576 = vpop.permute.xlu0 %3575
  %3577 = vrot.lane.b32.xlu0 %v3539, 32
  %v3578 = vpop.permute.xlu0 %3577
  %3579 = vrot.lane.b32.xlu0 %v3541, 32
  %v3580 = vpop.permute.xlu0 %3579
  %3581 = vrot.lane.b32.xlu0 %v3549, 32
  %v3582 = vpop.permute.xlu0 %3581
  %3583 = vrot.lane.b32.xlu0 %v3551, 32
  %v3584 = vpop.permute.xlu0 %3583
  %3585 = vrot.lane.b32.xlu0 %v3553, 32
  %v3586 = vpop.permute.xlu0 %3585
  %3605 = vrot.lane.b32.xlu0 %v3530, 64
  %v3606 = vpop.permute.xlu0 %3605
  %3607 = vrot.lane.b32.xlu0 %v3532, 64
  %v3608 = vpop.permute.xlu0 %3607
  %3609 = vrot.lane.b32.xlu0 %v3534, 64
  %v3610 = vpop.permute.xlu0 %3609
  %3611 = vrot.lane.b32.xlu0 %v3542, 64
  %v3612 = vpop.permute.xlu0 %3611
  %3613 = vrot.lane.b32.xlu0 %v3544, 64
  %v3614 = vpop.permute.xlu0 %3613
  %3615 = vrot.lane.b32.xlu0 %v3546, 64
  %v3616 = vpop.permute.xlu0 %3615
  %3617 = vrot.lane.b32.xlu0 %v3554, 64
  %v3618 = vpop.permute.xlu0 %3617
  %3619 = vrot.lane.b32.xlu0 %v3556, 64
  %v3620 = vpop.permute.xlu0 %3619
  %3621 = vrot.lane.b32.xlu0 %v3558, 64
  %v3622 = vpop.permute.xlu0 %3621
  %3641 = vrot.lane.b32.xlu0 %v3531, 96
  %v3642 = vpop.permute.xlu0 %3641
  %3643 = vrot.lane.b32.xlu0 %v3533, 96
  %v3644 = vpop.permute.xlu0 %3643
  %3645 = vrot.lane.b32.xlu0 %v3535, 96
  %v3646 = vpop.permute.xlu0 %3645
  %3647 = vrot.lane.b32.xlu0 %v3543, 96
  %v3648 = vpop.permute.xlu0 %3647
  %3649 = vrot.lane.b32.xlu0 %v3545, 96
  %v3650 = vpop.permute.xlu0 %3649
  %3651 = vrot.lane.b32.xlu0 %v3547, 96
  %v3652 = vpop.permute.xlu0 %3651
  %3653 = vrot.lane.b32.xlu0 %v3555, 96
  %v3654 = vpop.permute.xlu0 %3653
  %3655 = vrot.lane.b32.xlu0 %v3557, 96
  %v3656 = vpop.permute.xlu0 %3655
  %3657 = vrot.lane.b32.xlu0 %v3559, 96
  %v3658 = vpop.permute.xlu0 %3657
  %v3668 = vsel %vm2964, %v3524, %v3570
  %v3669 = vsel %vm2964, %v3526, %v3572
  %v3670 = vsel %vm2964, %v3528, %v3574
  %v3671 = vsel %vm2964, %v3536, %v3576
  %v3672 = vsel %vm2964, %v3538, %v3578
  %v3673 = vsel %vm2964, %v3540, %v3580
  %v3674 = vsel %vm2964, %v3548, %v3582
  %v3675 = vsel %vm2964, %v3550, %v3584
  %v3676 = vsel %vm2964, %v3552, %v3586
  %v3677 = vsel %vm3079, %v3668, %v3606
  %v3678 = vsel %vm3079, %v3669, %v3608
  %v3679 = vsel %vm3079, %v3670, %v3610
  %v3680 = vsel %vm3079, %v3671, %v3612
  %v3681 = vsel %vm3079, %v3672, %v3614
  %v3682 = vsel %vm3079, %v3673, %v3616
  %v3683 = vsel %vm3079, %v3674, %v3618
  %v3684 = vsel %vm3079, %v3675, %v3620
  %v3685 = vsel %vm3079, %v3676, %v3622
  %vm3686 = vcmask 785408
  %v3687 = vsel %vm3686, %v3677, %v3642
  %v3688 = vsel %vm3686, %v3678, %v3644
  %v3689 = vsel %vm3686, %v3679, %v3646
  %v3690 = vsel %vm3686, %v3680, %v3648
  %v3691 = vsel %vm3686, %v3681, %v3650
  %v3692 = vsel %vm3686, %v3682, %v3652
  %v3693 = vsel %vm3686, %v3683, %v3654
  %v3694 = vsel %vm3686, %v3684, %v3656
  %v3695 = vsel %vm3686, %v3685, %v3658
  %v3696 = vld [vmem:[%s5] sm:$0xff]
  %v3697 = vld [vmem:[%s5 + $0x8] sm:$0xff]
  %v3698 = vld [vmem:[%s5 + $0x10] sm:$0xff]
  %v3699 = vld [vmem:[%s5 + $0x18] sm:$0xff]
  %v3700 = vld [vmem:[%s5 + $0x20] sm:$0xff]
  %v3701 = vld [vmem:[%s5 + $0x28] sm:$0xff]
  %v3702 = vld [vmem:[%s5 + $0x30] sm:$0xff]
  %v3703 = vld [vmem:[%s5 + $0x38] sm:$0xff]
  %v3704 = vld [vmem:[%s5 + $0x40] sm:$0xff]
  %v3705 = vld [vmem:[%s5 + $0x48] sm:$0xff]
  %v3706 = vld [vmem:[%s5 + $0x50] sm:$0xff]
  %v3707 = vld [vmem:[%s5 + $0x58] sm:$0xff]
  %v3708 = vld [vmem:[%s5 + $0x60] sm:$0xff]
  %v3709 = vld [vmem:[%s5 + $0x68] sm:$0xff]
  %v3710 = vld [vmem:[%s5 + $0x70] sm:$0xff]
  %v3711 = vld [vmem:[%s5 + $0x78] sm:$0xff]
  %v3712 = vld [vmem:[%s6] sm:$0x1]
  %v3714 = vlaneseq
  %v3715 = vshrl.u32 %v3714, 7
  %v3716 = vsub.s32 0, %v3715
  %v3717 = vrot.slane %v3712, %v3716
  %3719 = vmatprep.subr.mxu0 0.0
  %3720 = vmatpush1.msra.mxu0 %v3696
  %3721 = vmatprep.subr.mxu0 0.0
  %3722 = vmatpush1.msra.mxu0 %v3697
  %3723 = vmatprep.subr.mxu0 0.0
  %3724 = vmatpush1.msra.mxu0 %v3698
  %3725 = vmatprep.subr.mxu0 0.0
  %3726 = vmatpush1.msra.mxu0 %v3699
  %3727 = vmatprep.subr.mxu0 0.0
  %3728 = vmatpush1.msra.mxu0 %v3700
  %3729 = vmatprep.subr.mxu0 0.0
  %3730 = vmatpush1.msra.mxu0 %v3701
  %3731 = vmatprep.subr.mxu0 0.0
  %3732 = vmatpush1.msra.mxu0 %v3702
  %3733 = vmatprep.subr.mxu0 0.0
  %3734 = vmatpush1.msra.mxu0 %v3703
  %3735 = vmatprep.subr.mxu0 0.0
  %3736 = vmatpush1.msra.mxu0 %v3704
  %3737 = vmatprep.subr.mxu0 0.0
  %3738 = vmatpush1.msra.mxu0 %v3705
  %3739 = vmatprep.subr.mxu0 0.0
  %3740 = vmatpush1.msra.mxu0 %v3706
  %3741 = vmatprep.subr.mxu0 0.0
  %3742 = vmatpush1.msra.mxu0 %v3707
  %3743 = vmatprep.subr.mxu0 0.0
  %3744 = vmatpush1.msra.mxu0 %v3708
  %3745 = vmatprep.subr.mxu0 0.0
  %3746 = vmatpush1.msra.mxu0 %v3709
  %3747 = vmatprep.subr.mxu0 0.0
  %3748 = vmatpush1.msra.mxu0 %v3710
  %3749 = vmatprep.subr.mxu0 0.0
  %3750 = vmatpush1.msra.mxu0 %v3711
  %3751 = vmatprep.subr.mxu0 0.0
  %3752 = vmatpush1.msra.mxu0 0.0
  %3753 = vmatprep.subr.mxu0 0.0
  %3754 = vmatpush1.msra.mxu0 0.0
  %3755 = vmatprep.subr.mxu0 0.0
  %3756 = vmatpush1.msra.mxu0 0.0
  %3757 = vmatprep.subr.mxu0 0.0
  %3758 = vmatpush1.msra.mxu0 0.0
  %3759 = vmatprep.subr.mxu0 0.0
  %3760 = vmatpush1.msra.mxu0 0.0
  %3761 = vmatprep.subr.mxu0 0.0
  %3762 = vmatpush1.msra.mxu0 0.0
  %3763 = vmatprep.subr.mxu0 0.0
  %3764 = vmatpush1.msra.mxu0 0.0
  %3765 = vmatprep.subr.mxu0 0.0
  %3766 = vmatpush1.msra.mxu0 0.0
  %3767 = vmatprep.subr.mxu0 0.0
  %3768 = vmatpush1.msra.mxu0 0.0
  %3769 = vmatprep.subr.mxu0 0.0
  %3770 = vmatpush1.msra.mxu0 0.0
  %3771 = vmatprep.subr.mxu0 0.0
  %3772 = vmatpush1.msra.mxu0 0.0
  %3773 = vmatprep.subr.mxu0 0.0
  %3774 = vmatpush1.msra.mxu0 0.0
  %3775 = vmatprep.subr.mxu0 0.0
  %3776 = vmatpush1.msra.mxu0 0.0
  %3777 = vmatprep.subr.mxu0 0.0
  %3778 = vmatpush1.msra.mxu0 0.0
  %3779 = vmatprep.subr.mxu0 0.0
  %3780 = vmatpush1.msra.mxu0 0.0
  %3781 = vmatprep.subr.mxu0 0.0
  %3782 = vmatpush1.msra.mxu0 0.0
  %3783 = vmatprep.mubr.f32.mxu0 0.0
  %3784 = vmatmul.mubr.f32.gmra.mrb[0].mxu0 %v3687
  %v3785 = vpop.f32.mrb[0].mxu0
  %v3786 = vadd.f32 %v3717, %v3785
  %v3787 = vpop.f32.mrb[0].mxu0
  %3788 = vmatprep.mubr.f32.mxu0 0.0
  %3789 = vmatmul.mubr.f32.gmra.mrb[0].mxu0 %v3688
  %v3790 = vpop.f32.mrb[0].mxu0
  %v3791 = vadd.f32 %v3717, %v3790
  %v3792 = vpop.f32.mrb[0].mxu0
  %3793 = vmatprep.mubr.f32.mxu0 0.0
  %3794 = vmatmul.mubr.f32.gmra.mrb[0].mxu0 %v3689
  %v3795 = vpop.f32.mrb[0].mxu0
  %v3796 = vadd.f32 %v3717, %v3795
  %v3797 = vpop.f32.mrb[0].mxu0
  %3798 = vmatprep.mubr.f32.mxu0 0.0
  %3799 = vmatmul.mubr.f32.gmra.mrb[0].mxu0 %v3690
  %v3800 = vpop.f32.mrb[0].mxu0
  %v3801 = vadd.f32 %v3717, %v3800
  %v3802 = vpop.f32.mrb[0].mxu0
  %3803 = vmatprep.mubr.f32.mxu0 0.0
  %3804 = vmatmul.mubr.f32.gmra.mrb[0].mxu0 %v3691
  %v3805 = vpop.f32.mrb[0].mxu0
  %v3806 = vadd.f32 %v3717, %v3805
  %v3807 = vpop.f32.mrb[0].mxu0
  %3808 = vmatprep.mubr.f32.mxu0 0.0
  %3809 = vmatmul.mubr.f32.gmra.mrb[0].mxu0 %v3692
  %v3810 = vpop.f32.mrb[0].mxu0
  %v3811 = vadd.f32 %v3717, %v3810
  %v3812 = vpop.f32.mrb[0].mxu0
  %3813 = vmatprep.mubr.f32.mxu0 0.0
  %3814 = vmatmul.mubr.f32.gmra.mrb[0].mxu0 %v3693
  %v3815 = vpop.f32.mrb[0].mxu0
  %v3816 = vadd.f32 %v3717, %v3815
  %v3817 = vpop.f32.mrb[0].mxu0
  %3818 = vmatprep.mubr.f32.mxu0 0.0
  %3819 = vmatmul.mubr.f32.gmra.mrb[0].mxu0 %v3694
  %v3820 = vpop.f32.mrb[0].mxu0
  %v3821 = vadd.f32 %v3717, %v3820
  %v3822 = vpop.f32.mrb[0].mxu0
  %3823 = vmatprep.mubr.f32.mxu0 0.0
  %3824 = vmatmul.mubr.f32.gmra.mrb[0].mxu0 %v3695
  %v3825 = vpop.f32.mrb[0].mxu0
  %v3826 = vadd.f32 %v3717, %v3825
  %v3827 = vpop.f32.mrb[0].mxu0
  %3828 = vdwg.mxu0
  %v3829 = vmax.f32 %v3786, 0.0
  %v3830 = vmax.f32 %v3791, 0.0
  %v3831 = vmax.f32 %v3796, 0.0
  %v3832 = vmax.f32 %v3801, 0.0
  %v3833 = vmax.f32 %v3806, 0.0
  %v3834 = vmax.f32 %v3811, 0.0
  %v3835 = vmax.f32 %v3816, 0.0
  %v3836 = vmax.f32 %v3821, 0.0
  %v3837 = vmax.f32 %v3826, 0.0
  %3842 = vrot.lane.b32.xlu0 %v3830, 64
  %v3843 = vpop.permute.xlu0 %3842
  %3844 = vrot.lane.b32.xlu0 %v3831, 64
  %v3845 = vpop.permute.xlu0 %3844
  %3846 = vrot.lane.b32.xlu0 %v3833, 64
  %v3847 = vpop.permute.xlu0 %3846
  %3848 = vrot.lane.b32.xlu0 %v3834, 64
  %v3849 = vpop.permute.xlu0 %3848
  %3856 = vrot.lane.b32.xlu0 %v3836, 64
  %v3857 = vpop.permute.xlu0 %3856
  %3858 = vrot.lane.b32.xlu0 %v3837, 64
  %v3859 = vpop.permute.xlu0 %3858
  %v3862 = vsel %vm3079, %v3829, %v3843
  %v3863 = vsel %vm3079, %v3830, %v3845
  %v3864 = vsel %vm3079, %v3832, %v3847
  %v3865 = vsel %vm3079, %v3833, %v3849
  %v3866 = vsel %vm3079, %v3835, %v3857
  %v3867 = vsel %vm3079, %v3836, %v3859
  %v3868 = vld [vmem:[%s7] sm:$0xff]
  %v3869 = vld [vmem:[%s7 + $0x8] sm:$0xff]
  %v3870 = vld [vmem:[%s7 + $0x10] sm:$0xff]
  %v3871 = vld [vmem:[%s7 + $0x18] sm:$0xff]
  %v3872 = vld [vmem:[%s7 + $0x20] sm:$0xff]
  %v3873 = vld [vmem:[%s7 + $0x28] sm:$0xff]
  %v3874 = vld [vmem:[%s7 + $0x30] sm:$0xff]
  %v3875 = vld [vmem:[%s7 + $0x38] sm:$0xff]
  %v3876 = vld [vmem:[%s7 + $0x40] sm:$0xff]
  %v3877 = vld [vmem:[%s7 + $0x48] sm:$0xff]
  %v3878 = vld [vmem:[%s7 + $0x50] sm:$0xff]
  %v3879 = vld [vmem:[%s7 + $0x58] sm:$0xff]
  %v3880 = vld [vmem:[%s7 + $0x60] sm:$0xff]
  %v3881 = vld [vmem:[%s7 + $0x68] sm:$0xff]
  %v3882 = vld [vmem:[%s7 + $0x70] sm:$0xff]
  %v3883 = vld [vmem:[%s7 + $0x78] sm:$0xff]
  %v3884 = vld [vmem:[%s7 + $0x80] sm:$0xff]
  %v3885 = vld [vmem:[%s7 + $0x88] sm:$0xff]
  %v3886 = vld [vmem:[%s7 + $0x90] sm:$0xff]
  %v3887 = vld [vmem:[%s7 + $0x98] sm:$0xff]
  %v3888 = vld [vmem:[%s7 + $0xa0] sm:$0xff]
  %v3889 = vld [vmem:[%s7 + $0xa8] sm:$0xff]
  %v3890 = vld [vmem:[%s7 + $0xb0] sm:$0xff]
  %v3891 = vld [vmem:[%s7 + $0xb8] sm:$0xff]
  %v3892 = vld [vmem:[%s7 + $0xc0] sm:$0xff]
  %v3893 = vld [vmem:[%s7 + $0xc8] sm:$0xff]
  %v3894 = vld [vmem:[%s7 + $0xd0] sm:$0xff]
  %v3895 = vld [vmem:[%s7 + $0xd8] sm:$0xff]
  %v3896 = vld [vmem:[%s7 + $0xe0] sm:$0xff]
  %v3897 = vld [vmem:[%s7 + $0xe8] sm:$0xff]
  %v3898 = vld [vmem:[%s7 + $0xf0] sm:$0xff]
  %v3899 = vld [vmem:[%s7 + $0xf8] sm:$0xff]
  %v3900 = vld [vmem:[%s8] sm:$0x1]
  %v3902 = vlaneseq
  %v3903 = vshrl.u32 %v3902, 7
  %v3904 = vsub.s32 0, %v3903
  %v3905 = vrot.slane %v3900, %v3904
  %3907 = vmatprep.subr.mxu0 0.0
  %3908 = vmatpush1.msra.mxu0 %v3868
  %3909 = vmatprep.subr.mxu0 0.0
  %3910 = vmatpush1.msra.mxu0 %v3869
  %3911 = vmatprep.subr.mxu0 0.0
  %3912 = vmatpush1.msra.mxu0 %v3870
  %3913 = vmatprep.subr.mxu0 0.0
  %3914 = vmatpush1.msra.mxu0 %v3871
  %3915 = vmatprep.subr.mxu0 0.0
  %3916 = vmatpush1.msra.mxu0 %v3872
  %3917 = vmatprep.subr.mxu0 0.0
  %3918 = vmatpush1.msra.mxu0 %v3873
  %3919 = vmatprep.subr.mxu0 0.0
  %3920 = vmatpush1.msra.mxu0 %v3874
  %3921 = vmatprep.subr.mxu0 0.0
  %3922 = vmatpush1.msra.mxu0 %v3875
  %3923 = vmatprep.subr.mxu0 0.0
  %3924 = vmatpush1.msra.mxu0 %v3876
  %3925 = vmatprep.subr.mxu0 0.0
  %3926 = vmatpush1.msra.mxu0 %v3877
  %3927 = vmatprep.subr.mxu0 0.0
  %3928 = vmatpush1.msra.mxu0 %v3878
  %3929 = vmatprep.subr.mxu0 0.0
  %3930 = vmatpush1.msra.mxu0 %v3879
  %3931 = vmatprep.subr.mxu0 0.0
  %3932 = vmatpush1.msra.mxu0 %v3880
  %3933 = vmatprep.subr.mxu0 0.0
  %3934 = vmatpush1.msra.mxu0 %v3881
  %3935 = vmatprep.subr.mxu0 0.0
  %3936 = vmatpush1.msra.mxu0 %v3882
  %3937 = vmatprep.subr.mxu0 0.0
  %3938 = vmatpush1.msra.mxu0 %v3883
  %3939 = vmatprep.subr.mxu0 0.0
  %3940 = vmatpush1.msra.mxu0 %v3884
  %3941 = vmatprep.subr.mxu0 0.0
  %3942 = vmatpush1.msra.mxu0 %v3885
  %3943 = vmatprep.subr.mxu0 0.0
  %3944 = vmatpush1.msra.mxu0 %v3886
  %3945 = vmatprep.subr.mxu0 0.0
  %3946 = vmatpush1.msra.mxu0 %v3887
  %3947 = vmatprep.subr.mxu0 0.0
  %3948 = vmatpush1.msra.mxu0 %v3888
  %3949 = vmatprep.subr.mxu0 0.0
  %3950 = vmatpush1.msra.mxu0 %v3889
  %3951 = vmatprep.subr.mxu0 0.0
  %3952 = vmatpush1.msra.mxu0 %v3890
  %3953 = vmatprep.subr.mxu0 0.0
  %3954 = vmatpush1.msra.mxu0 %v3891
  %3955 = vmatprep.subr.mxu0 0.0
  %3956 = vmatpush1.msra.mxu0 %v3892
  %3957 = vmatprep.subr.mxu0 0.0
  %3958 = vmatpush1.msra.mxu0 %v3893
  %3959 = vmatprep.subr.mxu0 0.0
  %3960 = vmatpush1.msra.mxu0 %v3894
  %3961 = vmatprep.subr.mxu0 0.0
  %3962 = vmatpush1.msra.mxu0 %v3895
  %3963 = vmatprep.subr.mxu0 0.0
  %3964 = vmatpush1.msra.mxu0 %v3896
  %3965 = vmatprep.subr.mxu0 0.0
  %3966 = vmatpush1.msra.mxu0 %v3897
  %3967 = vmatprep.subr.mxu0 0.0
  %3968 = vmatpush1.msra.mxu0 %v3898
  %3969 = vmatprep.subr.mxu0 0.0
  %3970 = vmatpush1.msra.mxu0 %v3899
  %3971 = vmatprep.mubr.f32.mxu0 %v3864
  %3972 = vmatmul.mubr.f32.gmra.mrb[0].mxu0 %v3862
  %v3973 = vpop.f32.mrb[0].mxu0
  %v3974 = vadd.f32 %v3905, %v3973
  %v3975 = vpop.f32.mrb[0].mxu0
  %3976 = vmatprep.mubr.f32.mxu0 %v3865
  %3977 = vmatmul.mubr.f32.gmra.mrb[0].mxu0 %v3863
  %v3978 = vpop.f32.mrb[0].mxu0
  %v3979 = vadd.f32 %v3905, %v3978
  %v3980 = vpop.f32.mrb[0].mxu0
  %3981 = vmatprep.mubr.f32.mxu0 %v3866
  %3982 = vmatmul.mubr.f32.gmra.mrb[0].mxu0 %v3864
  %v3983 = vpop.f32.mrb[0].mxu0
  %v3984 = vadd.f32 %v3905, %v3983
  %v3985 = vpop.f32.mrb[0].mxu0
  %3986 = vmatprep.mubr.f32.mxu0 %v3867
  %3987 = vmatmul.mubr.f32.gmra.mrb[0].mxu0 %v3865
  %v3988 = vpop.f32.mrb[0].mxu0
  %v3989 = vadd.f32 %v3905, %v3988
  %v3990 = vpop.f32.mrb[0].mxu0
  %3991 = vdwg.mxu0
  %v3992 = vmax.f32 %v3974, 0.0
  %v3993 = vmax.f32 %v3979, 0.0
  %v3994 = vmax.f32 %v3984, 0.0
  %v3995 = vmax.f32 %v3989, 0.0
  %3997 = vrot.lane.b32.xlu0 %v3993, 64
  %v3998 = vpop.permute.xlu0 %3997
  %4001 = vrot.lane.b32.xlu0 %v3995, 64
  %v4002 = vpop.permute.xlu0 %4001
  %v4004 = vsel %vm3079, %v3992, %v3998
  %v4005 = vsel %vm3079, %v3994, %v4002
  %v4006 = vld [vmem:[%s9] sm:$0xff]
  %v4007 = vld [vmem:[%s9 + $0x8] sm:$0xff]
  %v4008 = vld [vmem:[%s9 + $0x10] sm:$0xff]
  %v4009 = vld [vmem:[%s9 + $0x18] sm:$0xff]
  %v4010 = vld [vmem:[%s9 + $0x20] sm:$0xff]
  %v4011 = vld [vmem:[%s9 + $0x28] sm:$0xff]
  %v4012 = vld [vmem:[%s9 + $0x30] sm:$0xff]
  %v4013 = vld [vmem:[%s9 + $0x38] sm:$0xff]
  %v4014 = vld [vmem:[%s9 + $0x40] sm:$0xff]
  %v4015 = vld [vmem:[%s9 + $0x48] sm:$0xff]
  %v4016 = vld [vmem:[%s9 + $0x50] sm:$0xff]
  %v4017 = vld [vmem:[%s9 + $0x58] sm:$0xff]
  %v4018 = vld [vmem:[%s9 + $0x60] sm:$0xff]
  %v4019 = vld [vmem:[%s9 + $0x68] sm:$0xff]
  %v4020 = vld [vmem:[%s9 + $0x70] sm:$0xff]
  %v4021 = vld [vmem:[%s9 + $0x78] sm:$0xff]
  %v4022 = vld [vmem:[%s9 + $0x80] sm:$0xff]
  %v4023 = vld [vmem:[%s9 + $0x88] sm:$0xff]
  %v4024 = vld [vmem:[%s9 + $0x90] sm:$0xff]
  %v4025 = vld [vmem:[%s9 + $0x98] sm:$0xff]
  %v4026 = vld [vmem:[%s9 + $0xa0] sm:$0xff]
  %v4027 = vld [vmem:[%s9 + $0xa8] sm:$0xff]
  %v4028 = vld [vmem:[%s9 + $0xb0] sm:$0xff]
  %v4029 = vld [vmem:[%s9 + $0xb8] sm:$0xff]
  %v4030 = vld [vmem:[%s9 + $0xc0] sm:$0xff]
  %v4031 = vld [vmem:[%s9 + $0xc8] sm:$0xff]
  %v4032 = vld [vmem:[%s9 + $0xd0] sm:$0xff]
  %v4033 = vld [vmem:[%s9 + $0xd8] sm:$0xff]
  %v4034 = vld [vmem:[%s9 + $0xe0] sm:$0xff]
  %v4035 = vld [vmem:[%s9 + $0xe8] sm:$0xff]
  %v4036 = vld [vmem:[%s9 + $0xf0] sm:$0xff]
  %v4037 = vld [vmem:[%s9 + $0xf8] sm:$0xff]
  %v4038 = vld [vmem:[%s9 + $0x100] sm:$0xff]
  %v4039 = vld [vmem:[%s9 + $0x108] sm:$0xff]
  %v4040 = vld [vmem:[%s9 + $0x110] sm:$0xff]
  %v4041 = vld [vmem:[%s9 + $0x118] sm:$0xff]
  %v4042 = vld [vmem:[%s9 + $0x120] sm:$0xff]
  %v4043 = vld [vmem:[%s9 + $0x128] sm:$0xff]
  %v4044 = vld [vmem:[%s9 + $0x130] sm:$0xff]
  %v4045 = vld [vmem:[%s9 + $0x138] sm:$0xff]
  %v4046 = vld [vmem:[%s9 + $0x140] sm:$0xff]
  %v4047 = vld [vmem:[%s9 + $0x148] sm:$0xff]
  %v4048 = vld [vmem:[%s9 + $0x150] sm:$0xff]
  %v4049 = vld [vmem:[%s9 + $0x158] sm:$0xff]
  %v4050 = vld [vmem:[%s9 + $0x160] sm:$0xff]
  %v4051 = vld [vmem:[%s9 + $0x168] sm:$0xff]
  %v4052 = vld [vmem:[%s9 + $0x170] sm:$0xff]
  %v4053 = vld [vmem:[%s9 + $0x178] sm:$0xff]
  %v4054 = vld [vmem:[%s9 + $0x180] sm:$0xff]
  %v4055 = vld [vmem:[%s9 + $0x188] sm:$0xff]
  %v4056 = vld [vmem:[%s9 + $0x190] sm:$0xff]
  %v4057 = vld [vmem:[%s9 + $0x198] sm:$0xff]
  %v4058 = vld [vmem:[%s9 + $0x1a0] sm:$0xff]
  %v4059 = vld [vmem:[%s9 + $0x1a8] sm:$0xff]
  %v4060 = vld [vmem:[%s9 + $0x1b0] sm:$0xff]
  %v4061 = vld [vmem:[%s9 + $0x1b8] sm:$0xff]
  %v4062 = vld [vmem:[%s9 + $0x1c0] sm:$0xff]
  %v4063 = vld [vmem:[%s9 + $0x1c8] sm:$0xff]
  %v4064 = vld [vmem:[%s9 + $0x1d0] sm:$0xff]
  %v4065 = vld [vmem:[%s9 + $0x1d8] sm:$0xff]
  %v4066 = vld [vmem:[%s9 + $0x1e0] sm:$0xff]
  %v4067 = vld [vmem:[%s9 + $0x1e8] sm:$0xff]
  %v4068 = vld [vmem:[%s9 + $0x1f0] sm:$0xff]
  %v4069 = vld [vmem:[%s9 + $0x1f8] sm:$0xff]
  %v4070 = vld [vmem:[%s10] sm:$0x3]
  %v4072 = vlaneseq
  %v4073 = vshrl.u32 %v4072, 7
  %v4074 = vsub.s32 0, %v4073
  %v4075 = vrot.slane %v4070, %v4074
  %v4076 = vlaneseq
  %v4077 = vshrl.u32 %v4076, 7
  %v4078 = vsub.s32 1, %v4077
  %v4079 = vrot.slane %v4070, %v4078
  %4082 = vmatprep.subr.mxu0 %v4007
  %4083 = vmatpush1.msra.mxu0 %v4006
  %4084 = vmatprep.subr.mxu0 %v4009
  %4085 = vmatpush1.msra.mxu0 %v4008
  %4086 = vmatprep.subr.mxu0 %v4011
  %4087 = vmatpush1.msra.mxu0 %v4010
  %4088 = vmatprep.subr.mxu0 %v4013
  %4089 = vmatpush1.msra.mxu0 %v4012
  %4090 = vmatprep.subr.mxu0 %v4015
  %4091 = vmatpush1.msra.mxu0 %v4014
  %4092 = vmatprep.subr.mxu0 %v4017
  %4093 = vmatpush1.msra.mxu0 %v4016
  %4094 = vmatprep.subr.mxu0 %v4019
  %4095 = vmatpush1.msra.mxu0 %v4018
  %4096 = vmatprep.subr.mxu0 %v4021
  %4097 = vmatpush1.msra.mxu0 %v4020
  %4098 = vmatprep.subr.mxu0 %v4023
  %4099 = vmatpush1.msra.mxu0 %v4022
  %4100 = vmatprep.subr.mxu0 %v4025
  %4101 = vmatpush1.msra.mxu0 %v4024
  %4102 = vmatprep.subr.mxu0 %v4027
  %4103 = vmatpush1.msra.mxu0 %v4026
  %4104 = vmatprep.subr.mxu0 %v4029
  %4105 = vmatpush1.msra.mxu0 %v4028
  %4106 = vmatprep.subr.mxu0 %v4031
  %4107 = vmatpush1.msra.mxu0 %v4030
  %4108 = vmatprep.subr.mxu0 %v4033
  %4109 = vmatpush1.msra.mxu0 %v4032
  %4110 = vmatprep.subr.mxu0 %v4035
  %4111 = vmatpush1.msra.mxu0 %v4034
  %4112 = vmatprep.subr.mxu0 %v4037
  %4113 = vmatpush1.msra.mxu0 %v4036
  %4114 = vmatprep.subr.mxu0 %v4039
  %4115 = vmatpush1.msra.mxu0 %v4038
  %4116 = vmatprep.subr.mxu0 %v4041
  %4117 = vmatpush1.msra.mxu0 %v4040
  %4118 = vmatprep.subr.mxu0 %v4043
  %4119 = vmatpush1.msra.mxu0 %v4042
  %4120 = vmatprep.subr.mxu0 %v4045
  %4121 = vmatpush1.msra.mxu0 %v4044
  %4122 = vmatprep.subr.mxu0 %v4047
  %4123 = vmatpush1.msra.mxu0 %v4046
  %4124 = vmatprep.subr.mxu0 %v4049
  %4125 = vmatpush1.msra.mxu0 %v4048
  %4126 = vmatprep.subr.mxu0 %v4051
  %4127 = vmatpush1.msra.mxu0 %v4050
  %4128 = vmatprep.subr.mxu0 %v4053
  %4129 = vmatpush1.msra.mxu0 %v4052
  %4130 = vmatprep.subr.mxu0 %v4055
  %4131 = vmatpush1.msra.mxu0 %v4054
  %4132 = vmatprep.subr.mxu0 %v4057
  %4133 = vmatpush1.msra.mxu0 %v4056
  %4134 = vmatprep.subr.mxu0 %v4059
  %4135 = vmatpush1.msra.mxu0 %v4058
  %4136 = vmatprep.subr.mxu0 %v4061
  %4137 = vmatpush1.msra.mxu0 %v4060
  %4138 = vmatprep.subr.mxu0 %v4063
  %4139 = vmatpush1.msra.mxu0 %v4062
  %4140 = vmatprep.subr.mxu0 %v4065
  %4141 = vmatpush1.msra.mxu0 %v4064
  %4142 = vmatprep.subr.mxu0 %v4067
  %4143 = vmatpush1.msra.mxu0 %v4066
  %4144 = vmatprep.subr.mxu0 %v4069
  %4145 = vmatpush1.msra.mxu0 %v4068
  %4146 = vmatprep.mubr.f32.mxu0 %v4005
  %4147 = vmatmul.mubr.f32.gmra.mrb[0].mxu0 %v4004
  %v4148 = vpop.f32.mrb[0].mxu0
  %v4149 = vadd.f32 %v4075, %v4148
  %v4150 = vpop.f32.mrb[0].mxu0
  %v4151 = vadd.f32 %v4079, %v4150
  %4152 = vdwg.mxu0
  %v4153 = vmax.f32 %v4149, 0.0
  %v4154 = vmax.f32 %v4151, 0.0
  %v4155 = vld [vmem:[%s11] sm:$0xff]
  %v4156 = vld [vmem:[%s11 + $0x8] sm:$0xff]
  %v4157 = vld [vmem:[%s11 + $0x10] sm:$0xff]
  %v4158 = vld [vmem:[%s11 + $0x18] sm:$0xff]
  %v4159 = vld [vmem:[%s11 + $0x20] sm:$0xff]
  %v4160 = vld [vmem:[%s11 + $0x28] sm:$0xff]
  %v4161 = vld [vmem:[%s11 + $0x30] sm:$0xff]
  %v4162 = vld [vmem:[%s11 + $0x38] sm:$0xff]
  %v4163 = vld [vmem:[%s11 + $0x40] sm:$0xff]
  %v4164 = vld [vmem:[%s11 + $0x48] sm:$0xff]
  %v4165 = vld [vmem:[%s11 + $0x50] sm:$0xff]
  %v4166 = vld [vmem:[%s11 + $0x58] sm:$0xff]
  %v4167 = vld [vmem:[%s11 + $0x60] sm:$0xff]
  %v4168 = vld [vmem:[%s11 + $0x68] sm:$0xff]
  %v4169 = vld [vmem:[%s11 + $0x70] sm:$0xff]
  %v4170 = vld [vmem:[%s11 + $0x78] sm:$0xff]
  %v4171 = vld [vmem:[%s11 + $0x80] sm:$0xff]
  %v4172 = vld [vmem:[%s11 + $0x88] sm:$0xff]
  %v4173 = vld [vmem:[%s11 + $0x90] sm:$0xff]
  %v4174 = vld [vmem:[%s11 + $0x98] sm:$0xff]
  %v4175 = vld [vmem:[%s11 + $0xa0] sm:$0xff]
  %v4176 = vld [vmem:[%s11 + $0xa8] sm:$0xff]
  %v4177 = vld [vmem:[%s11 + $0xb0] sm:$0xff]
  %v4178 = vld [vmem:[%s11 + $0xb8] sm:$0xff]
  %v4179 = vld [vmem:[%s11 + $0xc0] sm:$0xff]
  %v4180 = vld [vmem:[%s11 + $0xc8] sm:$0xff]
  %v4181 = vld [vmem:[%s11 + $0xd0] sm:$0xff]
  %v4182 = vld [vmem:[%s11 + $0xd8] sm:$0xff]
  %v4183 = vld [vmem:[%s11 + $0xe0] sm:$0xff]
  %v4184 = vld [vmem:[%s11 + $0xe8] sm:$0xff]
  %v4185 = vld [vmem:[%s11 + $0xf0] sm:$0xff]
  %v4186 = vld [vmem:[%s11 + $0xf8] sm:$0xff]
  %v4187 = vld [vmem:[%s12] sm:$0x1]
  %v4189 = vlaneseq
  %v4190 = vshrl.u32 %v4189, 7
  %v4191 = vsub.s32 0, %v4190
  %v4192 = vrot.slane %v4187, %v4191
  %4194 = vmatprep.subr.mxu0 0.0
  %4195 = vmatpush1.msra.mxu0 %v4155
  %4196 = vmatprep.subr.mxu0 0.0
  %4197 = vmatpush1.msra.mxu0 %v4156
  %4198 = vmatprep.subr.mxu0 0.0
  %4199 = vmatpush1.msra.mxu0 %v4157
  %4200 = vmatprep.subr.mxu0 0.0
  %4201 = vmatpush1.msra.mxu0 %v4158
  %4202 = vmatprep.subr.mxu0 0.0
  %4203 = vmatpush1.msra.mxu0 %v4159
  %4204 = vmatprep.subr.mxu0 0.0
  %4205 = vmatpush1.msra.mxu0 %v4160
  %4206 = vmatprep.subr.mxu0 0.0
  %4207 = vmatpush1.msra.mxu0 %v4161
  %4208 = vmatprep.subr.mxu0 0.0
  %4209 = vmatpush1.msra.mxu0 %v4162
  %4210 = vmatprep.subr.mxu0 0.0
  %4211 = vmatpush1.msra.mxu0 %v4163
  %4212 = vmatprep.subr.mxu0 0.0
  %4213 = vmatpush1.msra.mxu0 %v4164
  %4214 = vmatprep.subr.mxu0 0.0
  %4215 = vmatpush1.msra.mxu0 %v4165
  %4216 = vmatprep.subr.mxu0 0.0
  %4217 = vmatpush1.msra.mxu0 %v4166
  %4218 = vmatprep.subr.mxu0 0.0
  %4219 = vmatpush1.msra.mxu0 %v4167
  %4220 = vmatprep.subr.mxu0 0.0
  %4221 = vmatpush1.msra.mxu0 %v4168
  %4222 = vmatprep.subr.mxu0 0.0
  %4223 = vmatpush1.msra.mxu0 %v4169
  %4224 = vmatprep.subr.mxu0 0.0
  %4225 = vmatpush1.msra.mxu0 %v4170
  %4226 = vmatprep.subr.mxu0 0.0
  %4227 = vmatpush1.msra.mxu0 %v4171
  %4228 = vmatprep.subr.mxu0 0.0
  %4229 = vmatpush1.msra.mxu0 %v4172
  %4230 = vmatprep.subr.mxu0 0.0
  %4231 = vmatpush1.msra.mxu0 %v4173
  %4232 = vmatprep.subr.mxu0 0.0
  %4233 = vmatpush1.msra.mxu0 %v4174
  %4234 = vmatprep.subr.mxu0 0.0
  %4235 = vmatpush1.msra.mxu0 %v4175
  %4236 = vmatprep.subr.mxu0 0.0
  %4237 = vmatpush1.msra.mxu0 %v4176
  %4238 = vmatprep.subr.mxu0 0.0
  %4239 = vmatpush1.msra.mxu0 %v4177
  %4240 = vmatprep.subr.mxu0 0.0
  %4241 = vmatpush1.msra.mxu0 %v4178
  %4242 = vmatprep.subr.mxu0 0.0
  %4243 = vmatpush1.msra.mxu0 %v4179
  %4244 = vmatprep.subr.mxu0 0.0
  %4245 = vmatpush1.msra.mxu0 %v4180
  %4246 = vmatprep.subr.mxu0 0.0
  %4247 = vmatpush1.msra.mxu0 %v4181
  %4248 = vmatprep.subr.mxu0 0.0
  %4249 = vmatpush1.msra.mxu0 %v4182
  %4250 = vmatprep.subr.mxu0 0.0
  %4251 = vmatpush1.msra.mxu0 %v4183
  %4252 = vmatprep.subr.mxu0 0.0
  %4253 = vmatpush1.msra.mxu0 %v4184
  %4254 = vmatprep.subr.mxu0 0.0
  %4255 = vmatpush1.msra.mxu0 %v4185
  %4256 = vmatprep.subr.mxu0 0.0
  %4257 = vmatpush1.msra.mxu0 %v4186
  %4258 = vmatprep.mubr.f32.mxu0 %v4154
  %4259 = vmatmul.mubr.f32.gmra.mrb[0].mxu0 %v4153
  %v4260 = vpop.f32.mrb[0].mxu0
  %v4261 = vadd.f32 %v4192, %v4260
  %v4262 = vpop.f32.mrb[0].mxu0
  %4263 = vdwg.mxu0
  %vm4264 = vcmp.ge.f32.partialorder %v4261, 0.0
  %v4265 = vmul.f32 %v4261, 0.01
  %v4266 = vsel %vm4264, %v4261, %v4265
  %v4267 = vld [vmem:[%s13] sm:$0xff]
  %v4268 = vld [vmem:[%s13 + $0x8] sm:$0xff]
  %v4269 = vld [vmem:[%s13 + $0x10] sm:$0xff]
  %v4270 = vld [vmem:[%s13 + $0x18] sm:$0xff]
  %v4271 = vld [vmem:[%s13 + $0x20] sm:$0xff]
  %v4272 = vld [vmem:[%s13 + $0x28] sm:$0xff]
  %v4273 = vld [vmem:[%s13 + $0x30] sm:$0xff]
  %v4274 = vld [vmem:[%s13 + $0x38] sm:$0xff]
  %v4275 = vld [vmem:[%s13 + $0x40] sm:$0xff]
  %v4276 = vld [vmem:[%s13 + $0x48] sm:$0xff]
  %v4277 = vld [vmem:[%s13 + $0x50] sm:$0xff]
  %v4278 = vld [vmem:[%s13 + $0x58] sm:$0xff]
  %v4279 = vld [vmem:[%s13 + $0x60] sm:$0xff]
  %v4280 = vld [vmem:[%s13 + $0x68] sm:$0xff]
  %v4281 = vld [vmem:[%s13 + $0x70] sm:$0xff]
  %v4282 = vld [vmem:[%s13 + $0x78] sm:$0xff]
  %v4283 = vld [vmem:[%s14] sm:$0x1]
  %v4285 = vlaneseq
  %v4286 = vshrl.u32 %v4285, 7
  %v4287 = vsub.s32 0, %v4286
  %v4288 = vrot.slane %v4283, %v4287
  %4290 = vmatprep.subr.mxu0 0.0
  %4291 = vmatpush1.msra.mxu0 %v4267
  %4292 = vmatprep.subr.mxu0 0.0
  %4293 = vmatpush1.msra.mxu0 %v4268
  %4294 = vmatprep.subr.mxu0 0.0
  %4295 = vmatpush1.msra.mxu0 %v4269
  %4296 = vmatprep.subr.mxu0 0.0
  %4297 = vmatpush1.msra.mxu0 %v4270
  %4298 = vmatprep.subr.mxu0 0.0
  %4299 = vmatpush1.msra.mxu0 %v4271
  %4300 = vmatprep.subr.mxu0 0.0
  %4301 = vmatpush1.msra.mxu0 %v4272
  %4302 = vmatprep.subr.mxu0 0.0
  %4303 = vmatpush1.msra.mxu0 %v4273
  %4304 = vmatprep.subr.mxu0 0.0
  %4305 = vmatpush1.msra.mxu0 %v4274
  %4306 = vmatprep.subr.mxu0 0.0
  %4307 = vmatpush1.msra.mxu0 %v4275
  %4308 = vmatprep.subr.mxu0 0.0
  %4309 = vmatpush1.msra.mxu0 %v4276
  %4310 = vmatprep.subr.mxu0 0.0
  %4311 = vmatpush1.msra.mxu0 %v4277
  %4312 = vmatprep.subr.mxu0 0.0
  %4313 = vmatpush1.msra.mxu0 %v4278
  %4314 = vmatprep.subr.mxu0 0.0
  %4315 = vmatpush1.msra.mxu0 %v4279
  %4316 = vmatprep.subr.mxu0 0.0
  %4317 = vmatpush1.msra.mxu0 %v4280
  %4318 = vmatprep.subr.mxu0 0.0
  %4319 = vmatpush1.msra.mxu0 %v4281
  %4320 = vmatprep.subr.mxu0 0.0
  %4321 = vmatpush1.msra.mxu0 %v4282
  %4322 = vmatprep.subr.mxu0 0.0
  %4323 = vmatpush1.msra.mxu0 0.0
  %4324 = vmatprep.subr.mxu0 0.0
  %4325 = vmatpush1.msra.mxu0 0.0
  %4326 = vmatprep.subr.mxu0 0.0
  %4327 = vmatpush1.msra.mxu0 0.0
  %4328 = vmatprep.subr.mxu0 0.0
  %4329 = vmatpush1.msra.mxu0 0.0
  %4330 = vmatprep.subr.mxu0 0.0
  %4331 = vmatpush1.msra.mxu0 0.0
  %4332 = vmatprep.subr.mxu0 0.0
  %4333 = vmatpush1.msra.mxu0 0.0
  %4334 = vmatprep.subr.mxu0 0.0
  %4335 = vmatpush1.msra.mxu0 0.0
  %4336 = vmatprep.subr.mxu0 0.0
  %4337 = vmatpush1.msra.mxu0 0.0
  %4338 = vmatprep.subr.mxu0 0.0
  %4339 = vmatpush1.msra.mxu0 0.0
  %4340 = vmatprep.subr.mxu0 0.0
  %4341 = vmatpush1.msra.mxu0 0.0
  %4342 = vmatprep.subr.mxu0 0.0
  %4343 = vmatpush1.msra.mxu0 0.0
  %4344 = vmatprep.subr.mxu0 0.0
  %4345 = vmatpush1.msra.mxu0 0.0
  %4346 = vmatprep.subr.mxu0 0.0
  %4347 = vmatpush1.msra.mxu0 0.0
  %4348 = vmatprep.subr.mxu0 0.0
  %4349 = vmatpush1.msra.mxu0 0.0
  %4350 = vmatprep.subr.mxu0 0.0
  %4351 = vmatpush1.msra.mxu0 0.0
  %4352 = vmatprep.subr.mxu0 0.0
  %4353 = vmatpush1.msra.mxu0 0.0
  %4354 = vmatprep.mubr.f32.mxu0 0.0
  %4355 = vmatmul.mubr.f32.gmra.mrb[0].mxu0 %v4266
  %v4356 = vpop.f32.mrb[0].mxu0
  %v4357 = vadd.f32 %v4288, %v4356
  %v4358 = vpop.f32.mrb[0].mxu0
  %4359 = vdwg.mxu0
  %v4360 = vtanh.pop %v4357
  %v4361 = vld [vmem:[%s15] sm:$0xff]
  %v4362 = vld [vmem:[%s15 + $0x8] sm:$0xff]
  %v4363 = vld [vmem:[%s15 + $0x10] sm:$0xff]
  %v4364 = vld [vmem:[%s15 + $0x18] sm:$0xff]
  %v4365 = vld [vmem:[%s15 + $0x20] sm:$0xff]
  %v4366 = vld [vmem:[%s15 + $0x28] sm:$0xff]
  %v4367 = vld [vmem:[%s15 + $0x30] sm:$0xff]
  %v4368 = vld [vmem:[%s15 + $0x38] sm:$0xff]
  %v4369 = vld [vmem:[%s16] sm:$0x1]
  %v4371 = vlaneseq
  %v4372 = vshrl.u32 %v4371, 7
  %v4373 = vsub.s32 0, %v4372
  %v4374 = vrot.slane %v4369, %v4373
  %v4377 = vsel %vm3079, %v4360, 0
  %4379 = vmatprep.subr.mxu0 0.0
  %4380 = vmatpush1.msra.mxu0 %v4361
  %4381 = vmatprep.subr.mxu0 0.0
  %4382 = vmatpush1.msra.mxu0 %v4362
  %4383 = vmatprep.subr.mxu0 0.0
  %4384 = vmatpush1.msra.mxu0 %v4363
  %4385 = vmatprep.subr.mxu0 0.0
  %4386 = vmatpush1.msra.mxu0 %v4364
  %4387 = vmatprep.subr.mxu0 0.0
  %4388 = vmatpush1.msra.mxu0 %v4365
  %4389 = vmatprep.subr.mxu0 0.0
  %4390 = vmatpush1.msra.mxu0 %v4366
  %4391 = vmatprep.subr.mxu0 0.0
  %4392 = vmatpush1.msra.mxu0 %v4367
  %4393 = vmatprep.subr.mxu0 0.0
  %4394 = vmatpush1.msra.mxu0 %v4368
  %4395 = vmatprep.subr.mxu0 0.0
  %4396 = vmatpush1.msra.mxu0 0.0
  %4397 = vmatprep.subr.mxu0 0.0
  %4398 = vmatpush1.msra.mxu0 0.0
  %4399 = vmatprep.subr.mxu0 0.0
  %4400 = vmatpush1.msra.mxu0 0.0
  %4401 = vmatprep.subr.mxu0 0.0
  %4402 = vmatpush1.msra.mxu0 0.0
  %4403 = vmatprep.subr.mxu0 0.0
  %4404 = vmatpush1.msra.mxu0 0.0
  %4405 = vmatprep.subr.mxu0 0.0
  %4406 = vmatpush1.msra.mxu0 0.0
  %4407 = vmatprep.subr.mxu0 0.0
  %4408 = vmatpush1.msra.mxu0 0.0
  %4409 = vmatprep.subr.mxu0 0.0
  %4410 = vmatpush1.msra.mxu0 0.0
  %4411 = vmatprep.subr.mxu0 0.0
  %4412 = vmatpush1.msra.mxu0 0.0
  %4413 = vmatprep.subr.mxu0 0.0
  %4414 = vmatpush1.msra.mxu0 0.0
  %4415 = vmatprep.subr.mxu0 0.0
  %4416 = vmatpush1.msra.mxu0 0.0
  %4417 = vmatprep.subr.mxu0 0.0
  %4418 = vmatpush1.msra.mxu0 0.0
  %4419 = vmatprep.subr.mxu0 0.0
  %4420 = vmatpush1.msra.mxu0 0.0
  %4421 = vmatprep.subr.mxu0 0.0
  %4422 = vmatpush1.msra.mxu0 0.0
  %4423 = vmatprep.subr.mxu0 0.0
  %4424 = vmatpush1.msra.mxu0 0.0
  %4425 = vmatprep.subr.mxu0 0.0
  %4426 = vmatpush1.msra.mxu0 0.0
  %4427 = vmatprep.subr.mxu0 0.0
  %4428 = vmatpush1.msra.mxu0 0.0
  %4429 = vmatprep.subr.mxu0 0.0
  %4430 = vmatpush1.msra.mxu0 0.0
  %4431 = vmatprep.subr.mxu0 0.0
  %4432 = vmatpush1.msra.mxu0 0.0
  %4433 = vmatprep.subr.mxu0 0.0
  %4434 = vmatpush1.msra.mxu0 0.0
  %4435 = vmatprep.subr.mxu0 0.0
  %4436 = vmatpush1.msra.mxu0 0.0
  %4437 = vmatprep.subr.mxu0 0.0
  %4438 = vmatpush1.msra.mxu0 0.0
  %4439 = vmatprep.subr.mxu0 0.0
  %4440 = vmatpush1.msra.mxu0 0.0
  %4441 = vmatprep.subr.mxu0 0.0
  %4442 = vmatpush1.msra.mxu0 0.0
  %4443 = vmatprep.mubr.f32.mxu0 0.0
  %4444 = vmatmul.mubr.f32.gmra.mrb[0].mxu0 %v4377
  %v4445 = vpop.f32.mrb[0].mxu0
  %v4446 = vadd.f32 %v4374, %v4445
  %v4447 = vpop.f32.mrb[0].mxu0
  %4448 = vdwg.mxu0
  %4449 = vst [vmem:[%s17] sm:$0xff] %v4446
  // Predicated region
  $region70: #{regressor_forward.1} parent=0 // pred_check
    _
  $region71: #{regressor_forward.1} parent=0 // pred_check_branch
    %4451 = sbr.rel (0) target = $region73
  $region72: #{regressor_forward.1} parent=0 // pred_region
    _
  $region73: #{regressor_forward.1} parent=0 // pred_fallthru
    _
  // Predicated region
  $region74: #{regressor_forward.1} parent=0 // pred_check
    _
  $region75: #{regressor_forward.1} parent=0 // pred_check_branch
    %4453 = sbr.rel (0) target = $region77
  $region76: #{regressor_forward.1} parent=0 // pred_region
    _
  $region77: #{regressor_forward.1} parent=0 // pred_fallthru
    _

</llo_original>
